<compile_context>
chip_gen: v5e
topology: v5e:2x2
jax: 0.10.0
libtpu: 0.0.40
codegen_flags: <defaults>
</compile_context>

<pallas_src>
import functools
import math

import jax
import jax.numpy as jnp
from jax.experimental import pallas as pl
from jax.experimental.pallas import tpu as pltpu

_LN_EPS = 1e-5   # PyTorch nn.LayerNorm default


# ---------------------------------------------------------------------------
# numeric helpers (pure jnp -> usable inside kernels and in the JAX reference)
# ---------------------------------------------------------------------------
def _layernorm(x, gamma, beta):
    mu = jnp.mean(x, axis=-1, keepdims=True)
    xc = x - mu
    var = jnp.mean(xc * xc, axis=-1, keepdims=True)
    return xc * jax.lax.rsqrt(var + _LN_EPS) * gamma + beta


def _gelu_tanh(x):
    # TODO(synk): PyTorch nn.GELU() defaults to the exact erf form; the tanh
    # approximation is used here (max abs diff ~1e-3) since erf has no clean
    # Mosaic lowering.  The JAX reference below uses the same approximation.
    c = math.sqrt(2.0 / math.pi)
    return 0.5 * x * (1.0 + jnp.tanh(c * (x + 0.044715 * x * x * x)))


def _to_patches(video, cfg):
    """einops 'b c (f pf) (h p1) (w p2) -> b f (h w) (p1 p2 pf c)'."""
    B, C, FT, H, W = video.shape
    p = cfg["image_patch_size"]
    pf = cfg["frame_patch_size"]
    f, gh, gw = FT // pf, H // p, W // p
    x = video.reshape(B, C, f, pf, gh, p, gw, p)
    x = x.transpose(0, 2, 4, 6, 5, 7, 3, 1)          # b f h w p1 p2 pf c
    return x.reshape(B, f, gh * gw, p * p * pf * C)


# ---------------------------------------------------------------------------
# Pallas kernels
# ---------------------------------------------------------------------------
def _patch_embed_kernel(x_ref, g1_ref, b1_ref, w_ref, b_ref, g2_ref, b2_ref,
                        pos_ref, out_ref):
    # LN -> Linear -> LN -> + pos_embedding, over all tokens at once.
    h = _layernorm(x_ref[...], g1_ref[...], b1_ref[...])
    h = jnp.dot(h, w_ref[...], preferred_element_type=jnp.float32) + b_ref[...]
    h = _layernorm(h, g2_ref[...], b2_ref[...])
    out_ref[...] = h + pos_ref[...]


def _ln_qkv_kernel(x_ref, g_ref, b_ref, wqkv_ref, out_ref):
    # PreNorm + packed (bias-free) QKV projection.
    h = _layernorm(x_ref[...], g_ref[...], b_ref[...])
    out_ref[...] = jnp.dot(h, wqkv_ref[...], preferred_element_type=jnp.float32)


def _attention_kernel(q_ref, k_ref, v_ref, o_ref, *, scale):
    # Batched multi-head attention over the fused (batch*heads) leading axis.
    s = jnp.einsum('bqd,bkd->bqk', q_ref[...], k_ref[...],
                   preferred_element_type=jnp.float32) * scale
    s = s - jnp.max(s, axis=-1, keepdims=True)
    p = jnp.exp(s)
    p = p * pl.reciprocal(jnp.sum(p, axis=-1, keepdims=True), approx=True)
    o_ref[...] = jnp.einsum('bqk,bkd->bqd', p, v_ref[...],
                            preferred_element_type=jnp.float32)


def _proj_ffn_kernel(x_ref, attn_ref, wo_ref, bo_ref, g_ref, b_ref,
                     w1_ref, b1_ref, w2_ref, b2_ref, out_ref):
    # attention out-projection + residual, then PreNorm FFN + residual.
    x1 = x_ref[...] + jnp.dot(attn_ref[...], wo_ref[...],
                              preferred_element_type=jnp.float32) + bo_ref[...]
    h = _layernorm(x1, g_ref[...], b_ref[...])
    h = _gelu_tanh(jnp.dot(h, w1_ref[...],
                           preferred_element_type=jnp.float32) + b1_ref[...])
    h = jnp.dot(h, w2_ref[...], preferred_element_type=jnp.float32) + b2_ref[...]
    out_ref[...] = x1 + h


def _head_kernel(x_ref, g_ref, b_ref, w_ref, bias_ref, out_ref):
    h = _layernorm(x_ref[...], g_ref[...], b_ref[...])
    out_ref[...] = (jnp.dot(h, w_ref[...], preferred_element_type=jnp.float32)
                    + bias_ref[...])


# ---------------------------------------------------------------------------
# wrappers around pallas_call
# ---------------------------------------------------------------------------
def _attention(q, k, v, scale):
    BH, S, dh = q.shape
    nblk = 2 if BH % 2 == 0 else 1      # >=2 parallel blocks -> v7x 2-TC shard
    blk = BH // nblk
    spec = pl.BlockSpec((blk, S, dh), lambda i: (i, 0, 0))
    return pl.pallas_call(
        functools.partial(_attention_kernel, scale=scale),
        out_shape=jax.ShapeDtypeStruct((BH, S, dh), jnp.float32),
        grid_spec=pltpu.PrefetchScalarGridSpec(
            num_scalar_prefetch=0,
            grid=(nblk,),
            in_specs=[spec, spec, spec],
            out_specs=spec,
        ),
        compiler_params=pltpu.CompilerParams(
            dimension_semantics=("parallel",)),
    )(q, k, v)


def _transformer_layer(x, layer, heads, dim_head):
    """One PreNorm(Attention)+residual, PreNorm(FeedForward)+residual layer."""
    G, S, D = x.shape
    inner = heads * dim_head
    T = G * S
    xt = x.reshape(T, D)

    qkv = pl.pallas_call(
        _ln_qkv_kernel,
        out_shape=jax.ShapeDtypeStruct((T, 3 * inner), jnp.float32),
    )(xt, layer["ln1_g"], layer["ln1_b"], layer["w_qkv"])

    # head split: wrapper-side layout plumbing (no in-kernel lane slicing)
    qkv = qkv.reshape(G, S, 3, heads, dim_head).transpose(2, 0, 3, 1, 4)
    q, k, v = [t.reshape(G * heads, S, dim_head) for t in qkv]

    o = _attention(q, k, v, scale=dim_head ** -0.5)
    o = o.reshape(G, heads, S, dim_head).transpose(0, 2, 1, 3).reshape(T, inner)

    out = pl.pallas_call(
        _proj_ffn_kernel,
        out_shape=jax.ShapeDtypeStruct((T, D), jnp.float32),
    )(xt, o, layer["w_o"], layer["b_o"],
      layer["ln2_g"], layer["ln2_b"],
      layer["w_ff1"], layer["b_ff1"], layer["w_ff2"], layer["b_ff2"])
    return out.reshape(G, S, D)


def vivit_forward(video, params, *, cfg):
    dim, heads, dim_head = cfg["dim"], cfg["heads"], cfg["dim_head"]
    x = _to_patches(video, cfg)                          # (B, f, n, patch_dim)
    B, f, n, patch_dim = x.shape

    # patch embedding: LN -> Linear -> LN -> +pos, fused over all B*f*n tokens
    pos = jnp.broadcast_to(params["pos_embedding"],
                           (B, f, n, dim)).reshape(-1, dim)
    x = pl.pallas_call(
        _patch_embed_kernel,
        out_shape=jax.ShapeDtypeStruct((B * f * n, dim), jnp.float32),
    )(x.reshape(B * f * n, patch_dim),
      params["pe_ln1_g"], params["pe_ln1_b"],
      params["pe_w"], params["pe_b"],
      params["pe_ln2_g"], params["pe_ln2_b"], pos)
    x = x.reshape(B, f, n, dim)

    # spatial transformer (pool='cls': prepend spatial cls token per frame)
    s_cls = jnp.broadcast_to(params["spatial_cls"], (B, f, 1, dim))
    x = jnp.concatenate([s_cls, x], axis=2).reshape(B * f, n + 1, dim)
    for layer in params["spatial_layers"]:
        x = _transformer_layer(x, layer, heads, dim_head)
    x = x.reshape(B, f, n + 1, dim)[:, :, 0]             # spatial cls token

    # temporal transformer
    t_cls = jnp.broadcast_to(params["temporal_cls"], (B, 1, dim))
    x = jnp.concatenate([t_cls, x], axis=1)              # (B, f+1, dim)
    for layer in params["temporal_layers"]:
        x = _transformer_layer(x, layer, heads, dim_head)
    x = x[:, 0]                                          # temporal cls token

    # mlp head: LayerNorm + Linear
    return pl.pallas_call(
        _head_kernel,
        out_shape=jax.ShapeDtypeStruct((x.shape[0], cfg["num_classes"]),
                                       jnp.float32),
    )(x, params["head_ln_g"], params["head_ln_b"],
      params["head_w"], params["head_b"])


# ---------------------------------------------------------------------------
# pure-JAX reference (for verification)
# ---------------------------------------------------------------------------
def _attn_ref(x, layer, heads, dim_head):
    G, S, D = x.shape
    inner = heads * dim_head
    h = _layernorm(x, layer["ln1_g"], layer["ln1_b"])
    qkv = h @ layer["w_qkv"]
    qkv = qkv.reshape(G, S, 3, heads, dim_head).transpose(2, 0, 3, 1, 4)
    q, k, v = qkv[0], qkv[1], qkv[2]
    s = jnp.einsum('ghqd,ghkd->ghqk', q, k) * dim_head ** -0.5
    p = jax.nn.softmax(s, axis=-1)
    o = jnp.einsum('ghqk,ghkd->ghqd', p, v)
    o = o.transpose(0, 2, 1, 3).reshape(G, S, inner)
    return o @ layer["w_o"] + layer["b_o"]


def _layer_ref(x, layer, heads, dim_head):
    x = x + _attn_ref(x, layer, heads, dim_head)
    h = _layernorm(x, layer["ln2_g"], layer["ln2_b"])
    h = _gelu_tanh(h @ layer["w_ff1"] + layer["b_ff1"]) @ layer["w_ff2"] \
        + layer["b_ff2"]
    return x + h


def ref_forward(video, params, cfg):
    dim, heads, dim_head = cfg["dim"], cfg["heads"], cfg["dim_head"]
    x = _to_patches(video, cfg)
    B, f, n, _ = x.shape
    h = _layernorm(x, params["pe_ln1_g"], params["pe_ln1_b"])
    h = h @ params["pe_w"] + params["pe_b"]
    h = _layernorm(h, params["pe_ln2_g"], params["pe_ln2_b"])
    x = h + params["pos_embedding"]
    s_cls = jnp.broadcast_to(params["spatial_cls"], (B, f, 1, dim))
    x = jnp.concatenate([s_cls, x], axis=2).reshape(B * f, n + 1, dim)
    for layer in params["spatial_layers"]:
        x = _layer_ref(x, layer, heads, dim_head)
    x = x.reshape(B, f, n + 1, dim)[:, :, 0]
    t_cls = jnp.broadcast_to(params["temporal_cls"], (B, 1, dim))
    x = jnp.concatenate([t_cls, x], axis=1)
    for layer in params["temporal_layers"]:
        x = _layer_ref(x, layer, heads, dim_head)
    x = x[:, 0]
    h = _layernorm(x, params["head_ln_g"], params["head_ln_b"])
    return h @ params["head_w"] + params["head_b"]


# ---------------------------------------------------------------------------
# deterministic parameter construction (weights already in (in, out) layout,
# i.e. pre-transposed PyTorch Linear weights; biases/affine as (1, N) slabs)
# ---------------------------------------------------------------------------
def make_params(key, cfg, patch_dim, num_frame_patches, num_image_patches):
    dim, heads, dh = cfg["dim"], cfg["heads"], cfg["dim_head"]
    inner, mlp, nc = heads * dh, cfg["mlp_dim"], cfg["num_classes"]
    keys = iter(jax.random.split(key, 128))
    nrm = lambda shape, s=0.1: jax.random.normal(next(keys), shape, jnp.float32) * s
    ln = lambda n: (1.0 + nrm((1, n)), nrm((1, n)))

    def layer_params():
        g1, b1 = ln(dim)
        g2, b2 = ln(dim)
        return {
            "ln1_g": g1, "ln1_b": b1,
            "w_qkv": nrm((dim, 3 * inner)),                 # bias-free to_qkv
            "w_o": nrm((inner, dim)), "b_o": nrm((1, dim)),
            "ln2_g": g2, "ln2_b": b2,
            "w_ff1": nrm((dim, mlp)), "b_ff1": nrm((1, mlp)),
            "w_ff2": nrm((mlp, dim)), "b_ff2": nrm((1, dim)),
        }

    pe_g1, pe_b1 = ln(patch_dim)
    pe_g2, pe_b2 = ln(dim)
    head_g, head_b = ln(dim)
    return {
        "pe_ln1_g": pe_g1, "pe_ln1_b": pe_b1,
        "pe_w": nrm((patch_dim, dim)), "pe_b": nrm((1, dim)),
        "pe_ln2_g": pe_g2, "pe_ln2_b": pe_b2,
        "pos_embedding": nrm((1, num_frame_patches, num_image_patches, dim), 0.02),
        "spatial_cls": nrm((1, 1, dim), 0.02),
        "temporal_cls": nrm((1, 1, dim), 0.02),
        "spatial_layers": [layer_params() for _ in range(cfg["spatial_depth"])],
        "temporal_layers": [layer_params() for _ in range(cfg["temporal_depth"])],
        "head_ln_g": head_g, "head_ln_b": head_b,
        "head_w": nrm((dim, nc)), "head_b": nrm((1, nc)),
    }


if __name__ == "__main__":
    cfg = dict(
        image_size=16, image_patch_size=8, frames=4, frame_patch_size=2,
        channels=3, num_classes=10, dim=32, spatial_depth=1, temporal_depth=1,
        heads=4, dim_head=8, mlp_dim=64,
    )
    B = 2
    num_image_patches = (cfg["image_size"] // cfg["image_patch_size"]) ** 2
    num_frame_patches = cfg["frames"] // cfg["frame_patch_size"]
    patch_dim = (cfg["channels"] * cfg["image_patch_size"] ** 2
                 * cfg["frame_patch_size"])

    key = jax.random.PRNGKey(0)
    kv, kp = jax.random.split(key)
    video = jax.random.normal(
        kv, (B, cfg["channels"], cfg["frames"], cfg["image_size"],
             cfg["image_size"]), jnp.float32)
    params = make_params(kp, cfg, patch_dim, num_frame_patches,
                         num_image_patches)

    fwd = jax.jit(functools.partial(vivit_forward, cfg=cfg))
    out = jax.block_until_ready(fwd(video, params))

    ref = ref_forward(video, params, cfg)
    assert out.shape == (B, cfg["num_classes"])
    err = jnp.max(jnp.abs(out - ref))
    assert jnp.allclose(out, ref, rtol=2e-3, atol=2e-3), f"max err {err}"

    print("KERNEL_OK")
</pallas_src>

<mosaic_0001>
module attributes {stable_mosaic.version = 11 : i64} {
  func.func @_patch_embed_kernel(%arg0: memref<16x384xf32, #tpu.memory_space<vmem>>, %arg1: memref<1x384xf32, #tpu.memory_space<vmem>>, %arg2: memref<1x384xf32, #tpu.memory_space<vmem>>, %arg3: memref<384x32xf32, #tpu.memory_space<vmem>>, %arg4: memref<1x32xf32, #tpu.memory_space<vmem>>, %arg5: memref<1x32xf32, #tpu.memory_space<vmem>>, %arg6: memref<1x32xf32, #tpu.memory_space<vmem>>, %arg7: memref<16x32xf32, #tpu.memory_space<vmem>>, %arg8: memref<16x32xf32, #tpu.memory_space<vmem>>) attributes {dimension_semantics = [], scalar_prefetch = 0 : i64, scratch_operands = 0 : i64, tpu.core_type = #tpu.core_type<tc>} {
    %c0 = arith.constant 0 : index
    %c0_0 = arith.constant 0 : index
    %0 = vector.load %arg0[%c0, %c0_0] : memref<16x384xf32, #tpu.memory_space<vmem>>, vector<16x384xf32>
    %c0_1 = arith.constant 0 : index
    %c0_2 = arith.constant 0 : index
    %1 = vector.load %arg1[%c0_1, %c0_2] : memref<1x384xf32, #tpu.memory_space<vmem>>, vector<1x384xf32>
    %c0_3 = arith.constant 0 : index
    %c0_4 = arith.constant 0 : index
    %2 = vector.load %arg2[%c0_3, %c0_4] : memref<1x384xf32, #tpu.memory_space<vmem>>, vector<1x384xf32>
    %cst = arith.constant dense<0.000000e+00> : vector<16xf32>
    %3 = vector.multi_reduction <add>, %0, %cst [1] : vector<16x384xf32> to vector<16xf32>
    %4 = vector.shape_cast %3 : vector<16xf32> to vector<16x1xf32>
    %cst_5 = arith.constant 3.840000e+02 : f32
    %5 = vector.broadcast %cst_5 : f32 to vector<16x1xf32>
    %6 = arith.divf %4, %5 : vector<16x1xf32>
    %7 = vector.broadcast %6 : vector<16x1xf32> to vector<16x384xf32>
    %8 = arith.subf %0, %7 : vector<16x384xf32>
    %9 = arith.mulf %8, %8 : vector<16x384xf32>
    %cst_6 = arith.constant dense<0.000000e+00> : vector<16xf32>
    %10 = vector.multi_reduction <add>, %9, %cst_6 [1] : vector<16x384xf32> to vector<16xf32>
    %11 = vector.shape_cast %10 : vector<16xf32> to vector<16x1xf32>
    %cst_7 = arith.constant 3.840000e+02 : f32
    %12 = vector.broadcast %cst_7 : f32 to vector<16x1xf32>
    %13 = arith.divf %11, %12 : vector<16x1xf32>
    %cst_8 = arith.constant 9.99999974E-6 : f32
    %14 = vector.broadcast %cst_8 : f32 to vector<16x1xf32>
    %15 = arith.addf %13, %14 : vector<16x1xf32>
    %16 = math.rsqrt %15 : vector<16x1xf32>
    %17 = vector.broadcast %16 : vector<16x1xf32> to vector<16x384xf32>
    %18 = arith.mulf %8, %17 : vector<16x384xf32>
    %19 = vector.broadcast %1 : vector<1x384xf32> to vector<16x384xf32>
    %20 = arith.mulf %18, %19 : vector<16x384xf32>
    %21 = vector.broadcast %2 : vector<1x384xf32> to vector<16x384xf32>
    %22 = arith.addf %20, %21 : vector<16x384xf32>
    %c0_9 = arith.constant 0 : index
    %c0_10 = arith.constant 0 : index
    %23 = vector.load %arg3[%c0_9, %c0_10] : memref<384x32xf32, #tpu.memory_space<vmem>>, vector<384x32xf32>
    %cst_11 = arith.constant dense<0.000000e+00> : vector<16x32xf32>
    %24 = tpu.matmul %22, %23, %cst_11 {dimension_numbers = #tpu.dot_dimension_numbers<[1], [0], [0], [1], [0, 0, 1, 1], [], []>} : vector<16x384xf32>, vector<384x32xf32>, vector<16x32xf32> -> vector<16x32xf32>
    %c0_12 = arith.constant 0 : index
    %c0_13 = arith.constant 0 : index
    %25 = vector.load %arg4[%c0_12, %c0_13] : memref<1x32xf32, #tpu.memory_space<vmem>>, vector<1x32xf32>
    %26 = vector.broadcast %25 : vector<1x32xf32> to vector<16x32xf32>
    %27 = arith.addf %24, %26 : vector<16x32xf32>
    %c0_14 = arith.constant 0 : index
    %c0_15 = arith.constant 0 : index
    %28 = vector.load %arg5[%c0_14, %c0_15] : memref<1x32xf32, #tpu.memory_space<vmem>>, vector<1x32xf32>
    %c0_16 = arith.constant 0 : index
    %c0_17 = arith.constant 0 : index
    %29 = vector.load %arg6[%c0_16, %c0_17] : memref<1x32xf32, #tpu.memory_space<vmem>>, vector<1x32xf32>
    %cst_18 = arith.constant dense<0.000000e+00> : vector<16xf32>
    %30 = vector.multi_reduction <add>, %27, %cst_18 [1] : vector<16x32xf32> to vector<16xf32>
    %31 = vector.shape_cast %30 : vector<16xf32> to vector<16x1xf32>
    %cst_19 = arith.constant 3.200000e+01 : f32
    %32 = vector.broadcast %cst_19 : f32 to vector<16x1xf32>
    %33 = arith.divf %31, %32 : vector<16x1xf32>
    %34 = vector.broadcast %33 : vector<16x1xf32> to vector<16x32xf32>
    %35 = arith.subf %27, %34 : vector<16x32xf32>
    %36 = arith.mulf %35, %35 : vector<16x32xf32>
    %cst_20 = arith.constant dense<0.000000e+00> : vector<16xf32>
    %37 = vector.multi_reduction <add>, %36, %cst_20 [1] : vector<16x32xf32> to vector<16xf32>
    %38 = vector.shape_cast %37 : vector<16xf32> to vector<16x1xf32>
    %cst_21 = arith.constant 3.200000e+01 : f32
    %39 = vector.broadcast %cst_21 : f32 to vector<16x1xf32>
    %40 = arith.divf %38, %39 : vector<16x1xf32>
    %cst_22 = arith.constant 9.99999974E-6 : f32
    %41 = vector.broadcast %cst_22 : f32 to vector<16x1xf32>
    %42 = arith.addf %40, %41 : vector<16x1xf32>
    %43 = math.rsqrt %42 : vector<16x1xf32>
    %44 = vector.broadcast %43 : vector<16x1xf32> to vector<16x32xf32>
    %45 = arith.mulf %35, %44 : vector<16x32xf32>
    %46 = vector.broadcast %28 : vector<1x32xf32> to vector<16x32xf32>
    %47 = arith.mulf %45, %46 : vector<16x32xf32>
    %48 = vector.broadcast %29 : vector<1x32xf32> to vector<16x32xf32>
    %49 = arith.addf %47, %48 : vector<16x32xf32>
    %c0_23 = arith.constant 0 : index
    %c0_24 = arith.constant 0 : index
    %50 = vector.load %arg7[%c0_23, %c0_24] : memref<16x32xf32, #tpu.memory_space<vmem>>, vector<16x32xf32>
    %51 = arith.addf %49, %50 : vector<16x32xf32>
    %c0_25 = arith.constant 0 : index
    %c0_26 = arith.constant 0 : index
    %52 = vector.load %arg8[%c0_25, %c0_26] : memref<16x32xf32, #tpu.memory_space<vmem>>, vector<16x32xf32>
    tpu.vector_store %arg8[%c0_25, %c0_26], %51 {strides = array<i32>} : memref<16x32xf32, #tpu.memory_space<vmem>>, vector<16x32xf32>,
    return
  }
}

module attributes {stable_mosaic.version = 11 : i64} {
  func.func @_ln_qkv_kernel(%arg0: memref<20x32xf32, #tpu.memory_space<vmem>>, %arg1: memref<1x32xf32, #tpu.memory_space<vmem>>, %arg2: memref<1x32xf32, #tpu.memory_space<vmem>>, %arg3: memref<32x96xf32, #tpu.memory_space<vmem>>, %arg4: memref<20x96xf32, #tpu.memory_space<vmem>>) attributes {dimension_semantics = [], scalar_prefetch = 0 : i64, scratch_operands = 0 : i64, tpu.core_type = #tpu.core_type<tc>} {
    %c0 = arith.constant 0 : index
    %c0_0 = arith.constant 0 : index
    %0 = vector.load %arg0[%c0, %c0_0] : memref<20x32xf32, #tpu.memory_space<vmem>>, vector<20x32xf32>
    %c0_1 = arith.constant 0 : index
    %c0_2 = arith.constant 0 : index
    %1 = vector.load %arg1[%c0_1, %c0_2] : memref<1x32xf32, #tpu.memory_space<vmem>>, vector<1x32xf32>
    %c0_3 = arith.constant 0 : index
    %c0_4 = arith.constant 0 : index
    %2 = vector.load %arg2[%c0_3, %c0_4] : memref<1x32xf32, #tpu.memory_space<vmem>>, vector<1x32xf32>
    %cst = arith.constant dense<0.000000e+00> : vector<20xf32>
    %3 = vector.multi_reduction <add>, %0, %cst [1] : vector<20x32xf32> to vector<20xf32>
    %4 = vector.shape_cast %3 : vector<20xf32> to vector<20x1xf32>
    %cst_5 = arith.constant 3.200000e+01 : f32
    %5 = vector.broadcast %cst_5 : f32 to vector<20x1xf32>
    %6 = arith.divf %4, %5 : vector<20x1xf32>
    %7 = vector.broadcast %6 : vector<20x1xf32> to vector<20x32xf32>
    %8 = arith.subf %0, %7 : vector<20x32xf32>
    %9 = arith.mulf %8, %8 : vector<20x32xf32>
    %cst_6 = arith.constant dense<0.000000e+00> : vector<20xf32>
    %10 = vector.multi_reduction <add>, %9, %cst_6 [1] : vector<20x32xf32> to vector<20xf32>
    %11 = vector.shape_cast %10 : vector<20xf32> to vector<20x1xf32>
    %cst_7 = arith.constant 3.200000e+01 : f32
    %12 = vector.broadcast %cst_7 : f32 to vector<20x1xf32>
    %13 = arith.divf %11, %12 : vector<20x1xf32>
    %cst_8 = arith.constant 9.99999974E-6 : f32
    %14 = vector.broadcast %cst_8 : f32 to vector<20x1xf32>
    %15 = arith.addf %13, %14 : vector<20x1xf32>
    %16 = math.rsqrt %15 : vector<20x1xf32>
    %17 = vector.broadcast %16 : vector<20x1xf32> to vector<20x32xf32>
    %18 = arith.mulf %8, %17 : vector<20x32xf32>
    %19 = vector.broadcast %1 : vector<1x32xf32> to vector<20x32xf32>
    %20 = arith.mulf %18, %19 : vector<20x32xf32>
    %21 = vector.broadcast %2 : vector<1x32xf32> to vector<20x32xf32>
    %22 = arith.addf %20, %21 : vector<20x32xf32>
    %c0_9 = arith.constant 0 : index
    %c0_10 = arith.constant 0 : index
    %23 = vector.load %arg3[%c0_9, %c0_10] : memref<32x96xf32, #tpu.memory_space<vmem>>, vector<32x96xf32>
    %cst_11 = arith.constant dense<0.000000e+00> : vector<20x96xf32>
    %24 = tpu.matmul %22, %23, %cst_11 {dimension_numbers = #tpu.dot_dimension_numbers<[1], [0], [0], [1], [0, 0, 1, 1], [], []>} : vector<20x32xf32>, vector<32x96xf32>, vector<20x96xf32> -> vector<20x96xf32>
    %c0_12 = arith.constant 0 : index
    %c0_13 = arith.constant 0 : index
    %25 = vector.load %arg4[%c0_12, %c0_13] : memref<20x96xf32, #tpu.memory_space<vmem>>, vector<20x96xf32>
    tpu.vector_store %arg4[%c0_12, %c0_13], %24 {strides = array<i32>} : memref<20x96xf32, #tpu.memory_space<vmem>>, vector<20x96xf32>,
    return
  }
}

module attributes {stable_mosaic.version = 11 : i64} {
  func.func @_attention_kernel(%arg0: i32, %arg1: memref<8x5x8xf32, #tpu.memory_space<vmem>>, %arg2: memref<8x5x8xf32, #tpu.memory_space<vmem>>, %arg3: memref<8x5x8xf32, #tpu.memory_space<vmem>>, %arg4: memref<8x5x8xf32, #tpu.memory_space<vmem>>) attributes {dimension_semantics = [#tpu.dimension_semantics<parallel>], iteration_bounds = array<i64: 2>, scalar_prefetch = 0 : i64, scratch_operands = 0 : i64, tpu.core_type = #tpu.core_type<tc>, window_params = [{transform_indices = @transform_0, window_bounds = array<i64: 8, 5, 8>}, {transform_indices = @transform_1, window_bounds = array<i64: 8, 5, 8>}, {transform_indices = @transform_2, window_bounds = array<i64: 8, 5, 8>}, {transform_indices = @transform_3, window_bounds = array<i64: 8, 5, 8>}]} {
    %c0 = arith.constant 0 : index
    %c0_0 = arith.constant 0 : index
    %c0_1 = arith.constant 0 : index
    %0 = vector.load %arg1[%c0, %c0_0, %c0_1] : memref<8x5x8xf32, #tpu.memory_space<vmem>>, vector<8x5x8xf32>
    %c0_2 = arith.constant 0 : index
    %c0_3 = arith.constant 0 : index
    %c0_4 = arith.constant 0 : index
    %1 = vector.load %arg2[%c0_2, %c0_3, %c0_4] : memref<8x5x8xf32, #tpu.memory_space<vmem>>, vector<8x5x8xf32>
    "tpu.trace_start"() <{level = 10 : i32, message = "bqd,bkd->bqk"}> : () -> ()
    %cst = arith.constant dense<0.000000e+00> : vector<8x5x5xf32>
    %2 = tpu.matmul %0, %1, %cst {dimension_numbers = #tpu.dot_dimension_numbers<[2], [2], [1], [1], [0, 0, 0, 1, 1, 1], [0], [0]>} : vector<8x5x8xf32>, vector<8x5x8xf32>, vector<8x5x5xf32> -> vector<8x5x5xf32>
    "tpu.trace_stop"() : () -> ()
    %cst_5 = arith.constant 0.353553385 : f32
    %3 = vector.broadcast %cst_5 : f32 to vector<8x5x5xf32>
    %4 = arith.mulf %2, %3 : vector<8x5x5xf32>
    %cst_6 = arith.constant dense<0xFF800000> : vector<8x5xf32>
    %5 = vector.multi_reduction <maximumf>, %4, %cst_6 [2] : vector<8x5x5xf32> to vector<8x5xf32>
    %6 = vector.shape_cast %5 : vector<8x5xf32> to vector<8x5x1xf32>
    %7 = vector.broadcast %6 : vector<8x5x1xf32> to vector<8x5x5xf32>
    %8 = arith.subf %4, %7 : vector<8x5x5xf32>
    %9 = math.exp %8 : vector<8x5x5xf32>
    %cst_7 = arith.constant dense<0.000000e+00> : vector<8x5xf32>
    %10 = vector.multi_reduction <add>, %9, %cst_7 [2] : vector<8x5x5xf32> to vector<8x5xf32>
    %11 = vector.shape_cast %10 : vector<8x5xf32> to vector<8x5x1xf32>
    %12 = tpu.reciprocal %11 {approx = true} : vector<8x5x1xf32> -> vector<8x5x1xf32>
    %13 = vector.broadcast %12 : vector<8x5x1xf32> to vector<8x5x5xf32>
    %14 = arith.mulf %9, %13 : vector<8x5x5xf32>
    %c0_8 = arith.constant 0 : index
    %c0_9 = arith.constant 0 : index
    %c0_10 = arith.constant 0 : index
    %15 = vector.load %arg3[%c0_8, %c0_9, %c0_10] : memref<8x5x8xf32, #tpu.memory_space<vmem>>, vector<8x5x8xf32>
    "tpu.trace_start"() <{level = 10 : i32, message = "bqk,bkd->bqd"}> : () -> ()
    %cst_11 = arith.constant dense<0.000000e+00> : vector<8x5x8xf32>
    %16 = tpu.matmul %14, %15, %cst_11 {dimension_numbers = #tpu.dot_dimension_numbers<[2], [1], [1], [2], [0, 0, 0, 1, 1, 2], [0], [0]>} : vector<8x5x5xf32>, vector<8x5x8xf32>, vector<8x5x8xf32> -> vector<8x5x8xf32>
    "tpu.trace_stop"() : () -> ()
    %c0_12 = arith.constant 0 : index
    %c0_13 = arith.constant 0 : index
    %c0_14 = arith.constant 0 : index
    %17 = vector.load %arg4[%c0_12, %c0_13, %c0_14] : memref<8x5x8xf32, #tpu.memory_space<vmem>>, vector<8x5x8xf32>
    tpu.vector_store %arg4[%c0_12, %c0_13, %c0_14], %16 {strides = array<i32>} : memref<8x5x8xf32, #tpu.memory_space<vmem>>, vector<8x5x8xf32>,
    return
  }
  func.func @transform_0(%arg0: i32) -> (i32, i32, i32) {
    %c0_i32 = arith.constant 0 : i32
    %c0_i32_0 = arith.constant 0 : i32
    %c0_i32_1 = arith.constant 0 : i32
    return %arg0, %c0_i32, %c0_i32_0 : i32, i32, i32
  }
  func.func @transform_1(%arg0: i32) -> (i32, i32, i32) {
    %c0_i32 = arith.constant 0 : i32
    %c0_i32_0 = arith.constant 0 : i32
    %c0_i32_1 = arith.constant 0 : i32
    return %arg0, %c0_i32, %c0_i32_0 : i32, i32, i32
  }
  func.func @transform_2(%arg0: i32) -> (i32, i32, i32) {
    %c0_i32 = arith.constant 0 : i32
    %c0_i32_0 = arith.constant 0 : i32
    %c0_i32_1 = arith.constant 0 : i32
    return %arg0, %c0_i32, %c0_i32_0 : i32, i32, i32
  }
  func.func @transform_3(%arg0: i32) -> (i32, i32, i32) {
    %c0_i32 = arith.constant 0 : i32
    %c0_i32_0 = arith.constant 0 : i32
    %c0_i32_1 = arith.constant 0 : i32
    return %arg0, %c0_i32, %c0_i32_0 : i32, i32, i32
  }
}

module attributes {stable_mosaic.version = 11 : i64} {
  func.func @_proj_ffn_kernel(%arg0: memref<20x32xf32, #tpu.memory_space<vmem>>, %arg1: memref<20x32xf32, #tpu.memory_space<vmem>>, %arg2: memref<32x32xf32, #tpu.memory_space<vmem>>, %arg3: memref<1x32xf32, #tpu.memory_space<vmem>>, %arg4: memref<1x32xf32, #tpu.memory_space<vmem>>, %arg5: memref<1x32xf32, #tpu.memory_space<vmem>>, %arg6: memref<32x64xf32, #tpu.memory_space<vmem>>, %arg7: memref<1x64xf32, #tpu.memory_space<vmem>>, %arg8: memref<64x32xf32, #tpu.memory_space<vmem>>, %arg9: memref<1x32xf32, #tpu.memory_space<vmem>>, %arg10: memref<20x32xf32, #tpu.memory_space<vmem>>) attributes {dimension_semantics = [], scalar_prefetch = 0 : i64, scratch_operands = 0 : i64, tpu.core_type = #tpu.core_type<tc>} {
    %c0 = arith.constant 0 : index
    %c0_0 = arith.constant 0 : index
    %0 = vector.load %arg0[%c0, %c0_0] : memref<20x32xf32, #tpu.memory_space<vmem>>, vector<20x32xf32>
    %c0_1 = arith.constant 0 : index
    %c0_2 = arith.constant 0 : index
    %1 = vector.load %arg1[%c0_1, %c0_2] : memref<20x32xf32, #tpu.memory_space<vmem>>, vector<20x32xf32>
    %c0_3 = arith.constant 0 : index
    %c0_4 = arith.constant 0 : index
    %2 = vector.load %arg2[%c0_3, %c0_4] : memref<32x32xf32, #tpu.memory_space<vmem>>, vector<32x32xf32>
    %cst = arith.constant dense<0.000000e+00> : vector<20x32xf32>
    %3 = tpu.matmul %1, %2, %cst {dimension_numbers = #tpu.dot_dimension_numbers<[1], [0], [0], [1], [0, 0, 1, 1], [], []>} : vector<20x32xf32>, vector<32x32xf32>, vector<20x32xf32> -> vector<20x32xf32>
    %4 = arith.addf %0, %3 : vector<20x32xf32>
    %c0_5 = arith.constant 0 : index
    %c0_6 = arith.constant 0 : index
    %5 = vector.load %arg3[%c0_5, %c0_6] : memref<1x32xf32, #tpu.memory_space<vmem>>, vector<1x32xf32>
    %6 = vector.broadcast %5 : vector<1x32xf32> to vector<20x32xf32>
    %7 = arith.addf %4, %6 : vector<20x32xf32>
    %c0_7 = arith.constant 0 : index
    %c0_8 = arith.constant 0 : index
    %8 = vector.load %arg4[%c0_7, %c0_8] : memref<1x32xf32, #tpu.memory_space<vmem>>, vector<1x32xf32>
    %c0_9 = arith.constant 0 : index
    %c0_10 = arith.constant 0 : index
    %9 = vector.load %arg5[%c0_9, %c0_10] : memref<1x32xf32, #tpu.memory_space<vmem>>, vector<1x32xf32>
    %cst_11 = arith.constant dense<0.000000e+00> : vector<20xf32>
    %10 = vector.multi_reduction <add>, %7, %cst_11 [1] : vector<20x32xf32> to vector<20xf32>
    %11 = vector.shape_cast %10 : vector<20xf32> to vector<20x1xf32>
    %cst_12 = arith.constant 3.200000e+01 : f32
    %12 = vector.broadcast %cst_12 : f32 to vector<20x1xf32>
    %13 = arith.divf %11, %12 : vector<20x1xf32>
    %14 = vector.broadcast %13 : vector<20x1xf32> to vector<20x32xf32>
    %15 = arith.subf %7, %14 : vector<20x32xf32>
    %16 = arith.mulf %15, %15 : vector<20x32xf32>
    %cst_13 = arith.constant dense<0.000000e+00> : vector<20xf32>
    %17 = vector.multi_reduction <add>, %16, %cst_13 [1] : vector<20x32xf32> to vector<20xf32>
    %18 = vector.shape_cast %17 : vector<20xf32> to vector<20x1xf32>
    %cst_14 = arith.constant 3.200000e+01 : f32
    %19 = vector.broadcast %cst_14 : f32 to vector<20x1xf32>
    %20 = arith.divf %18, %19 : vector<20x1xf32>
    %cst_15 = arith.constant 9.99999974E-6 : f32
    %21 = vector.broadcast %cst_15 : f32 to vector<20x1xf32>
    %22 = arith.addf %20, %21 : vector<20x1xf32>
    %23 = math.rsqrt %22 : vector<20x1xf32>
    %24 = vector.broadcast %23 : vector<20x1xf32> to vector<20x32xf32>
    %25 = arith.mulf %15, %24 : vector<20x32xf32>
    %26 = vector.broadcast %8 : vector<1x32xf32> to vector<20x32xf32>
    %27 = arith.mulf %25, %26 : vector<20x32xf32>
    %28 = vector.broadcast %9 : vector<1x32xf32> to vector<20x32xf32>
    %29 = arith.addf %27, %28 : vector<20x32xf32>
    %c0_16 = arith.constant 0 : index
    %c0_17 = arith.constant 0 : index
    %30 = vector.load %arg6[%c0_16, %c0_17] : memref<32x64xf32, #tpu.memory_space<vmem>>, vector<32x64xf32>
    %cst_18 = arith.constant dense<0.000000e+00> : vector<20x64xf32>
    %31 = tpu.matmul %29, %30, %cst_18 {dimension_numbers = #tpu.dot_dimension_numbers<[1], [0], [0], [1], [0, 0, 1, 1], [], []>} : vector<20x32xf32>, vector<32x64xf32>, vector<20x64xf32> -> vector<20x64xf32>
    %c0_19 = arith.constant 0 : index
    %c0_20 = arith.constant 0 : index
    %32 = vector.load %arg7[%c0_19, %c0_20] : memref<1x64xf32, #tpu.memory_space<vmem>>, vector<1x64xf32>
    %33 = vector.broadcast %32 : vector<1x64xf32> to vector<20x64xf32>
    %34 = arith.addf %31, %33 : vector<20x64xf32>
    %cst_21 = arith.constant 5.000000e-01 : f32
    %35 = vector.broadcast %cst_21 : f32 to vector<20x64xf32>
    %36 = arith.mulf %35, %34 : vector<20x64xf32>
    %cst_22 = arith.constant 4.471500e-02 : f32
    %37 = vector.broadcast %cst_22 : f32 to vector<20x64xf32>
    %38 = arith.mulf %37, %34 : vector<20x64xf32>
    %39 = arith.mulf %38, %34 : vector<20x64xf32>
    %40 = arith.mulf %39, %34 : vector<20x64xf32>
    %41 = arith.addf %34, %40 : vector<20x64xf32>
    %cst_23 = arith.constant 0.797884583 : f32
    %42 = vector.broadcast %cst_23 : f32 to vector<20x64xf32>
    %43 = arith.mulf %42, %41 : vector<20x64xf32>
    %44 = math.tanh %43 : vector<20x64xf32>
    %cst_24 = arith.constant 1.000000e+00 : f32
    %45 = vector.broadcast %cst_24 : f32 to vector<20x64xf32>
    %46 = arith.addf %45, %44 : vector<20x64xf32>
    %47 = arith.mulf %36, %46 : vector<20x64xf32>
    %c0_25 = arith.constant 0 : index
    %c0_26 = arith.constant 0 : index
    %48 = vector.load %arg8[%c0_25, %c0_26] : memref<64x32xf32, #tpu.memory_space<vmem>>, vector<64x32xf32>
    %cst_27 = arith.constant dense<0.000000e+00> : vector<20x32xf32>
    %49 = tpu.matmul %47, %48, %cst_27 {dimension_numbers = #tpu.dot_dimension_numbers<[1], [0], [0], [1], [0, 0, 1, 1], [], []>} : vector<20x64xf32>, vector<64x32xf32>, vector<20x32xf32> -> vector<20x32xf32>
    %c0_28 = arith.constant 0 : index
    %c0_29 = arith.constant 0 : index
    %50 = vector.load %arg9[%c0_28, %c0_29] : memref<1x32xf32, #tpu.memory_space<vmem>>, vector<1x32xf32>
    %51 = vector.broadcast %50 : vector<1x32xf32> to vector<20x32xf32>
    %52 = arith.addf %49, %51 : vector<20x32xf32>
    %53 = arith.addf %7, %52 : vector<20x32xf32>
    %c0_30 = arith.constant 0 : index
    %c0_31 = arith.constant 0 : index
    %54 = vector.load %arg10[%c0_30, %c0_31] : memref<20x32xf32, #tpu.memory_space<vmem>>, vector<20x32xf32>
    tpu.vector_store %arg10[%c0_30, %c0_31], %53 {strides = array<i32>} : memref<20x32xf32, #tpu.memory_space<vmem>>, vector<20x32xf32>,
    return
  }
}

module attributes {stable_mosaic.version = 11 : i64} {
  func.func @_ln_qkv_kernel(%arg0: memref<6x32xf32, #tpu.memory_space<vmem>>, %arg1: memref<1x32xf32, #tpu.memory_space<vmem>>, %arg2: memref<1x32xf32, #tpu.memory_space<vmem>>, %arg3: memref<32x96xf32, #tpu.memory_space<vmem>>, %arg4: memref<6x96xf32, #tpu.memory_space<vmem>>) attributes {dimension_semantics = [], scalar_prefetch = 0 : i64, scratch_operands = 0 : i64, tpu.core_type = #tpu.core_type<tc>} {
    %c0 = arith.constant 0 : index
    %c0_0 = arith.constant 0 : index
    %0 = vector.load %arg0[%c0, %c0_0] : memref<6x32xf32, #tpu.memory_space<vmem>>, vector<6x32xf32>
    %c0_1 = arith.constant 0 : index
    %c0_2 = arith.constant 0 : index
    %1 = vector.load %arg1[%c0_1, %c0_2] : memref<1x32xf32, #tpu.memory_space<vmem>>, vector<1x32xf32>
    %c0_3 = arith.constant 0 : index
    %c0_4 = arith.constant 0 : index
    %2 = vector.load %arg2[%c0_3, %c0_4] : memref<1x32xf32, #tpu.memory_space<vmem>>, vector<1x32xf32>
    %cst = arith.constant dense<0.000000e+00> : vector<6xf32>
    %3 = vector.multi_reduction <add>, %0, %cst [1] : vector<6x32xf32> to vector<6xf32>
    %4 = vector.shape_cast %3 : vector<6xf32> to vector<6x1xf32>
    %cst_5 = arith.constant 3.200000e+01 : f32
    %5 = vector.broadcast %cst_5 : f32 to vector<6x1xf32>
    %6 = arith.divf %4, %5 : vector<6x1xf32>
    %7 = vector.broadcast %6 : vector<6x1xf32> to vector<6x32xf32>
    %8 = arith.subf %0, %7 : vector<6x32xf32>
    %9 = arith.mulf %8, %8 : vector<6x32xf32>
    %cst_6 = arith.constant dense<0.000000e+00> : vector<6xf32>
    %10 = vector.multi_reduction <add>, %9, %cst_6 [1] : vector<6x32xf32> to vector<6xf32>
    %11 = vector.shape_cast %10 : vector<6xf32> to vector<6x1xf32>
    %cst_7 = arith.constant 3.200000e+01 : f32
    %12 = vector.broadcast %cst_7 : f32 to vector<6x1xf32>
    %13 = arith.divf %11, %12 : vector<6x1xf32>
    %cst_8 = arith.constant 9.99999974E-6 : f32
    %14 = vector.broadcast %cst_8 : f32 to vector<6x1xf32>
    %15 = arith.addf %13, %14 : vector<6x1xf32>
    %16 = math.rsqrt %15 : vector<6x1xf32>
    %17 = vector.broadcast %16 : vector<6x1xf32> to vector<6x32xf32>
    %18 = arith.mulf %8, %17 : vector<6x32xf32>
    %19 = vector.broadcast %1 : vector<1x32xf32> to vector<6x32xf32>
    %20 = arith.mulf %18, %19 : vector<6x32xf32>
    %21 = vector.broadcast %2 : vector<1x32xf32> to vector<6x32xf32>
    %22 = arith.addf %20, %21 : vector<6x32xf32>
    %c0_9 = arith.constant 0 : index
    %c0_10 = arith.constant 0 : index
    %23 = vector.load %arg3[%c0_9, %c0_10] : memref<32x96xf32, #tpu.memory_space<vmem>>, vector<32x96xf32>
    %cst_11 = arith.constant dense<0.000000e+00> : vector<6x96xf32>
    %24 = tpu.matmul %22, %23, %cst_11 {dimension_numbers = #tpu.dot_dimension_numbers<[1], [0], [0], [1], [0, 0, 1, 1], [], []>} : vector<6x32xf32>, vector<32x96xf32>, vector<6x96xf32> -> vector<6x96xf32>
    %c0_12 = arith.constant 0 : index
    %c0_13 = arith.constant 0 : index
    %25 = vector.load %arg4[%c0_12, %c0_13] : memref<6x96xf32, #tpu.memory_space<vmem>>, vector<6x96xf32>
    tpu.vector_store %arg4[%c0_12, %c0_13], %24 {strides = array<i32>} : memref<6x96xf32, #tpu.memory_space<vmem>>, vector<6x96xf32>,
    return
  }
}

module attributes {stable_mosaic.version = 11 : i64} {
  func.func @_attention_kernel(%arg0: i32, %arg1: memref<4x3x8xf32, #tpu.memory_space<vmem>>, %arg2: memref<4x3x8xf32, #tpu.memory_space<vmem>>, %arg3: memref<4x3x8xf32, #tpu.memory_space<vmem>>, %arg4: memref<4x3x8xf32, #tpu.memory_space<vmem>>) attributes {dimension_semantics = [#tpu.dimension_semantics<parallel>], iteration_bounds = array<i64: 2>, scalar_prefetch = 0 : i64, scratch_operands = 0 : i64, tpu.core_type = #tpu.core_type<tc>, window_params = [{transform_indices = @transform_0, window_bounds = array<i64: 4, 3, 8>}, {transform_indices = @transform_1, window_bounds = array<i64: 4, 3, 8>}, {transform_indices = @transform_2, window_bounds = array<i64: 4, 3, 8>}, {transform_indices = @transform_3, window_bounds = array<i64: 4, 3, 8>}]} {
    %c0 = arith.constant 0 : index
    %c0_0 = arith.constant 0 : index
    %c0_1 = arith.constant 0 : index
    %0 = vector.load %arg1[%c0, %c0_0, %c0_1] : memref<4x3x8xf32, #tpu.memory_space<vmem>>, vector<4x3x8xf32>
    %c0_2 = arith.constant 0 : index
    %c0_3 = arith.constant 0 : index
    %c0_4 = arith.constant 0 : index
    %1 = vector.load %arg2[%c0_2, %c0_3, %c0_4] : memref<4x3x8xf32, #tpu.memory_space<vmem>>, vector<4x3x8xf32>
    "tpu.trace_start"() <{level = 10 : i32, message = "bqd,bkd->bqk"}> : () -> ()
    %cst = arith.constant dense<0.000000e+00> : vector<4x3x3xf32>
    %2 = tpu.matmul %0, %1, %cst {dimension_numbers = #tpu.dot_dimension_numbers<[2], [2], [1], [1], [0, 0, 0, 1, 1, 1], [0], [0]>} : vector<4x3x8xf32>, vector<4x3x8xf32>, vector<4x3x3xf32> -> vector<4x3x3xf32>
    "tpu.trace_stop"() : () -> ()
    %cst_5 = arith.constant 0.353553385 : f32
    %3 = vector.broadcast %cst_5 : f32 to vector<4x3x3xf32>
    %4 = arith.mulf %2, %3 : vector<4x3x3xf32>
    %cst_6 = arith.constant dense<0xFF800000> : vector<4x3xf32>
    %5 = vector.multi_reduction <maximumf>, %4, %cst_6 [2] : vector<4x3x3xf32> to vector<4x3xf32>
    %6 = vector.shape_cast %5 : vector<4x3xf32> to vector<4x3x1xf32>
    %7 = vector.broadcast %6 : vector<4x3x1xf32> to vector<4x3x3xf32>
    %8 = arith.subf %4, %7 : vector<4x3x3xf32>
    %9 = math.exp %8 : vector<4x3x3xf32>
    %cst_7 = arith.constant dense<0.000000e+00> : vector<4x3xf32>
    %10 = vector.multi_reduction <add>, %9, %cst_7 [2] : vector<4x3x3xf32> to vector<4x3xf32>
    %11 = vector.shape_cast %10 : vector<4x3xf32> to vector<4x3x1xf32>
    %12 = tpu.reciprocal %11 {approx = true} : vector<4x3x1xf32> -> vector<4x3x1xf32>
    %13 = vector.broadcast %12 : vector<4x3x1xf32> to vector<4x3x3xf32>
    %14 = arith.mulf %9, %13 : vector<4x3x3xf32>
    %c0_8 = arith.constant 0 : index
    %c0_9 = arith.constant 0 : index
    %c0_10 = arith.constant 0 : index
    %15 = vector.load %arg3[%c0_8, %c0_9, %c0_10] : memref<4x3x8xf32, #tpu.memory_space<vmem>>, vector<4x3x8xf32>
    "tpu.trace_start"() <{level = 10 : i32, message = "bqk,bkd->bqd"}> : () -> ()
    %cst_11 = arith.constant dense<0.000000e+00> : vector<4x3x8xf32>
    %16 = tpu.matmul %14, %15, %cst_11 {dimension_numbers = #tpu.dot_dimension_numbers<[2], [1], [1], [2], [0, 0, 0, 1, 1, 2], [0], [0]>} : vector<4x3x3xf32>, vector<4x3x8xf32>, vector<4x3x8xf32> -> vector<4x3x8xf32>
    "tpu.trace_stop"() : () -> ()
    %c0_12 = arith.constant 0 : index
    %c0_13 = arith.constant 0 : index
    %c0_14 = arith.constant 0 : index
    %17 = vector.load %arg4[%c0_12, %c0_13, %c0_14] : memref<4x3x8xf32, #tpu.memory_space<vmem>>, vector<4x3x8xf32>
    tpu.vector_store %arg4[%c0_12, %c0_13, %c0_14], %16 {strides = array<i32>} : memref<4x3x8xf32, #tpu.memory_space<vmem>>, vector<4x3x8xf32>,
    return
  }
  func.func @transform_0(%arg0: i32) -> (i32, i32, i32) {
    %c0_i32 = arith.constant 0 : i32
    %c0_i32_0 = arith.constant 0 : i32
    %c0_i32_1 = arith.constant 0 : i32
    return %arg0, %c0_i32, %c0_i32_0 : i32, i32, i32
  }
  func.func @transform_1(%arg0: i32) -> (i32, i32, i32) {
    %c0_i32 = arith.constant 0 : i32
    %c0_i32_0 = arith.constant 0 : i32
    %c0_i32_1 = arith.constant 0 : i32
    return %arg0, %c0_i32, %c0_i32_0 : i32, i32, i32
  }
  func.func @transform_2(%arg0: i32) -> (i32, i32, i32) {
    %c0_i32 = arith.constant 0 : i32
    %c0_i32_0 = arith.constant 0 : i32
    %c0_i32_1 = arith.constant 0 : i32
    return %arg0, %c0_i32, %c0_i32_0 : i32, i32, i32
  }
  func.func @transform_3(%arg0: i32) -> (i32, i32, i32) {
    %c0_i32 = arith.constant 0 : i32
    %c0_i32_0 = arith.constant 0 : i32
    %c0_i32_1 = arith.constant 0 : i32
    return %arg0, %c0_i32, %c0_i32_0 : i32, i32, i32
  }
}

module attributes {stable_mosaic.version = 11 : i64} {
  func.func @_proj_ffn_kernel(%arg0: memref<6x32xf32, #tpu.memory_space<vmem>>, %arg1: memref<6x32xf32, #tpu.memory_space<vmem>>, %arg2: memref<32x32xf32, #tpu.memory_space<vmem>>, %arg3: memref<1x32xf32, #tpu.memory_space<vmem>>, %arg4: memref<1x32xf32, #tpu.memory_space<vmem>>, %arg5: memref<1x32xf32, #tpu.memory_space<vmem>>, %arg6: memref<32x64xf32, #tpu.memory_space<vmem>>, %arg7: memref<1x64xf32, #tpu.memory_space<vmem>>, %arg8: memref<64x32xf32, #tpu.memory_space<vmem>>, %arg9: memref<1x32xf32, #tpu.memory_space<vmem>>, %arg10: memref<6x32xf32, #tpu.memory_space<vmem>>) attributes {dimension_semantics = [], scalar_prefetch = 0 : i64, scratch_operands = 0 : i64, tpu.core_type = #tpu.core_type<tc>} {
    %c0 = arith.constant 0 : index
    %c0_0 = arith.constant 0 : index
    %0 = vector.load %arg0[%c0, %c0_0] : memref<6x32xf32, #tpu.memory_space<vmem>>, vector<6x32xf32>
    %c0_1 = arith.constant 0 : index
    %c0_2 = arith.constant 0 : index
    %1 = vector.load %arg1[%c0_1, %c0_2] : memref<6x32xf32, #tpu.memory_space<vmem>>, vector<6x32xf32>
    %c0_3 = arith.constant 0 : index
    %c0_4 = arith.constant 0 : index
    %2 = vector.load %arg2[%c0_3, %c0_4] : memref<32x32xf32, #tpu.memory_space<vmem>>, vector<32x32xf32>
    %cst = arith.constant dense<0.000000e+00> : vector<6x32xf32>
    %3 = tpu.matmul %1, %2, %cst {dimension_numbers = #tpu.dot_dimension_numbers<[1], [0], [0], [1], [0, 0, 1, 1], [], []>} : vector<6x32xf32>, vector<32x32xf32>, vector<6x32xf32> -> vector<6x32xf32>
    %4 = arith.addf %0, %3 : vector<6x32xf32>
    %c0_5 = arith.constant 0 : index
    %c0_6 = arith.constant 0 : index
    %5 = vector.load %arg3[%c0_5, %c0_6] : memref<1x32xf32, #tpu.memory_space<vmem>>, vector<1x32xf32>
    %6 = vector.broadcast %5 : vector<1x32xf32> to vector<6x32xf32>
    %7 = arith.addf %4, %6 : vector<6x32xf32>
    %c0_7 = arith.constant 0 : index
    %c0_8 = arith.constant 0 : index
    %8 = vector.load %arg4[%c0_7, %c0_8] : memref<1x32xf32, #tpu.memory_space<vmem>>, vector<1x32xf32>
    %c0_9 = arith.constant 0 : index
    %c0_10 = arith.constant 0 : index
    %9 = vector.load %arg5[%c0_9, %c0_10] : memref<1x32xf32, #tpu.memory_space<vmem>>, vector<1x32xf32>
    %cst_11 = arith.constant dense<0.000000e+00> : vector<6xf32>
    %10 = vector.multi_reduction <add>, %7, %cst_11 [1] : vector<6x32xf32> to vector<6xf32>
    %11 = vector.shape_cast %10 : vector<6xf32> to vector<6x1xf32>
    %cst_12 = arith.constant 3.200000e+01 : f32
    %12 = vector.broadcast %cst_12 : f32 to vector<6x1xf32>
    %13 = arith.divf %11, %12 : vector<6x1xf32>
    %14 = vector.broadcast %13 : vector<6x1xf32> to vector<6x32xf32>
    %15 = arith.subf %7, %14 : vector<6x32xf32>
    %16 = arith.mulf %15, %15 : vector<6x32xf32>
    %cst_13 = arith.constant dense<0.000000e+00> : vector<6xf32>
    %17 = vector.multi_reduction <add>, %16, %cst_13 [1] : vector<6x32xf32> to vector<6xf32>
    %18 = vector.shape_cast %17 : vector<6xf32> to vector<6x1xf32>
    %cst_14 = arith.constant 3.200000e+01 : f32
    %19 = vector.broadcast %cst_14 : f32 to vector<6x1xf32>
    %20 = arith.divf %18, %19 : vector<6x1xf32>
    %cst_15 = arith.constant 9.99999974E-6 : f32
    %21 = vector.broadcast %cst_15 : f32 to vector<6x1xf32>
    %22 = arith.addf %20, %21 : vector<6x1xf32>
    %23 = math.rsqrt %22 : vector<6x1xf32>
    %24 = vector.broadcast %23 : vector<6x1xf32> to vector<6x32xf32>
    %25 = arith.mulf %15, %24 : vector<6x32xf32>
    %26 = vector.broadcast %8 : vector<1x32xf32> to vector<6x32xf32>
    %27 = arith.mulf %25, %26 : vector<6x32xf32>
    %28 = vector.broadcast %9 : vector<1x32xf32> to vector<6x32xf32>
    %29 = arith.addf %27, %28 : vector<6x32xf32>
    %c0_16 = arith.constant 0 : index
    %c0_17 = arith.constant 0 : index
    %30 = vector.load %arg6[%c0_16, %c0_17] : memref<32x64xf32, #tpu.memory_space<vmem>>, vector<32x64xf32>
    %cst_18 = arith.constant dense<0.000000e+00> : vector<6x64xf32>
    %31 = tpu.matmul %29, %30, %cst_18 {dimension_numbers = #tpu.dot_dimension_numbers<[1], [0], [0], [1], [0, 0, 1, 1], [], []>} : vector<6x32xf32>, vector<32x64xf32>, vector<6x64xf32> -> vector<6x64xf32>
    %c0_19 = arith.constant 0 : index
    %c0_20 = arith.constant 0 : index
    %32 = vector.load %arg7[%c0_19, %c0_20] : memref<1x64xf32, #tpu.memory_space<vmem>>, vector<1x64xf32>
    %33 = vector.broadcast %32 : vector<1x64xf32> to vector<6x64xf32>
    %34 = arith.addf %31, %33 : vector<6x64xf32>
    %cst_21 = arith.constant 5.000000e-01 : f32
    %35 = vector.broadcast %cst_21 : f32 to vector<6x64xf32>
    %36 = arith.mulf %35, %34 : vector<6x64xf32>
    %cst_22 = arith.constant 4.471500e-02 : f32
    %37 = vector.broadcast %cst_22 : f32 to vector<6x64xf32>
    %38 = arith.mulf %37, %34 : vector<6x64xf32>
    %39 = arith.mulf %38, %34 : vector<6x64xf32>
    %40 = arith.mulf %39, %34 : vector<6x64xf32>
    %41 = arith.addf %34, %40 : vector<6x64xf32>
    %cst_23 = arith.constant 0.797884583 : f32
    %42 = vector.broadcast %cst_23 : f32 to vector<6x64xf32>
    %43 = arith.mulf %42, %41 : vector<6x64xf32>
    %44 = math.tanh %43 : vector<6x64xf32>
    %cst_24 = arith.constant 1.000000e+00 : f32
    %45 = vector.broadcast %cst_24 : f32 to vector<6x64xf32>
    %46 = arith.addf %45, %44 : vector<6x64xf32>
    %47 = arith.mulf %36, %46 : vector<6x64xf32>
    %c0_25 = arith.constant 0 : index
    %c0_26 = arith.constant 0 : index
    %48 = vector.load %arg8[%c0_25, %c0_26] : memref<64x32xf32, #tpu.memory_space<vmem>>, vector<64x32xf32>
    %cst_27 = arith.constant dense<0.000000e+00> : vector<6x32xf32>
    %49 = tpu.matmul %47, %48, %cst_27 {dimension_numbers = #tpu.dot_dimension_numbers<[1], [0], [0], [1], [0, 0, 1, 1], [], []>} : vector<6x64xf32>, vector<64x32xf32>, vector<6x32xf32> -> vector<6x32xf32>
    %c0_28 = arith.constant 0 : index
    %c0_29 = arith.constant 0 : index
    %50 = vector.load %arg9[%c0_28, %c0_29] : memref<1x32xf32, #tpu.memory_space<vmem>>, vector<1x32xf32>
    %51 = vector.broadcast %50 : vector<1x32xf32> to vector<6x32xf32>
    %52 = arith.addf %49, %51 : vector<6x32xf32>
    %53 = arith.addf %7, %52 : vector<6x32xf32>
    %c0_30 = arith.constant 0 : index
    %c0_31 = arith.constant 0 : index
    %54 = vector.load %arg10[%c0_30, %c0_31] : memref<6x32xf32, #tpu.memory_space<vmem>>, vector<6x32xf32>
    tpu.vector_store %arg10[%c0_30, %c0_31], %53 {strides = array<i32>} : memref<6x32xf32, #tpu.memory_space<vmem>>, vector<6x32xf32>,
    return
  }
}

module attributes {stable_mosaic.version = 11 : i64} {
  func.func @_head_kernel(%arg0: memref<2x32xf32, #tpu.memory_space<vmem>>, %arg1: memref<1x32xf32, #tpu.memory_space<vmem>>, %arg2: memref<1x32xf32, #tpu.memory_space<vmem>>, %arg3: memref<32x10xf32, #tpu.memory_space<vmem>>, %arg4: memref<1x10xf32, #tpu.memory_space<vmem>>, %arg5: memref<2x10xf32, #tpu.memory_space<vmem>>) attributes {dimension_semantics = [], scalar_prefetch = 0 : i64, scratch_operands = 0 : i64, tpu.core_type = #tpu.core_type<tc>} {
    %c0 = arith.constant 0 : index
    %c0_0 = arith.constant 0 : index
    %0 = vector.load %arg0[%c0, %c0_0] : memref<2x32xf32, #tpu.memory_space<vmem>>, vector<2x32xf32>
    %c0_1 = arith.constant 0 : index
    %c0_2 = arith.constant 0 : index
    %1 = vector.load %arg1[%c0_1, %c0_2] : memref<1x32xf32, #tpu.memory_space<vmem>>, vector<1x32xf32>
    %c0_3 = arith.constant 0 : index
    %c0_4 = arith.constant 0 : index
    %2 = vector.load %arg2[%c0_3, %c0_4] : memref<1x32xf32, #tpu.memory_space<vmem>>, vector<1x32xf32>
    %cst = arith.constant dense<0.000000e+00> : vector<2xf32>
    %3 = vector.multi_reduction <add>, %0, %cst [1] : vector<2x32xf32> to vector<2xf32>
    %4 = vector.shape_cast %3 : vector<2xf32> to vector<2x1xf32>
    %cst_5 = arith.constant 3.200000e+01 : f32
    %5 = vector.broadcast %cst_5 : f32 to vector<2x1xf32>
    %6 = arith.divf %4, %5 : vector<2x1xf32>
    %7 = vector.broadcast %6 : vector<2x1xf32> to vector<2x32xf32>
    %8 = arith.subf %0, %7 : vector<2x32xf32>
    %9 = arith.mulf %8, %8 : vector<2x32xf32>
    %cst_6 = arith.constant dense<0.000000e+00> : vector<2xf32>
    %10 = vector.multi_reduction <add>, %9, %cst_6 [1] : vector<2x32xf32> to vector<2xf32>
    %11 = vector.shape_cast %10 : vector<2xf32> to vector<2x1xf32>
    %cst_7 = arith.constant 3.200000e+01 : f32
    %12 = vector.broadcast %cst_7 : f32 to vector<2x1xf32>
    %13 = arith.divf %11, %12 : vector<2x1xf32>
    %cst_8 = arith.constant 9.99999974E-6 : f32
    %14 = vector.broadcast %cst_8 : f32 to vector<2x1xf32>
    %15 = arith.addf %13, %14 : vector<2x1xf32>
    %16 = math.rsqrt %15 : vector<2x1xf32>
    %17 = vector.broadcast %16 : vector<2x1xf32> to vector<2x32xf32>
    %18 = arith.mulf %8, %17 : vector<2x32xf32>
    %19 = vector.broadcast %1 : vector<1x32xf32> to vector<2x32xf32>
    %20 = arith.mulf %18, %19 : vector<2x32xf32>
    %21 = vector.broadcast %2 : vector<1x32xf32> to vector<2x32xf32>
    %22 = arith.addf %20, %21 : vector<2x32xf32>
    %c0_9 = arith.constant 0 : index
    %c0_10 = arith.constant 0 : index
    %23 = vector.load %arg3[%c0_9, %c0_10] : memref<32x10xf32, #tpu.memory_space<vmem>>, vector<32x10xf32>
    %cst_11 = arith.constant dense<0.000000e+00> : vector<2x10xf32>
    %24 = tpu.matmul %22, %23, %cst_11 {dimension_numbers = #tpu.dot_dimension_numbers<[1], [0], [0], [1], [0, 0, 1, 1], [], []>} : vector<2x32xf32>, vector<32x10xf32>, vector<2x10xf32> -> vector<2x10xf32>
    %c0_12 = arith.constant 0 : index
    %c0_13 = arith.constant 0 : index
    %25 = vector.load %arg4[%c0_12, %c0_13] : memref<1x10xf32, #tpu.memory_space<vmem>>, vector<1x10xf32>
    %26 = vector.broadcast %25 : vector<1x10xf32> to vector<2x10xf32>
    %27 = arith.addf %24, %26 : vector<2x10xf32>
    %c0_14 = arith.constant 0 : index
    %c0_15 = arith.constant 0 : index
    %28 = vector.load %arg5[%c0_14, %c0_15] : memref<2x10xf32, #tpu.memory_space<vmem>>, vector<2x10xf32>
    tpu.vector_store %arg5[%c0_14, %c0_15], %27 {strides = array<i32>} : memref<2x10xf32, #tpu.memory_space<vmem>>, vector<2x10xf32>,
    return
  }
}

</mosaic_0001>

<llo_original>
// kernel: vivit_forward.8
$region0: #{vivit_forward.8}
  #allocation0 [shape = 'u32[]', space=smem, size = 0x4, offset = 0x4, fixed_abs, tag = 'smem constant byte address 0x4 - core index']
  #allocation1 [shape = 'u32[72,128]{1,0:T(1,128)}', space=vmem, size = 0x9000, scoped, tag = 'internal scratch']
  %s0 = inlined_call_operand.vmem [shape: f32[16,384], index: 0, kind: input, shape index: {}]
  %s1 = inlined_call_operand.vmem [shape: f32[1,384], index: 1, kind: input, shape index: {}]
  %s2 = inlined_call_operand.vmem [shape: f32[1,384], index: 2, kind: input, shape index: {}]
  %s3 = inlined_call_operand.vmem [shape: f32[384,32], index: 3, kind: input, shape index: {}]
  %s4 = inlined_call_operand.vmem [shape: f32[1,32], index: 4, kind: input, shape index: {}]
  %s5 = inlined_call_operand.vmem [shape: f32[1,32], index: 5, kind: input, shape index: {}]
  %s6 = inlined_call_operand.vmem [shape: f32[1,32], index: 6, kind: input, shape index: {}]
  %s7 = inlined_call_operand.vmem [shape: f32[16,32], index: 7, kind: input, shape index: {}]
  %s8 = inlined_call_operand.vmem [shape: f32[16,32], index: 8, kind: output, shape index: {}]
  %s9 = sld [smem:[#allocation0]]
  $region42: #{vivit_forward.8} parent=0
    _
  %s11 = ssub.s32 1, %s9
  %s12 = scalar_select 0, %s11, %s9
  // Predicated region
  $region2: #{vivit_forward.8} parent=0 // pred_check
    _
  $region3: #{vivit_forward.8} parent=0 // pred_check_branch
    %14 = sbr.rel (0) target = $region5
  $region4: #{vivit_forward.8} parent=0 // pred_region
    _
  $region5: #{vivit_forward.8} parent=0 // pred_fallthru
    _
  // Predicated region
  $region6: #{vivit_forward.8} parent=0 // pred_check
    _
  $region7: #{vivit_forward.8} parent=0 // pred_check_branch
    %16 = sbr.rel (0) target = $region9
  $region8: #{vivit_forward.8} parent=0 // pred_region
    _
  $region9: #{vivit_forward.8} parent=0 // pred_fallthru
    _
  // Predicated region
  $region10: #{vivit_forward.8} parent=0 // pred_check
    _
  $region11: #{vivit_forward.8} parent=0 // pred_check_branch
    %18 = sbr.rel (0) target = $region13
  $region12: #{vivit_forward.8} parent=0 // pred_region
    _
  $region13: #{vivit_forward.8} parent=0 // pred_fallthru
    _
  // Predicated region
  $region14: #{vivit_forward.8} parent=0 // pred_check
    _
  $region15: #{vivit_forward.8} parent=0 // pred_check_branch
    %20 = sbr.rel (0) target = $region17
  $region16: #{vivit_forward.8} parent=0 // pred_region
    _
  $region17: #{vivit_forward.8} parent=0 // pred_fallthru
    _
  // Predicated region
  $region18: #{vivit_forward.8} parent=0 // pred_check
    _
  $region19: #{vivit_forward.8} parent=0 // pred_check_branch
    %22 = sbr.rel (0) target = $region21
  $region20: #{vivit_forward.8} parent=0 // pred_region
    _
  $region21: #{vivit_forward.8} parent=0 // pred_fallthru
    _
  // Predicated region
  $region22: #{vivit_forward.8} parent=0 // pred_check
    _
  $region23: #{vivit_forward.8} parent=0 // pred_check_branch
    %24 = sbr.rel (0) target = $region25
  $region24: #{vivit_forward.8} parent=0 // pred_region
    _
  $region25: #{vivit_forward.8} parent=0 // pred_fallthru
    _
  // Predicated region
  $region26: #{vivit_forward.8} parent=0 // pred_check
    _
  $region27: #{vivit_forward.8} parent=0 // pred_check_branch
    %26 = sbr.rel (0) target = $region29
  $region28: #{vivit_forward.8} parent=0 // pred_region
    _
  $region29: #{vivit_forward.8} parent=0 // pred_fallthru
    _
  // Predicated region
  $region30: #{vivit_forward.8} parent=0 // pred_check
    _
  $region31: #{vivit_forward.8} parent=0 // pred_check_branch
    %28 = sbr.rel (0) target = $region33
  $region32: #{vivit_forward.8} parent=0 // pred_region
    _
  $region33: #{vivit_forward.8} parent=0 // pred_fallthru
    _
  %v29 = vld [vmem:[%s0] sm:$0xff]
  %v30 = vld [vmem:[%s0 + $0x8] sm:$0xff]
  %v31 = vld [vmem:[%s0 + $0x10] sm:$0xff]
  %v32 = vld [vmem:[%s0 + $0x18] sm:$0xff]
  %v33 = vld [vmem:[%s0 + $0x20] sm:$0xff]
  %v34 = vld [vmem:[%s0 + $0x28] sm:$0xff]
  %v35 = vld [vmem:[%s1] sm:$0x7]
  %v36 = vld [vmem:[%s2] sm:$0x7]
  %v37 = vadd.f32 %v29, %v30
  %v38 = vadd.f32 %v37, %v31
  %39 = vadd.xlane.f32.xlu0 %v38
  %v40 = vpop.xlane.xlu0 %39
  %v41 = vadd.f32 %v32, %v33
  %v42 = vadd.f32 %v41, %v34
  %43 = vadd.xlane.f32.xlu0 %v42
  %v44 = vpop.xlane.xlu0 %43
  %v45 = vrcp.pop 384.0
  %v46 = vmul.f32 384.0, %v45
  %v47 = vsub.f32 1.0, %v46
  %v48 = vmul.f32 %v45, %v47
  %v49 = vadd.f32 %v45, %v48
  %vm50 = vweird.f32 %v45
  %v51 = vsel %vm50, %v45, %v49
  %v52 = vmul.f32 %v40, %v51
  %v53 = vmul.f32 %v44, %v51
  %v54 = vsub.f32 %v29, %v52
  %v55 = vsub.f32 %v30, %v52
  %v56 = vsub.f32 %v31, %v52
  %v57 = vsub.f32 %v32, %v53
  %v58 = vsub.f32 %v33, %v53
  %v59 = vsub.f32 %v34, %v53
  %v60 = vmul.f32 %v54, %v54
  %v61 = vmul.f32 %v55, %v55
  %v62 = vmul.f32 %v56, %v56
  %v63 = vmul.f32 %v57, %v57
  %v64 = vmul.f32 %v58, %v58
  %v65 = vmul.f32 %v59, %v59
  %v66 = vadd.f32 %v60, %v61
  %v67 = vadd.f32 %v66, %v62
  %68 = vadd.xlane.f32.xlu0 %v67
  %v69 = vpop.xlane.xlu0 %68
  %v70 = vadd.f32 %v63, %v64
  %v71 = vadd.f32 %v70, %v65
  %72 = vadd.xlane.f32.xlu0 %v71
  %v73 = vpop.xlane.xlu0 %72
  %v74 = vmul.f32 %v69, %v51
  %v75 = vmul.f32 %v73, %v51
  %v76 = vadd.f32 %v74, 1e-05
  %v77 = vadd.f32 %v75, 1e-05
  %v78 = vrsqrt.pop %v76
  %v79 = vmul.f32 %v78, %v76
  %v80 = vmul.f32 %v79, %v78
  %v81 = vmul.f32 0.5, %v80
  %v82 = vsub.f32 1.5, %v81
  %v83 = vmul.f32 %v78, %v82
  %vm84 = vweird.f32 %v76
  %vm85 = vweird.f32 %v78
  %vm86 = vmor %vm84, %vm85
  %v87 = vsel %vm86, %v78, %v83
  %v88 = vrsqrt.pop %v77
  %v89 = vmul.f32 %v88, %v77
  %v90 = vmul.f32 %v89, %v88
  %v91 = vmul.f32 0.5, %v90
  %v92 = vsub.f32 1.5, %v91
  %v93 = vmul.f32 %v88, %v92
  %vm94 = vweird.f32 %v77
  %vm95 = vweird.f32 %v88
  %vm96 = vmor %vm94, %vm95
  %v97 = vsel %vm96, %v88, %v93
  %v98 = vmul.f32 %v54, %v87
  %v99 = vmul.f32 %v55, %v87
  %v100 = vmul.f32 %v56, %v87
  %v101 = vmul.f32 %v57, %v97
  %v102 = vmul.f32 %v58, %v97
  %v103 = vmul.f32 %v59, %v97
  %v105 = vperm.slane %v35, 0
  %v106 = vperm.slane %v35, 1
  %v107 = vperm.slane %v35, 2
  %v111 = vmul.f32 %v98, %v105
  %v112 = vmul.f32 %v99, %v106
  %v113 = vmul.f32 %v100, %v107
  %v114 = vmul.f32 %v101, %v105
  %v115 = vmul.f32 %v102, %v106
  %v116 = vmul.f32 %v103, %v107
  %v118 = vperm.slane %v36, 0
  %v119 = vperm.slane %v36, 1
  %v120 = vperm.slane %v36, 2
  %v124 = vadd.f32 %v111, %v118
  %v125 = vadd.f32 %v112, %v119
  %v126 = vadd.f32 %v113, %v120
  %v127 = vadd.f32 %v114, %v118
  %v128 = vadd.f32 %v115, %v119
  %v129 = vadd.f32 %v116, %v120
  %v130 = vld [vmem:[%s3] sm:$0xff]
  %v131 = vld [vmem:[%s3 + $0x8] sm:$0xff]
  %v132 = vld [vmem:[%s3 + $0x10] sm:$0xff]
  %v133 = vld [vmem:[%s3 + $0x18] sm:$0xff]
  %v134 = vld [vmem:[%s3 + $0x20] sm:$0xff]
  %v135 = vld [vmem:[%s3 + $0x28] sm:$0xff]
  %v136 = vld [vmem:[%s3 + $0x30] sm:$0xff]
  %v137 = vld [vmem:[%s3 + $0x38] sm:$0xff]
  %v138 = vld [vmem:[%s3 + $0x40] sm:$0xff]
  %v139 = vld [vmem:[%s3 + $0x48] sm:$0xff]
  %v140 = vld [vmem:[%s3 + $0x50] sm:$0xff]
  %v141 = vld [vmem:[%s3 + $0x58] sm:$0xff]
  %v142 = vld [vmem:[%s3 + $0x60] sm:$0xff]
  %v143 = vld [vmem:[%s3 + $0x68] sm:$0xff]
  %v144 = vld [vmem:[%s3 + $0x70] sm:$0xff]
  %v145 = vld [vmem:[%s3 + $0x78] sm:$0xff]
  %v146 = vld [vmem:[%s3 + $0x80] sm:$0xff]
  %v147 = vld [vmem:[%s3 + $0x88] sm:$0xff]
  %v148 = vld [vmem:[%s3 + $0x90] sm:$0xff]
  %v149 = vld [vmem:[%s3 + $0x98] sm:$0xff]
  %v150 = vld [vmem:[%s3 + $0xa0] sm:$0xff]
  %v151 = vld [vmem:[%s3 + $0xa8] sm:$0xff]
  %v152 = vld [vmem:[%s3 + $0xb0] sm:$0xff]
  %v153 = vld [vmem:[%s3 + $0xb8] sm:$0xff]
  %v154 = vld [vmem:[%s3 + $0xc0] sm:$0xff]
  %v155 = vld [vmem:[%s3 + $0xc8] sm:$0xff]
  %v156 = vld [vmem:[%s3 + $0xd0] sm:$0xff]
  %v157 = vld [vmem:[%s3 + $0xd8] sm:$0xff]
  %v158 = vld [vmem:[%s3 + $0xe0] sm:$0xff]
  %v159 = vld [vmem:[%s3 + $0xe8] sm:$0xff]
  %v160 = vld [vmem:[%s3 + $0xf0] sm:$0xff]
  %v161 = vld [vmem:[%s3 + $0xf8] sm:$0xff]
  %v162 = vld [vmem:[%s3 + $0x100] sm:$0xff]
  %v163 = vld [vmem:[%s3 + $0x108] sm:$0xff]
  %v164 = vld [vmem:[%s3 + $0x110] sm:$0xff]
  %v165 = vld [vmem:[%s3 + $0x118] sm:$0xff]
  %v166 = vld [vmem:[%s3 + $0x120] sm:$0xff]
  %v167 = vld [vmem:[%s3 + $0x128] sm:$0xff]
  %v168 = vld [vmem:[%s3 + $0x130] sm:$0xff]
  %v169 = vld [vmem:[%s3 + $0x138] sm:$0xff]
  %v170 = vld [vmem:[%s3 + $0x140] sm:$0xff]
  %v171 = vld [vmem:[%s3 + $0x148] sm:$0xff]
  %v172 = vld [vmem:[%s3 + $0x150] sm:$0xff]
  %v173 = vld [vmem:[%s3 + $0x158] sm:$0xff]
  %v174 = vld [vmem:[%s3 + $0x160] sm:$0xff]
  %v175 = vld [vmem:[%s3 + $0x168] sm:$0xff]
  %v176 = vld [vmem:[%s3 + $0x170] sm:$0xff]
  %v177 = vld [vmem:[%s3 + $0x178] sm:$0xff]
  %v178 = vld [vmem:[%s4] sm:$0x1]
  %v180 = vperm.slane %v178, 0
  %182 = vmatpush.msra.mxu0 %v145
  %183 = vmatpush.msra.mxu0 %v144
  %184 = vmatpush.msra.mxu0 %v143
  %185 = vmatpush.msra.mxu0 %v142
  %186 = vmatpush.msra.mxu0 %v141
  %187 = vmatpush.msra.mxu0 %v140
  %188 = vmatpush.msra.mxu0 %v139
  %189 = vmatpush.msra.mxu0 %v138
  %190 = vmatpush.msra.mxu0 %v137
  %191 = vmatpush.msra.mxu0 %v136
  %192 = vmatpush.msra.mxu0 %v135
  %193 = vmatpush.msra.mxu0 %v134
  %194 = vmatpush.msra.mxu0 %v133
  %195 = vmatpush.msra.mxu0 %v132
  %196 = vmatpush.msra.mxu0 %v131
  %197 = vmatpush.msra.mxu0 %v130
  %198 = vmatmul.f32.gmra.mxu0 %v124
  %v199 = vpop.f32.mrf.mxu0
  %v200 = vadd.f32 %v180, %v199
  %201 = vmatmul.f32.gmra.mxu0 %v127
  %v202 = vpop.f32.mrf.mxu0
  %v203 = vadd.f32 %v180, %v202
  %204 = vdwg.mxu0
  %205 = vmatpush.msra.mxu0 %v161
  %206 = vmatpush.msra.mxu0 %v160
  %207 = vmatpush.msra.mxu0 %v159
  %208 = vmatpush.msra.mxu0 %v158
  %209 = vmatpush.msra.mxu0 %v157
  %210 = vmatpush.msra.mxu0 %v156
  %211 = vmatpush.msra.mxu0 %v155
  %212 = vmatpush.msra.mxu0 %v154
  %213 = vmatpush.msra.mxu0 %v153
  %214 = vmatpush.msra.mxu0 %v152
  %215 = vmatpush.msra.mxu0 %v151
  %216 = vmatpush.msra.mxu0 %v150
  %217 = vmatpush.msra.mxu0 %v149
  %218 = vmatpush.msra.mxu0 %v148
  %219 = vmatpush.msra.mxu0 %v147
  %220 = vmatpush.msra.mxu0 %v146
  %221 = vmatmul.f32.gmra.mxu0 %v125
  %v222 = vpop.f32.mrf.mxu0
  %v223 = vadd.f32 %v200, %v222
  %224 = vmatmul.f32.gmra.mxu0 %v128
  %v225 = vpop.f32.mrf.mxu0
  %v226 = vadd.f32 %v203, %v225
  %227 = vdwg.mxu0
  %228 = vmatpush.msra.mxu0 %v177
  %229 = vmatpush.msra.mxu0 %v176
  %230 = vmatpush.msra.mxu0 %v175
  %231 = vmatpush.msra.mxu0 %v174
  %232 = vmatpush.msra.mxu0 %v173
  %233 = vmatpush.msra.mxu0 %v172
  %234 = vmatpush.msra.mxu0 %v171
  %235 = vmatpush.msra.mxu0 %v170
  %236 = vmatpush.msra.mxu0 %v169
  %237 = vmatpush.msra.mxu0 %v168
  %238 = vmatpush.msra.mxu0 %v167
  %239 = vmatpush.msra.mxu0 %v166
  %240 = vmatpush.msra.mxu0 %v165
  %241 = vmatpush.msra.mxu0 %v164
  %242 = vmatpush.msra.mxu0 %v163
  %243 = vmatpush.msra.mxu0 %v162
  %244 = vmatmul.f32.gmra.mxu0 %v126
  %v245 = vpop.f32.mrf.mxu0
  %v246 = vadd.f32 %v223, %v245
  %247 = vmatmul.f32.gmra.mxu0 %v129
  %v248 = vpop.f32.mrf.mxu0
  %v249 = vadd.f32 %v226, %v248
  %250 = vdwg.mxu0
  %v251 = vld [vmem:[%s5] sm:$0x1]
  %v252 = vld [vmem:[%s6] sm:$0x1]
  %vm253 = vcmask 261120
  %v254 = vsel %vm253, %v246, 0.0
  %255 = vadd.xlane.f32.xlu0 %v254
  %v256 = vpop.xlane.xlu0 %255
  %v257 = vsel %vm253, %v249, 0.0
  %258 = vadd.xlane.f32.xlu0 %v257
  %v259 = vpop.xlane.xlu0 %258
  %v260 = vrcp.pop 32.0
  %v261 = vmul.f32 32.0, %v260
  %v262 = vsub.f32 1.0, %v261
  %v263 = vmul.f32 %v260, %v262
  %v264 = vadd.f32 %v260, %v263
  %vm265 = vweird.f32 %v260
  %v266 = vsel %vm265, %v260, %v264
  %v267 = vmul.f32 %v256, %v266
  %v268 = vmul.f32 %v259, %v266
  %v269 = vsub.f32 %v246, %v267
  %v270 = vsub.f32 %v249, %v268
  %v271 = vmul.f32 %v269, %v269
  %v272 = vmul.f32 %v270, %v270
  %v273 = vsel %vm253, %v271, 0.0
  %274 = vadd.xlane.f32.xlu0 %v273
  %v275 = vpop.xlane.xlu0 %274
  %v276 = vsel %vm253, %v272, 0.0
  %277 = vadd.xlane.f32.xlu0 %v276
  %v278 = vpop.xlane.xlu0 %277
  %v279 = vmul.f32 %v275, %v266
  %v280 = vmul.f32 %v278, %v266
  %v281 = vadd.f32 %v279, 1e-05
  %v282 = vadd.f32 %v280, 1e-05
  %v283 = vrsqrt.pop %v281
  %v284 = vmul.f32 %v283, %v281
  %v285 = vmul.f32 %v284, %v283
  %v286 = vmul.f32 0.5, %v285
  %v287 = vsub.f32 1.5, %v286
  %v288 = vmul.f32 %v283, %v287
  %vm289 = vweird.f32 %v281
  %vm290 = vweird.f32 %v283
  %vm291 = vmor %vm289, %vm290
  %v292 = vsel %vm291, %v283, %v288
  %v293 = vrsqrt.pop %v282
  %v294 = vmul.f32 %v293, %v282
  %v295 = vmul.f32 %v294, %v293
  %v296 = vmul.f32 0.5, %v295
  %v297 = vsub.f32 1.5, %v296
  %v298 = vmul.f32 %v293, %v297
  %vm299 = vweird.f32 %v282
  %vm300 = vweird.f32 %v293
  %vm301 = vmor %vm299, %vm300
  %v302 = vsel %vm301, %v293, %v298
  %v303 = vmul.f32 %v269, %v292
  %v304 = vmul.f32 %v270, %v302
  %v306 = vperm.slane %v251, 0
  %v308 = vmul.f32 %v303, %v306
  %v309 = vmul.f32 %v304, %v306
  %v311 = vperm.slane %v252, 0
  %v313 = vadd.f32 %v308, %v311
  %v314 = vadd.f32 %v309, %v311
  %v315 = vld [vmem:[%s7] sm:$0xff]
  %v316 = vld [vmem:[%s7 + $0x8] sm:$0xff]
  %v317 = vadd.f32 %v313, %v315
  %v318 = vadd.f32 %v314, %v316
  %319 = vst.msk [vmem:[%s8] sm:$0xff] %vm253, %v317
  %320 = vst.msk [vmem:[%s8 + $0x8] sm:$0xff] %vm253, %v318
  // Predicated region
  $region34: #{vivit_forward.8} parent=0 // pred_check
    _
  $region35: #{vivit_forward.8} parent=0 // pred_check_branch
    %322 = sbr.rel (0) target = $region37
  $region36: #{vivit_forward.8} parent=0 // pred_region
    _
  $region37: #{vivit_forward.8} parent=0 // pred_fallthru
    _
  // Predicated region
  $region38: #{vivit_forward.8} parent=0 // pred_check
    _
  $region39: #{vivit_forward.8} parent=0 // pred_check_branch
    %324 = sbr.rel (0) target = $region41
  $region40: #{vivit_forward.8} parent=0 // pred_region
    _
  $region41: #{vivit_forward.8} parent=0 // pred_fallthru
    _

// kernel: vivit_forward.9
$region0: #{vivit_forward.9}
  #allocation0 [shape = 'u32[]', space=smem, size = 0x4, offset = 0x4, fixed_abs, tag = 'smem constant byte address 0x4 - core index']
  #allocation1 [shape = 'u32[72,128]{1,0:T(1,128)}', space=vmem, size = 0x9000, scoped, tag = 'internal scratch']
  %s0 = inlined_call_operand.vmem [shape: f32[20,32], index: 0, kind: input, shape index: {}]
  %s1 = inlined_call_operand.vmem [shape: f32[1,32], index: 1, kind: input, shape index: {}]
  %s2 = inlined_call_operand.vmem [shape: f32[1,32], index: 2, kind: input, shape index: {}]
  %s3 = inlined_call_operand.vmem [shape: f32[32,96], index: 3, kind: input, shape index: {}]
  %s4 = inlined_call_operand.vmem [shape: f32[20,96], index: 4, kind: output, shape index: {}]
  %s5 = sld [smem:[#allocation0]]
  $region26: #{vivit_forward.9} parent=0
    _
  %s7 = ssub.s32 1, %s5
  %s8 = scalar_select 0, %s7, %s5
  // Predicated region
  $region2: #{vivit_forward.9} parent=0 // pred_check
    _
  $region3: #{vivit_forward.9} parent=0 // pred_check_branch
    %10 = sbr.rel (0) target = $region5
  $region4: #{vivit_forward.9} parent=0 // pred_region
    _
  $region5: #{vivit_forward.9} parent=0 // pred_fallthru
    _
  // Predicated region
  $region6: #{vivit_forward.9} parent=0 // pred_check
    _
  $region7: #{vivit_forward.9} parent=0 // pred_check_branch
    %12 = sbr.rel (0) target = $region9
  $region8: #{vivit_forward.9} parent=0 // pred_region
    _
  $region9: #{vivit_forward.9} parent=0 // pred_fallthru
    _
  // Predicated region
  $region10: #{vivit_forward.9} parent=0 // pred_check
    _
  $region11: #{vivit_forward.9} parent=0 // pred_check_branch
    %14 = sbr.rel (0) target = $region13
  $region12: #{vivit_forward.9} parent=0 // pred_region
    _
  $region13: #{vivit_forward.9} parent=0 // pred_fallthru
    _
  // Predicated region
  $region14: #{vivit_forward.9} parent=0 // pred_check
    _
  $region15: #{vivit_forward.9} parent=0 // pred_check_branch
    %16 = sbr.rel (0) target = $region17
  $region16: #{vivit_forward.9} parent=0 // pred_region
    _
  $region17: #{vivit_forward.9} parent=0 // pred_fallthru
    _
  %v17 = vld [vmem:[%s0] sm:$0xff]
  %v18 = vld [vmem:[%s0 + $0x8] sm:$0xff]
  %v19 = vld [vmem:[%s0 + $0x10] sm:$0xf]
  %v20 = vld [vmem:[%s1] sm:$0x1]
  %v21 = vld [vmem:[%s2] sm:$0x1]
  %vm22 = vcmask 261120
  %v23 = vsel %vm22, %v17, 0.0
  %24 = vadd.xlane.f32.xlu0 %v23
  %v25 = vpop.xlane.xlu0 %24
  %v26 = vsel %vm22, %v18, 0.0
  %27 = vadd.xlane.f32.xlu0 %v26
  %v28 = vpop.xlane.xlu0 %27
  %vm29 = vcmask 257024
  %v30 = vsel %vm29, %v19, 0.0
  %31 = vadd.xlane.f32.xlu0 %v30
  %v32 = vpop.xlane.xlu0 %31
  %v33 = vrcp.pop 32.0
  %v34 = vmul.f32 32.0, %v33
  %v35 = vsub.f32 1.0, %v34
  %v36 = vmul.f32 %v33, %v35
  %v37 = vadd.f32 %v33, %v36
  %vm38 = vweird.f32 %v33
  %v39 = vsel %vm38, %v33, %v37
  %v40 = vmul.f32 %v25, %v39
  %v41 = vmul.f32 %v28, %v39
  %v42 = vmul.f32 %v32, %v39
  %v43 = vsub.f32 %v17, %v40
  %v44 = vsub.f32 %v18, %v41
  %v45 = vsub.f32 %v19, %v42
  %v46 = vmul.f32 %v43, %v43
  %v47 = vmul.f32 %v44, %v44
  %v48 = vmul.f32 %v45, %v45
  %v49 = vsel %vm22, %v46, 0.0
  %50 = vadd.xlane.f32.xlu0 %v49
  %v51 = vpop.xlane.xlu0 %50
  %v52 = vsel %vm22, %v47, 0.0
  %53 = vadd.xlane.f32.xlu0 %v52
  %v54 = vpop.xlane.xlu0 %53
  %v55 = vsel %vm29, %v48, 0.0
  %56 = vadd.xlane.f32.xlu0 %v55
  %v57 = vpop.xlane.xlu0 %56
  %v58 = vmul.f32 %v51, %v39
  %v59 = vmul.f32 %v54, %v39
  %v60 = vmul.f32 %v57, %v39
  %v61 = vadd.f32 %v58, 1e-05
  %v62 = vadd.f32 %v59, 1e-05
  %v63 = vadd.f32 %v60, 1e-05
  %v64 = vrsqrt.pop %v61
  %v65 = vmul.f32 %v64, %v61
  %v66 = vmul.f32 %v65, %v64
  %v67 = vmul.f32 0.5, %v66
  %v68 = vsub.f32 1.5, %v67
  %v69 = vmul.f32 %v64, %v68
  %vm70 = vweird.f32 %v61
  %vm71 = vweird.f32 %v64
  %vm72 = vmor %vm70, %vm71
  %v73 = vsel %vm72, %v64, %v69
  %v74 = vrsqrt.pop %v62
  %v75 = vmul.f32 %v74, %v62
  %v76 = vmul.f32 %v75, %v74
  %v77 = vmul.f32 0.5, %v76
  %v78 = vsub.f32 1.5, %v77
  %v79 = vmul.f32 %v74, %v78
  %vm80 = vweird.f32 %v62
  %vm81 = vweird.f32 %v74
  %vm82 = vmor %vm80, %vm81
  %v83 = vsel %vm82, %v74, %v79
  %v84 = vrsqrt.pop %v63
  %v85 = vmul.f32 %v84, %v63
  %v86 = vmul.f32 %v85, %v84
  %v87 = vmul.f32 0.5, %v86
  %v88 = vsub.f32 1.5, %v87
  %v89 = vmul.f32 %v84, %v88
  %vm90 = vweird.f32 %v63
  %vm91 = vweird.f32 %v84
  %vm92 = vmor %vm90, %vm91
  %v93 = vsel %vm92, %v84, %v89
  %v94 = vmul.f32 %v43, %v73
  %v95 = vmul.f32 %v44, %v83
  %v96 = vmul.f32 %v45, %v93
  %v98 = vperm.slane %v20, 0
  %v100 = vmul.f32 %v94, %v98
  %v101 = vmul.f32 %v95, %v98
  %v102 = vmul.f32 %v96, %v98
  %v104 = vperm.slane %v21, 0
  %v106 = vadd.f32 %v100, %v104
  %v107 = vadd.f32 %v101, %v104
  %v108 = vadd.f32 %v102, %v104
  %v109 = vld [vmem:[%s3] sm:$0xff]
  %v110 = vld [vmem:[%s3 + $0x8] sm:$0xff]
  %v111 = vld [vmem:[%s3 + $0x10] sm:$0xff]
  %v112 = vld [vmem:[%s3 + $0x18] sm:$0xff]
  %v114 = vsel %vm22, %v106, 0
  %v117 = vsel %vm22, %v107, 0
  %v120 = vsel %vm22, %v108, 0
  %122 = vmatpush.msra.mxu0 0.0
  %123 = vmatpush.msra.mxu0 0.0
  %124 = vmatpush.msra.mxu0 0.0
  %125 = vmatpush.msra.mxu0 0.0
  %126 = vmatpush.msra.mxu0 0.0
  %127 = vmatpush.msra.mxu0 0.0
  %128 = vmatpush.msra.mxu0 0.0
  %129 = vmatpush.msra.mxu0 0.0
  %130 = vmatpush.msra.mxu0 0.0
  %131 = vmatpush.msra.mxu0 0.0
  %132 = vmatpush.msra.mxu0 0.0
  %133 = vmatpush.msra.mxu0 0.0
  %134 = vmatpush.msra.mxu0 %v112
  %135 = vmatpush.msra.mxu0 %v111
  %136 = vmatpush.msra.mxu0 %v110
  %137 = vmatpush.msra.mxu0 %v109
  %138 = vmatmul.f32.gmra.mxu0 %v114
  %v139 = vpop.f32.mrf.mxu0
  %v140 = vadd.f32 0.0, %v139
  %141 = vmatmul.f32.gmra.mxu0 %v117
  %v142 = vpop.f32.mrf.mxu0
  %v143 = vadd.f32 0.0, %v142
  %144 = vmatmul.f32.gmra.mxu0 %v120
  %v145 = vpop.f32.mrf.mxu0
  %v146 = vadd.f32 0.0, %v145
  %147 = vdwg.mxu0
  %vm148 = vcmask 785408
  %149 = vst.msk [vmem:[%s4] sm:$0xff] %vm148, %v140
  %150 = vst.msk [vmem:[%s4 + $0x8] sm:$0xff] %vm148, %v143
  %vm151 = vcmask 781312
  %152 = vst.msk [vmem:[%s4 + $0x10] sm:$0xf] %vm151, %v146
  // Predicated region
  $region18: #{vivit_forward.9} parent=0 // pred_check
    _
  $region19: #{vivit_forward.9} parent=0 // pred_check_branch
    %154 = sbr.rel (0) target = $region21
  $region20: #{vivit_forward.9} parent=0 // pred_region
    _
  $region21: #{vivit_forward.9} parent=0 // pred_fallthru
    _
  // Predicated region
  $region22: #{vivit_forward.9} parent=0 // pred_check
    _
  $region23: #{vivit_forward.9} parent=0 // pred_check_branch
    %156 = sbr.rel (0) target = $region25
  $region24: #{vivit_forward.9} parent=0 // pred_region
    _
  $region25: #{vivit_forward.9} parent=0 // pred_fallthru
    _

// kernel: vivit_forward.10
$region0: #{vivit_forward.10}
  #allocation0 [shape = 'u32[]', space=smem, size = 0x4, offset = 0x4, fixed_abs, tag = 'smem constant byte address 0x4 - core index']
  #allocation1 [shape = 'u32[72,128]{1,0:T(1,128)}', space=vmem, size = 0x9000, scoped, tag = 'internal scratch']
  %s0 = inlined_call_operand.vmem [shape: f32[16,5,8], index: 0, kind: input, shape index: {}]
  %s1 = inlined_call_operand.vmem [shape: f32[16,5,8], index: 1, kind: input, shape index: {}]
  %s2 = inlined_call_operand.vmem [shape: f32[16,5,8], index: 2, kind: input, shape index: {}]
  %s3 = inlined_call_operand.vmem [shape: f32[16,5,8], index: 3, kind: output, shape index: {}]
  %s4 = sld [smem:[#allocation0]]
  $region45: #{vivit_forward.10} parent=0
    _
  %s6 = ssub.s32 1, %s4
  %s7 = scalar_select 0, %s6, %s4
  loop: start=0, step=1, limit=4
  $region2: #{vivit_forward.10} parent=0 // loop_pre_header
    _
  $region3: #{vivit_forward.10} parent=0 // loop_header
    %s9 = sphi 0, %s13
    %p10 = scmp.ge.s32.totalorder %s9, 4
    %s19 = sphi 0, %s21
    %s22 = sphi 0, %s19
    %s23 = sphi 0, %s22
    %s39 = sphi 0, %s23
    %s45 = sphi 0, %s47
    %s48 = sphi 0, %s45
    %s49 = sphi 0, %s48
    %s65 = sphi 0, %s49
    %s71 = sphi 0, %s73
    %s74 = sphi 0, %s71
    %s75 = sphi 0, %s74
    %s91 = sphi 0, %s75
    %s97 = sphi 0, %s99
    %s100 = sphi 0, %s97
    %s101 = sphi 0, %s100
    %s117 = sphi 0, %s101
  $region4: #{vivit_forward.10} parent=0 // loop_header_branch
    %12 = sbr.rel (%p10) target = $region8
  $region5: #{vivit_forward.10} parent=0 // loop_body
    %s14 = ssub.s32 %s9, 1
    %s15 = ssub.s32 %s9, 2
    %s16 = sadd.s32 %s9, 1
    %s17 = ssub.s32 %s9, %s16
    %p18 = scmp.eq.s32.totalorder %s17, 0
    %s20 = sadd.s32 %s19, 1
    %s21 = scalar_select %p18, %s19, %s20
    %p24 = pneg %p18
    %p25 = scmp.eq.s32.totalorder %s9, 1
    %p26 = por %p24, %p25
    %p27 = scmp.ne.s32.totalorder %s19, %s22
    %p28 = scmp.eq.s32.totalorder %s9, 0
    %p29 = por %p27, %p28
    %p30 = scmp.ne.s32.totalorder %s19, %s22
    %p31 = scmp.eq.s32.totalorder %s14, 1
    %p32 = por %p30, %p31
    %p33 = scmp.ne.s32.totalorder %s22, %s23
    %p34 = scmp.eq.s32.totalorder %s14, 0
    %p35 = por %p33, %p34
    %p36 = scmp.ne.s32.totalorder %s22, %s23
    %p37 = scmp.eq.s32.totalorder %s15, 1
    %p38 = por %p36, %p37
    %p40 = scmp.ne.s32.totalorder %s23, %s39
    %p41 = scmp.eq.s32.totalorder %s15, 0
    %p42 = por %p40, %p41
    %s43 = ssub.s32 %s9, %s16
    %p44 = scmp.eq.s32.totalorder %s43, 0
    %s46 = sadd.s32 %s45, 1
    %s47 = scalar_select %p44, %s45, %s46
    %p50 = pneg %p44
    %p51 = scmp.eq.s32.totalorder %s9, 1
    %p52 = por %p50, %p51
    %p53 = scmp.ne.s32.totalorder %s45, %s48
    %p54 = scmp.eq.s32.totalorder %s9, 0
    %p55 = por %p53, %p54
    %p56 = scmp.ne.s32.totalorder %s45, %s48
    %p57 = scmp.eq.s32.totalorder %s14, 1
    %p58 = por %p56, %p57
    %p59 = scmp.ne.s32.totalorder %s48, %s49
    %p60 = scmp.eq.s32.totalorder %s14, 0
    %p61 = por %p59, %p60
    %p62 = scmp.ne.s32.totalorder %s48, %s49
    %p63 = scmp.eq.s32.totalorder %s15, 1
    %p64 = por %p62, %p63
    %p66 = scmp.ne.s32.totalorder %s49, %s65
    %p67 = scmp.eq.s32.totalorder %s15, 0
    %p68 = por %p66, %p67
    %s69 = ssub.s32 %s9, %s16
    %p70 = scmp.eq.s32.totalorder %s69, 0
    %s72 = sadd.s32 %s71, 1
    %s73 = scalar_select %p70, %s71, %s72
    %p76 = pneg %p70
    %p77 = scmp.eq.s32.totalorder %s9, 1
    %p78 = por %p76, %p77
    %p79 = scmp.ne.s32.totalorder %s71, %s74
    %p80 = scmp.eq.s32.totalorder %s9, 0
    %p81 = por %p79, %p80
    %p82 = scmp.ne.s32.totalorder %s71, %s74
    %p83 = scmp.eq.s32.totalorder %s14, 1
    %p84 = por %p82, %p83
    %p85 = scmp.ne.s32.totalorder %s74, %s75
    %p86 = scmp.eq.s32.totalorder %s14, 0
    %p87 = por %p85, %p86
    %p88 = scmp.ne.s32.totalorder %s74, %s75
    %p89 = scmp.eq.s32.totalorder %s15, 1
    %p90 = por %p88, %p89
    %p92 = scmp.ne.s32.totalorder %s75, %s91
    %p93 = scmp.eq.s32.totalorder %s15, 0
    %p94 = por %p92, %p93
    %s95 = ssub.s32 %s9, %s16
    %p96 = scmp.eq.s32.totalorder %s95, 0
    %s98 = sadd.s32 %s97, 1
    %s99 = scalar_select %p96, %s97, %s98
    %p102 = pneg %p96
    %p103 = scmp.eq.s32.totalorder %s9, 1
    %p104 = por %p102, %p103
    %p105 = scmp.ne.s32.totalorder %s97, %s100
    %p106 = scmp.eq.s32.totalorder %s9, 0
    %p107 = por %p105, %p106
    %p108 = scmp.ne.s32.totalorder %s97, %s100
    %p109 = scmp.eq.s32.totalorder %s14, 1
    %p110 = por %p108, %p109
    %p111 = scmp.ne.s32.totalorder %s100, %s101
    %p112 = scmp.eq.s32.totalorder %s14, 0
    %p113 = por %p111, %p112
    %p114 = scmp.ne.s32.totalorder %s100, %s101
    %p115 = scmp.eq.s32.totalorder %s15, 1
    %p116 = por %p114, %p115
    %p118 = scmp.ne.s32.totalorder %s101, %s117
    %p119 = scmp.eq.s32.totalorder %s15, 0
    %p120 = por %p118, %p119
    %p121 = scmp.le.s32.totalorder 1, %s9
    %p122 = scmp.lt.s32.totalorder %s9, 3
    %p123 = pnand %p121, %p122
    %p124 = pneg %p123
    // Predicated region
    $region9: #{vivit_forward.10} parent=5 // pred_check
      _
    $region10: #{vivit_forward.10} parent=5 // pred_check_branch
      %126 = sbr.rel (%p123) target = $region12
    $region11: #{vivit_forward.10} parent=5 // pred_region
      %s127 = ssub.s32 %s9, 1
    $region12: #{vivit_forward.10} parent=5 // pred_fallthru
      _
    %p128 = scmp.lt.s32.totalorder %s9, 2
    // Predicated region
    $region13: #{vivit_forward.10} parent=5 // pred_check
      %p129 = pneg %p128
    $region14: #{vivit_forward.10} parent=5 // pred_check_branch
      %131 = sbr.rel (%p129) target = $region16
    $region15: #{vivit_forward.10} parent=5 // pred_region
      // Predicated region
      $region17: #{vivit_forward.10} parent=15 // pred_check
        %p132 = pneg %p29
      $region18: #{vivit_forward.10} parent=15 // pred_check_branch
        %134 = sbr.rel (%p132) target = $region20
      $region19: #{vivit_forward.10} parent=15 // pred_region
        %s135 = smul.u32 8, %s9
        %p136 = scmp.lt.s32.totalorder %s135, 15
        %s137 = scalar_select %p136, %s135, 15
        %s138 = smul.addr %s137, 8
        %s139 = scalar_lea.vmem %s0, %s138
        %s140 = smul.u32 8, %s9
      $region20: #{vivit_forward.10} parent=15 // pred_fallthru
        _
      // Predicated region
      $region21: #{vivit_forward.10} parent=15 // pred_check
        %p141 = pneg %p55
      $region22: #{vivit_forward.10} parent=15 // pred_check_branch
        %143 = sbr.rel (%p141) target = $region24
      $region23: #{vivit_forward.10} parent=15 // pred_region
        %s144 = smul.u32 8, %s9
        %p145 = scmp.lt.s32.totalorder %s144, 15
        %s146 = scalar_select %p145, %s144, 15
        %s147 = smul.addr %s146, 8
        %s148 = scalar_lea.vmem %s1, %s147
        %s149 = smul.u32 8, %s9
      $region24: #{vivit_forward.10} parent=15 // pred_fallthru
        _
      // Predicated region
      $region25: #{vivit_forward.10} parent=15 // pred_check
        %p150 = pneg %p81
      $region26: #{vivit_forward.10} parent=15 // pred_check_branch
        %152 = sbr.rel (%p150) target = $region28
      $region27: #{vivit_forward.10} parent=15 // pred_region
        %s153 = smul.u32 8, %s9
        %p154 = scmp.lt.s32.totalorder %s153, 15
        %s155 = scalar_select %p154, %s153, 15
        %s156 = smul.addr %s155, 8
        %s157 = scalar_lea.vmem %s2, %s156
        %s158 = smul.u32 8, %s9
      $region28: #{vivit_forward.10} parent=15 // pred_fallthru
        _
    $region16: #{vivit_forward.10} parent=5 // pred_fallthru
      _
    %p159 = scmp.le.s32.totalorder 1, %s9
    %p160 = scmp.lt.s32.totalorder %s9, 3
    %p161 = pnand %p159, %p160
    %p162 = pneg %p161
    // Predicated region
    $region29: #{vivit_forward.10} parent=5 // pred_check
      _
    $region30: #{vivit_forward.10} parent=5 // pred_check_branch
      %164 = sbr.rel (%p161) target = $region32
    $region31: #{vivit_forward.10} parent=5 // pred_region
      %s165 = ssub.s32 %s9, 1
      %s166 = smul.u32 8, %s14
      %p167 = scmp.lt.s32.totalorder %s166, 15
      %s168 = scalar_select %p167, %s166, 15
      %s169 = smul.addr %s168, 8
      %s170 = scalar_lea.vmem %s0, %s169
      %p171 = pneg %p35
      %p172 = pneg %p32
      %s173 = smul.u32 8, %s14
      %p174 = scmp.lt.s32.totalorder %s173, 15
      %s175 = scalar_select %p174, %s173, 15
      %s176 = smul.addr %s175, 8
      %s177 = scalar_lea.vmem %s1, %s176
      %p178 = pneg %p61
      %p179 = pneg %p58
      %s180 = smul.u32 8, %s14
      %p181 = scmp.lt.s32.totalorder %s180, 15
      %s182 = scalar_select %p181, %s180, 15
      %s183 = smul.addr %s182, 8
      %s184 = scalar_lea.vmem %s2, %s183
      %p185 = pneg %p87
      %p186 = pneg %p84
      %p187 = pneg %p113
      %p188 = pneg %p110
      %s189 = smul.u32 8, %s14
      %p190 = scmp.lt.s32.totalorder %s189, 15
      %s191 = scalar_select %p190, %s189, 15
      %s192 = smul.addr %s191, 8
      %s193 = scalar_lea.vmem %s3, %s192
      %s194 = smul.u32 8, %s14
      %p195 = scmp.lt.s32.totalorder %s194, 15
      %s196 = scalar_select %p195, %s194, 15
      %s197 = smul.addr %s196, 8
      %s198 = scalar_lea.vmem %s0, %s197
      %s199 = smul.u32 8, %s14
      %s200 = smul.u32 8, %s14
      %p201 = scmp.lt.s32.totalorder %s200, 15
      %s202 = scalar_select %p201, %s200, 15
      %s203 = smul.addr %s202, 8
      %s204 = scalar_lea.vmem %s1, %s203
      %s205 = smul.u32 8, %s14
      %s206 = smul.u32 8, %s14
      %p207 = scmp.lt.s32.totalorder %s206, 15
      %s208 = scalar_select %p207, %s206, 15
      %s209 = smul.addr %s208, 8
      %s210 = scalar_lea.vmem %s2, %s209
      %s211 = smul.u32 8, %s14
      %s212 = smul.u32 8, %s14
      %p213 = scmp.lt.s32.totalorder %s212, 15
      %s214 = scalar_select %p213, %s212, 15
      %s215 = smul.addr %s214, 8
      %s216 = scalar_lea.vmem %s3, %s215
      %s217 = smul.u32 8, %s14
      %v218 = vld [vmem:[%s198] sm:$0x1f]
      %v219 = vld [vmem:[%s198 + $0x8] sm:$0x1f]
      %v220 = vld [vmem:[%s198 + $0x10] sm:$0x1f]
      %v221 = vld [vmem:[%s198 + $0x18] sm:$0x1f]
      %v222 = vld [vmem:[%s198 + $0x20] sm:$0x1f]
      %v223 = vld [vmem:[%s198 + $0x28] sm:$0x1f]
      %v224 = vld [vmem:[%s198 + $0x30] sm:$0x1f]
      %v225 = vld [vmem:[%s198 + $0x38] sm:$0x1f]
      %v226 = vld [vmem:[%s204] sm:$0x1f]
      %v227 = vld [vmem:[%s204 + $0x8] sm:$0x1f]
      %v228 = vld [vmem:[%s204 + $0x10] sm:$0x1f]
      %v229 = vld [vmem:[%s204 + $0x18] sm:$0x1f]
      %v230 = vld [vmem:[%s204 + $0x20] sm:$0x1f]
      %v231 = vld [vmem:[%s204 + $0x28] sm:$0x1f]
      %v232 = vld [vmem:[%s204 + $0x30] sm:$0x1f]
      %v233 = vld [vmem:[%s204 + $0x38] sm:$0x1f]
      %vm234 = vcmask 64512
      %v236 = vsel %vm234, %v218, 0
      %v239 = vsel %vm234, %v226, 0
      %241 = vmatpush.xpose.msra.mxu0 0.0
      %242 = vmatpush.xpose.msra.mxu0 0.0
      %243 = vmatpush.xpose.msra.mxu0 0.0
      %244 = vmatpush.xpose.msra.mxu0 0.0
      %245 = vmatpush.xpose.msra.mxu0 0.0
      %246 = vmatpush.xpose.msra.mxu0 0.0
      %247 = vmatpush.xpose.msra.mxu0 0.0
      %248 = vmatpush.xpose.msra.mxu0 0.0
      %249 = vmatpush.xpose.msra.mxu0 0.0
      %250 = vmatpush.xpose.msra.mxu0 0.0
      %251 = vmatpush.xpose.msra.mxu0 0.0
      %252 = vmatpush.xpose.msra.mxu0 0.0
      %253 = vmatpush.xpose.msra.mxu0 0.0
      %254 = vmatpush.xpose.msra.mxu0 0.0
      %255 = vmatpush.xpose.msra.mxu0 0.0
      %256 = vmatpush.xpose.msra.mxu0 %v239
      %257 = vmatmul.f32.gmra.mxu0 %v236
      %v258 = vpop.f32.mrf.mxu0
      %v259 = vadd.f32 0.0, %v258
      %260 = vdwg.mxu0
      %v262 = vsel %vm234, %v219, 0
      %v265 = vsel %vm234, %v227, 0
      %267 = vmatpush.xpose.msra.mxu0 0.0
      %268 = vmatpush.xpose.msra.mxu0 0.0
      %269 = vmatpush.xpose.msra.mxu0 0.0
      %270 = vmatpush.xpose.msra.mxu0 0.0
      %271 = vmatpush.xpose.msra.mxu0 0.0
      %272 = vmatpush.xpose.msra.mxu0 0.0
      %273 = vmatpush.xpose.msra.mxu0 0.0
      %274 = vmatpush.xpose.msra.mxu0 0.0
      %275 = vmatpush.xpose.msra.mxu0 0.0
      %276 = vmatpush.xpose.msra.mxu0 0.0
      %277 = vmatpush.xpose.msra.mxu0 0.0
      %278 = vmatpush.xpose.msra.mxu0 0.0
      %279 = vmatpush.xpose.msra.mxu0 0.0
      %280 = vmatpush.xpose.msra.mxu0 0.0
      %281 = vmatpush.xpose.msra.mxu0 0.0
      %282 = vmatpush.xpose.msra.mxu0 %v265
      %283 = vmatmul.f32.gmra.mxu0 %v262
      %v284 = vpop.f32.mrf.mxu0
      %v285 = vadd.f32 0.0, %v284
      %286 = vdwg.mxu0
      %v288 = vsel %vm234, %v220, 0
      %v291 = vsel %vm234, %v228, 0
      %293 = vmatpush.xpose.msra.mxu0 0.0
      %294 = vmatpush.xpose.msra.mxu0 0.0
      %295 = vmatpush.xpose.msra.mxu0 0.0
      %296 = vmatpush.xpose.msra.mxu0 0.0
      %297 = vmatpush.xpose.msra.mxu0 0.0
      %298 = vmatpush.xpose.msra.mxu0 0.0
      %299 = vmatpush.xpose.msra.mxu0 0.0
      %300 = vmatpush.xpose.msra.mxu0 0.0
      %301 = vmatpush.xpose.msra.mxu0 0.0
      %302 = vmatpush.xpose.msra.mxu0 0.0
      %303 = vmatpush.xpose.msra.mxu0 0.0
      %304 = vmatpush.xpose.msra.mxu0 0.0
      %305 = vmatpush.xpose.msra.mxu0 0.0
      %306 = vmatpush.xpose.msra.mxu0 0.0
      %307 = vmatpush.xpose.msra.mxu0 0.0
      %308 = vmatpush.xpose.msra.mxu0 %v291
      %309 = vmatmul.f32.gmra.mxu0 %v288
      %v310 = vpop.f32.mrf.mxu0
      %v311 = vadd.f32 0.0, %v310
      %312 = vdwg.mxu0
      %v314 = vsel %vm234, %v221, 0
      %v317 = vsel %vm234, %v229, 0
      %319 = vmatpush.xpose.msra.mxu0 0.0
      %320 = vmatpush.xpose.msra.mxu0 0.0
      %321 = vmatpush.xpose.msra.mxu0 0.0
      %322 = vmatpush.xpose.msra.mxu0 0.0
      %323 = vmatpush.xpose.msra.mxu0 0.0
      %324 = vmatpush.xpose.msra.mxu0 0.0
      %325 = vmatpush.xpose.msra.mxu0 0.0
      %326 = vmatpush.xpose.msra.mxu0 0.0
      %327 = vmatpush.xpose.msra.mxu0 0.0
      %328 = vmatpush.xpose.msra.mxu0 0.0
      %329 = vmatpush.xpose.msra.mxu0 0.0
      %330 = vmatpush.xpose.msra.mxu0 0.0
      %331 = vmatpush.xpose.msra.mxu0 0.0
      %332 = vmatpush.xpose.msra.mxu0 0.0
      %333 = vmatpush.xpose.msra.mxu0 0.0
      %334 = vmatpush.xpose.msra.mxu0 %v317
      %335 = vmatmul.f32.gmra.mxu0 %v314
      %v336 = vpop.f32.mrf.mxu0
      %v337 = vadd.f32 0.0, %v336
      %338 = vdwg.mxu0
      %v340 = vsel %vm234, %v222, 0
      %v343 = vsel %vm234, %v230, 0
      %345 = vmatpush.xpose.msra.mxu0 0.0
      %346 = vmatpush.xpose.msra.mxu0 0.0
      %347 = vmatpush.xpose.msra.mxu0 0.0
      %348 = vmatpush.xpose.msra.mxu0 0.0
      %349 = vmatpush.xpose.msra.mxu0 0.0
      %350 = vmatpush.xpose.msra.mxu0 0.0
      %351 = vmatpush.xpose.msra.mxu0 0.0
      %352 = vmatpush.xpose.msra.mxu0 0.0
      %353 = vmatpush.xpose.msra.mxu0 0.0
      %354 = vmatpush.xpose.msra.mxu0 0.0
      %355 = vmatpush.xpose.msra.mxu0 0.0
      %356 = vmatpush.xpose.msra.mxu0 0.0
      %357 = vmatpush.xpose.msra.mxu0 0.0
      %358 = vmatpush.xpose.msra.mxu0 0.0
      %359 = vmatpush.xpose.msra.mxu0 0.0
      %360 = vmatpush.xpose.msra.mxu0 %v343
      %361 = vmatmul.f32.gmra.mxu0 %v340
      %v362 = vpop.f32.mrf.mxu0
      %v363 = vadd.f32 0.0, %v362
      %364 = vdwg.mxu0
      %v366 = vsel %vm234, %v223, 0
      %v369 = vsel %vm234, %v231, 0
      %371 = vmatpush.xpose.msra.mxu0 0.0
      %372 = vmatpush.xpose.msra.mxu0 0.0
      %373 = vmatpush.xpose.msra.mxu0 0.0
      %374 = vmatpush.xpose.msra.mxu0 0.0
      %375 = vmatpush.xpose.msra.mxu0 0.0
      %376 = vmatpush.xpose.msra.mxu0 0.0
      %377 = vmatpush.xpose.msra.mxu0 0.0
      %378 = vmatpush.xpose.msra.mxu0 0.0
      %379 = vmatpush.xpose.msra.mxu0 0.0
      %380 = vmatpush.xpose.msra.mxu0 0.0
      %381 = vmatpush.xpose.msra.mxu0 0.0
      %382 = vmatpush.xpose.msra.mxu0 0.0
      %383 = vmatpush.xpose.msra.mxu0 0.0
      %384 = vmatpush.xpose.msra.mxu0 0.0
      %385 = vmatpush.xpose.msra.mxu0 0.0
      %386 = vmatpush.xpose.msra.mxu0 %v369
      %387 = vmatmul.f32.gmra.mxu0 %v366
      %v388 = vpop.f32.mrf.mxu0
      %v389 = vadd.f32 0.0, %v388
      %390 = vdwg.mxu0
      %v392 = vsel %vm234, %v224, 0
      %v395 = vsel %vm234, %v232, 0
      %397 = vmatpush.xpose.msra.mxu0 0.0
      %398 = vmatpush.xpose.msra.mxu0 0.0
      %399 = vmatpush.xpose.msra.mxu0 0.0
      %400 = vmatpush.xpose.msra.mxu0 0.0
      %401 = vmatpush.xpose.msra.mxu0 0.0
      %402 = vmatpush.xpose.msra.mxu0 0.0
      %403 = vmatpush.xpose.msra.mxu0 0.0
      %404 = vmatpush.xpose.msra.mxu0 0.0
      %405 = vmatpush.xpose.msra.mxu0 0.0
      %406 = vmatpush.xpose.msra.mxu0 0.0
      %407 = vmatpush.xpose.msra.mxu0 0.0
      %408 = vmatpush.xpose.msra.mxu0 0.0
      %409 = vmatpush.xpose.msra.mxu0 0.0
      %410 = vmatpush.xpose.msra.mxu0 0.0
      %411 = vmatpush.xpose.msra.mxu0 0.0
      %412 = vmatpush.xpose.msra.mxu0 %v395
      %413 = vmatmul.f32.gmra.mxu0 %v392
      %v414 = vpop.f32.mrf.mxu0
      %v415 = vadd.f32 0.0, %v414
      %416 = vdwg.mxu0
      %v418 = vsel %vm234, %v225, 0
      %v421 = vsel %vm234, %v233, 0
      %423 = vmatpush.xpose.msra.mxu0 0.0
      %424 = vmatpush.xpose.msra.mxu0 0.0
      %425 = vmatpush.xpose.msra.mxu0 0.0
      %426 = vmatpush.xpose.msra.mxu0 0.0
      %427 = vmatpush.xpose.msra.mxu0 0.0
      %428 = vmatpush.xpose.msra.mxu0 0.0
      %429 = vmatpush.xpose.msra.mxu0 0.0
      %430 = vmatpush.xpose.msra.mxu0 0.0
      %431 = vmatpush.xpose.msra.mxu0 0.0
      %432 = vmatpush.xpose.msra.mxu0 0.0
      %433 = vmatpush.xpose.msra.mxu0 0.0
      %434 = vmatpush.xpose.msra.mxu0 0.0
      %435 = vmatpush.xpose.msra.mxu0 0.0
      %436 = vmatpush.xpose.msra.mxu0 0.0
      %437 = vmatpush.xpose.msra.mxu0 0.0
      %438 = vmatpush.xpose.msra.mxu0 %v421
      %439 = vmatmul.f32.gmra.mxu0 %v418
      %v440 = vpop.f32.mrf.mxu0
      %v441 = vadd.f32 0.0, %v440
      %442 = vdwg.mxu0
      %v443 = vmul.f32 %v259, 0.35355338
      %v444 = vmul.f32 %v285, 0.35355338
      %v445 = vmul.f32 %v311, 0.35355338
      %v446 = vmul.f32 %v337, 0.35355338
      %v447 = vmul.f32 %v363, 0.35355338
      %v448 = vmul.f32 %v389, 0.35355338
      %v449 = vmul.f32 %v415, 0.35355338
      %v450 = vmul.f32 %v441, 0.35355338
      %vm451 = vcmask 36864
      %v452 = vsel %vm451, %v443, -inf
      %453 = vmax.xlane.f32.xlu0 %v452
      %v454 = vpop.xlane.xlu0 %453
      %v455 = vsel %vm451, %v444, -inf
      %456 = vmax.xlane.f32.xlu0 %v455
      %v457 = vpop.xlane.xlu0 %456
      %v458 = vsel %vm451, %v445, -inf
      %459 = vmax.xlane.f32.xlu0 %v458
      %v460 = vpop.xlane.xlu0 %459
      %v461 = vsel %vm451, %v446, -inf
      %462 = vmax.xlane.f32.xlu0 %v461
      %v463 = vpop.xlane.xlu0 %462
      %v464 = vsel %vm451, %v447, -inf
      %465 = vmax.xlane.f32.xlu0 %v464
      %v466 = vpop.xlane.xlu0 %465
      %v467 = vsel %vm451, %v448, -inf
      %468 = vmax.xlane.f32.xlu0 %v467
      %v469 = vpop.xlane.xlu0 %468
      %v470 = vsel %vm451, %v449, -inf
      %471 = vmax.xlane.f32.xlu0 %v470
      %v472 = vpop.xlane.xlu0 %471
      %v473 = vsel %vm451, %v450, -inf
      %474 = vmax.xlane.f32.xlu0 %v473
      %v475 = vpop.xlane.xlu0 %474
      %v476 = vsub.f32 %v443, %v454
      %v477 = vsub.f32 %v444, %v457
      %v478 = vsub.f32 %v445, %v460
      %v479 = vsub.f32 %v446, %v463
      %v480 = vsub.f32 %v447, %v466
      %v481 = vsub.f32 %v448, %v469
      %v482 = vsub.f32 %v449, %v472
      %v483 = vsub.f32 %v450, %v475
      %v484 = vmul.f32 %v476, 1.442695
      %v485 = vpow.pop %v484
      %v486 = vmul.f32 %v477, 1.442695
      %v487 = vpow.pop %v486
      %v488 = vmul.f32 %v478, 1.442695
      %v489 = vpow.pop %v488
      %v490 = vmul.f32 %v479, 1.442695
      %v491 = vpow.pop %v490
      %v492 = vmul.f32 %v480, 1.442695
      %v493 = vpow.pop %v492
      %v494 = vmul.f32 %v481, 1.442695
      %v495 = vpow.pop %v494
      %v496 = vmul.f32 %v482, 1.442695
      %v497 = vpow.pop %v496
      %v498 = vmul.f32 %v483, 1.442695
      %v499 = vpow.pop %v498
      %v500 = vsel %vm451, %v485, 0.0
      %501 = vadd.xlane.f32.xlu0 %v500
      %v502 = vpop.xlane.xlu0 %501
      %v503 = vsel %vm451, %v487, 0.0
      %504 = vadd.xlane.f32.xlu0 %v503
      %v505 = vpop.xlane.xlu0 %504
      %v506 = vsel %vm451, %v489, 0.0
      %507 = vadd.xlane.f32.xlu0 %v506
      %v508 = vpop.xlane.xlu0 %507
      %v509 = vsel %vm451, %v491, 0.0
      %510 = vadd.xlane.f32.xlu0 %v509
      %v511 = vpop.xlane.xlu0 %510
      %v512 = vsel %vm451, %v493, 0.0
      %513 = vadd.xlane.f32.xlu0 %v512
      %v514 = vpop.xlane.xlu0 %513
      %v515 = vsel %vm451, %v495, 0.0
      %516 = vadd.xlane.f32.xlu0 %v515
      %v517 = vpop.xlane.xlu0 %516
      %v518 = vsel %vm451, %v497, 0.0
      %519 = vadd.xlane.f32.xlu0 %v518
      %v520 = vpop.xlane.xlu0 %519
      %v521 = vsel %vm451, %v499, 0.0
      %522 = vadd.xlane.f32.xlu0 %v521
      %v523 = vpop.xlane.xlu0 %522
      %v524 = vrcp.pop %v502
      %v525 = vrcp.pop %v505
      %v526 = vrcp.pop %v508
      %v527 = vrcp.pop %v511
      %v528 = vrcp.pop %v514
      %v529 = vrcp.pop %v517
      %v530 = vrcp.pop %v520
      %v531 = vrcp.pop %v523
      %v532 = vmul.f32 %v485, %v524
      %v533 = vmul.f32 %v487, %v525
      %v534 = vmul.f32 %v489, %v526
      %v535 = vmul.f32 %v491, %v527
      %v536 = vmul.f32 %v493, %v528
      %v537 = vmul.f32 %v495, %v529
      %v538 = vmul.f32 %v497, %v530
      %v539 = vmul.f32 %v499, %v531
      %v540 = vld [vmem:[%s210] sm:$0x1f]
      %v541 = vld [vmem:[%s210 + $0x8] sm:$0x1f]
      %v542 = vld [vmem:[%s210 + $0x10] sm:$0x1f]
      %v543 = vld [vmem:[%s210 + $0x18] sm:$0x1f]
      %v544 = vld [vmem:[%s210 + $0x20] sm:$0x1f]
      %v545 = vld [vmem:[%s210 + $0x28] sm:$0x1f]
      %v546 = vld [vmem:[%s210 + $0x30] sm:$0x1f]
      %v547 = vld [vmem:[%s210 + $0x38] sm:$0x1f]
      %vm548 = vcmask 39936
      %v550 = vsel %vm548, %v532, 0
      %vm552 = vcmask 1044480
      %v554 = vsel %vm552, %v540, 0
      %556 = vmatpush.msra.mxu0 0.0
      %557 = vmatpush.msra.mxu0 0.0
      %558 = vmatpush.msra.mxu0 0.0
      %559 = vmatpush.msra.mxu0 0.0
      %560 = vmatpush.msra.mxu0 0.0
      %561 = vmatpush.msra.mxu0 0.0
      %562 = vmatpush.msra.mxu0 0.0
      %563 = vmatpush.msra.mxu0 0.0
      %564 = vmatpush.msra.mxu0 0.0
      %565 = vmatpush.msra.mxu0 0.0
      %566 = vmatpush.msra.mxu0 0.0
      %567 = vmatpush.msra.mxu0 0.0
      %568 = vmatpush.msra.mxu0 0.0
      %569 = vmatpush.msra.mxu0 0.0
      %570 = vmatpush.msra.mxu0 0.0
      %571 = vmatpush.msra.mxu0 %v554
      %572 = vmatmul.f32.gmra.mxu0 %v550
      %v573 = vpop.f32.mrf.mxu0
      %v574 = vadd.f32 0.0, %v573
      %575 = vdwg.mxu0
      %v577 = vsel %vm548, %v533, 0
      %v580 = vsel %vm552, %v541, 0
      %582 = vmatpush.msra.mxu0 0.0
      %583 = vmatpush.msra.mxu0 0.0
      %584 = vmatpush.msra.mxu0 0.0
      %585 = vmatpush.msra.mxu0 0.0
      %586 = vmatpush.msra.mxu0 0.0
      %587 = vmatpush.msra.mxu0 0.0
      %588 = vmatpush.msra.mxu0 0.0
      %589 = vmatpush.msra.mxu0 0.0
      %590 = vmatpush.msra.mxu0 0.0
      %591 = vmatpush.msra.mxu0 0.0
      %592 = vmatpush.msra.mxu0 0.0
      %593 = vmatpush.msra.mxu0 0.0
      %594 = vmatpush.msra.mxu0 0.0
      %595 = vmatpush.msra.mxu0 0.0
      %596 = vmatpush.msra.mxu0 0.0
      %597 = vmatpush.msra.mxu0 %v580
      %598 = vmatmul.f32.gmra.mxu0 %v577
      %v599 = vpop.f32.mrf.mxu0
      %v600 = vadd.f32 0.0, %v599
      %601 = vdwg.mxu0
      %v603 = vsel %vm548, %v534, 0
      %v606 = vsel %vm552, %v542, 0
      %608 = vmatpush.msra.mxu0 0.0
      %609 = vmatpush.msra.mxu0 0.0
      %610 = vmatpush.msra.mxu0 0.0
      %611 = vmatpush.msra.mxu0 0.0
      %612 = vmatpush.msra.mxu0 0.0
      %613 = vmatpush.msra.mxu0 0.0
      %614 = vmatpush.msra.mxu0 0.0
      %615 = vmatpush.msra.mxu0 0.0
      %616 = vmatpush.msra.mxu0 0.0
      %617 = vmatpush.msra.mxu0 0.0
      %618 = vmatpush.msra.mxu0 0.0
      %619 = vmatpush.msra.mxu0 0.0
      %620 = vmatpush.msra.mxu0 0.0
      %621 = vmatpush.msra.mxu0 0.0
      %622 = vmatpush.msra.mxu0 0.0
      %623 = vmatpush.msra.mxu0 %v606
      %624 = vmatmul.f32.gmra.mxu0 %v603
      %v625 = vpop.f32.mrf.mxu0
      %v626 = vadd.f32 0.0, %v625
      %627 = vdwg.mxu0
      %v629 = vsel %vm548, %v535, 0
      %v632 = vsel %vm552, %v543, 0
      %634 = vmatpush.msra.mxu0 0.0
      %635 = vmatpush.msra.mxu0 0.0
      %636 = vmatpush.msra.mxu0 0.0
      %637 = vmatpush.msra.mxu0 0.0
      %638 = vmatpush.msra.mxu0 0.0
      %639 = vmatpush.msra.mxu0 0.0
      %640 = vmatpush.msra.mxu0 0.0
      %641 = vmatpush.msra.mxu0 0.0
      %642 = vmatpush.msra.mxu0 0.0
      %643 = vmatpush.msra.mxu0 0.0
      %644 = vmatpush.msra.mxu0 0.0
      %645 = vmatpush.msra.mxu0 0.0
      %646 = vmatpush.msra.mxu0 0.0
      %647 = vmatpush.msra.mxu0 0.0
      %648 = vmatpush.msra.mxu0 0.0
      %649 = vmatpush.msra.mxu0 %v632
      %650 = vmatmul.f32.gmra.mxu0 %v629
      %v651 = vpop.f32.mrf.mxu0
      %v652 = vadd.f32 0.0, %v651
      %653 = vdwg.mxu0
      %v655 = vsel %vm548, %v536, 0
      %v658 = vsel %vm552, %v544, 0
      %660 = vmatpush.msra.mxu0 0.0
      %661 = vmatpush.msra.mxu0 0.0
      %662 = vmatpush.msra.mxu0 0.0
      %663 = vmatpush.msra.mxu0 0.0
      %664 = vmatpush.msra.mxu0 0.0
      %665 = vmatpush.msra.mxu0 0.0
      %666 = vmatpush.msra.mxu0 0.0
      %667 = vmatpush.msra.mxu0 0.0
      %668 = vmatpush.msra.mxu0 0.0
      %669 = vmatpush.msra.mxu0 0.0
      %670 = vmatpush.msra.mxu0 0.0
      %671 = vmatpush.msra.mxu0 0.0
      %672 = vmatpush.msra.mxu0 0.0
      %673 = vmatpush.msra.mxu0 0.0
      %674 = vmatpush.msra.mxu0 0.0
      %675 = vmatpush.msra.mxu0 %v658
      %676 = vmatmul.f32.gmra.mxu0 %v655
      %v677 = vpop.f32.mrf.mxu0
      %v678 = vadd.f32 0.0, %v677
      %679 = vdwg.mxu0
      %v681 = vsel %vm548, %v537, 0
      %v684 = vsel %vm552, %v545, 0
      %686 = vmatpush.msra.mxu0 0.0
      %687 = vmatpush.msra.mxu0 0.0
      %688 = vmatpush.msra.mxu0 0.0
      %689 = vmatpush.msra.mxu0 0.0
      %690 = vmatpush.msra.mxu0 0.0
      %691 = vmatpush.msra.mxu0 0.0
      %692 = vmatpush.msra.mxu0 0.0
      %693 = vmatpush.msra.mxu0 0.0
      %694 = vmatpush.msra.mxu0 0.0
      %695 = vmatpush.msra.mxu0 0.0
      %696 = vmatpush.msra.mxu0 0.0
      %697 = vmatpush.msra.mxu0 0.0
      %698 = vmatpush.msra.mxu0 0.0
      %699 = vmatpush.msra.mxu0 0.0
      %700 = vmatpush.msra.mxu0 0.0
      %701 = vmatpush.msra.mxu0 %v684
      %702 = vmatmul.f32.gmra.mxu0 %v681
      %v703 = vpop.f32.mrf.mxu0
      %v704 = vadd.f32 0.0, %v703
      %705 = vdwg.mxu0
      %v707 = vsel %vm548, %v538, 0
      %v710 = vsel %vm552, %v546, 0
      %712 = vmatpush.msra.mxu0 0.0
      %713 = vmatpush.msra.mxu0 0.0
      %714 = vmatpush.msra.mxu0 0.0
      %715 = vmatpush.msra.mxu0 0.0
      %716 = vmatpush.msra.mxu0 0.0
      %717 = vmatpush.msra.mxu0 0.0
      %718 = vmatpush.msra.mxu0 0.0
      %719 = vmatpush.msra.mxu0 0.0
      %720 = vmatpush.msra.mxu0 0.0
      %721 = vmatpush.msra.mxu0 0.0
      %722 = vmatpush.msra.mxu0 0.0
      %723 = vmatpush.msra.mxu0 0.0
      %724 = vmatpush.msra.mxu0 0.0
      %725 = vmatpush.msra.mxu0 0.0
      %726 = vmatpush.msra.mxu0 0.0
      %727 = vmatpush.msra.mxu0 %v710
      %728 = vmatmul.f32.gmra.mxu0 %v707
      %v729 = vpop.f32.mrf.mxu0
      %v730 = vadd.f32 0.0, %v729
      %731 = vdwg.mxu0
      %v733 = vsel %vm548, %v539, 0
      %v736 = vsel %vm552, %v547, 0
      %738 = vmatpush.msra.mxu0 0.0
      %739 = vmatpush.msra.mxu0 0.0
      %740 = vmatpush.msra.mxu0 0.0
      %741 = vmatpush.msra.mxu0 0.0
      %742 = vmatpush.msra.mxu0 0.0
      %743 = vmatpush.msra.mxu0 0.0
      %744 = vmatpush.msra.mxu0 0.0
      %745 = vmatpush.msra.mxu0 0.0
      %746 = vmatpush.msra.mxu0 0.0
      %747 = vmatpush.msra.mxu0 0.0
      %748 = vmatpush.msra.mxu0 0.0
      %749 = vmatpush.msra.mxu0 0.0
      %750 = vmatpush.msra.mxu0 0.0
      %751 = vmatpush.msra.mxu0 0.0
      %752 = vmatpush.msra.mxu0 0.0
      %753 = vmatpush.msra.mxu0 %v736
      %754 = vmatmul.f32.gmra.mxu0 %v733
      %v755 = vpop.f32.mrf.mxu0
      %v756 = vadd.f32 0.0, %v755
      %757 = vdwg.mxu0
      %vm758 = vcmask 61440
      %759 = vst.msk [vmem:[%s216] sm:$0x1f] %vm758, %v574
      %760 = vst.msk [vmem:[%s216 + $0x8] sm:$0x1f] %vm758, %v600
      %761 = vst.msk [vmem:[%s216 + $0x10] sm:$0x1f] %vm758, %v626
      %762 = vst.msk [vmem:[%s216 + $0x18] sm:$0x1f] %vm758, %v652
      %763 = vst.msk [vmem:[%s216 + $0x20] sm:$0x1f] %vm758, %v678
      %764 = vst.msk [vmem:[%s216 + $0x28] sm:$0x1f] %vm758, %v704
      %765 = vst.msk [vmem:[%s216 + $0x30] sm:$0x1f] %vm758, %v730
      %766 = vst.msk [vmem:[%s216 + $0x38] sm:$0x1f] %vm758, %v756
      %s767 = smul.u32 8, %s14
      %p768 = scmp.lt.s32.totalorder %s767, 15
      %s769 = scalar_select %p768, %s767, 15
      %s770 = smul.addr %s769, 8
      %s771 = scalar_lea.vmem %s3, %s770
      // Predicated region
      $region33: #{vivit_forward.10} parent=31 // pred_check
        %p772 = pneg %p110
      $region34: #{vivit_forward.10} parent=31 // pred_check_branch
        %774 = sbr.rel (%p772) target = $region36
      $region35: #{vivit_forward.10} parent=31 // pred_region
        %s775 = smul.u32 8, %s14
      $region36: #{vivit_forward.10} parent=31 // pred_fallthru
        _
    $region32: #{vivit_forward.10} parent=5 // pred_fallthru
      _
    %p776 = scmp.le.s32.totalorder 2, %s9
    // Predicated region
    $region37: #{vivit_forward.10} parent=5 // pred_check
      %p777 = pneg %p776
    $region38: #{vivit_forward.10} parent=5 // pred_check_branch
      %779 = sbr.rel (%p777) target = $region40
    $region39: #{vivit_forward.10} parent=5 // pred_region
      %s780 = ssub.s32 %s9, 2
      // Predicated region
      $region41: #{vivit_forward.10} parent=39 // pred_check
        %p781 = pneg %p116
      $region42: #{vivit_forward.10} parent=39 // pred_check_branch
        %783 = sbr.rel (%p781) target = $region44
      $region43: #{vivit_forward.10} parent=39 // pred_region
        %s784 = smul.u32 8, %s15
        %p785 = scmp.lt.s32.totalorder %s784, 15
        %s786 = scalar_select %p785, %s784, 15
        %s787 = smul.addr %s786, 8
        %s788 = scalar_lea.vmem %s3, %s787
      $region44: #{vivit_forward.10} parent=39 // pred_fallthru
        _
    $region40: #{vivit_forward.10} parent=5 // pred_fallthru
      _
  $region6: #{vivit_forward.10} parent=0 // loop_footer
    %s13 = sadd.s32 1, %s9
  $region7: #{vivit_forward.10} parent=0 // loop_footer_branch
    %8 = sbr.rel target = $region3
  $region8: #{vivit_forward.10} parent=0 // loop_exit
    _

// kernel: vivit_forward.11
$region0: #{vivit_forward.11}
  #allocation0 [shape = 'u32[]', space=smem, size = 0x4, offset = 0x4, fixed_abs, tag = 'smem constant byte address 0x4 - core index']
  #allocation1 [shape = 'u32[72,128]{1,0:T(1,128)}', space=vmem, size = 0x9000, scoped, tag = 'internal scratch']
  %s0 = inlined_call_operand.vmem [shape: f32[20,32], index: 0, kind: input, shape index: {}]
  %s1 = inlined_call_operand.vmem [shape: f32[20,32], index: 1, kind: input, shape index: {}]
  %s2 = inlined_call_operand.vmem [shape: f32[32,32], index: 2, kind: input, shape index: {}]
  %s3 = inlined_call_operand.vmem [shape: f32[1,32], index: 3, kind: input, shape index: {}]
  %s4 = inlined_call_operand.vmem [shape: f32[1,32], index: 4, kind: input, shape index: {}]
  %s5 = inlined_call_operand.vmem [shape: f32[1,32], index: 5, kind: input, shape index: {}]
  %s6 = inlined_call_operand.vmem [shape: f32[32,64], index: 6, kind: input, shape index: {}]
  %s7 = inlined_call_operand.vmem [shape: f32[1,64], index: 7, kind: input, shape index: {}]
  %s8 = inlined_call_operand.vmem [shape: f32[64,32], index: 8, kind: input, shape index: {}]
  %s9 = inlined_call_operand.vmem [shape: f32[1,32], index: 9, kind: input, shape index: {}]
  %s10 = inlined_call_operand.vmem [shape: f32[20,32], index: 10, kind: output, shape index: {}]
  %s11 = sld [smem:[#allocation0]]
  $region50: #{vivit_forward.11} parent=0
    _
  %s13 = ssub.s32 1, %s11
  %s14 = scalar_select 0, %s13, %s11
  // Predicated region
  $region2: #{vivit_forward.11} parent=0 // pred_check
    _
  $region3: #{vivit_forward.11} parent=0 // pred_check_branch
    %16 = sbr.rel (0) target = $region5
  $region4: #{vivit_forward.11} parent=0 // pred_region
    _
  $region5: #{vivit_forward.11} parent=0 // pred_fallthru
    _
  // Predicated region
  $region6: #{vivit_forward.11} parent=0 // pred_check
    _
  $region7: #{vivit_forward.11} parent=0 // pred_check_branch
    %18 = sbr.rel (0) target = $region9
  $region8: #{vivit_forward.11} parent=0 // pred_region
    _
  $region9: #{vivit_forward.11} parent=0 // pred_fallthru
    _
  // Predicated region
  $region10: #{vivit_forward.11} parent=0 // pred_check
    _
  $region11: #{vivit_forward.11} parent=0 // pred_check_branch
    %20 = sbr.rel (0) target = $region13
  $region12: #{vivit_forward.11} parent=0 // pred_region
    _
  $region13: #{vivit_forward.11} parent=0 // pred_fallthru
    _
  // Predicated region
  $region14: #{vivit_forward.11} parent=0 // pred_check
    _
  $region15: #{vivit_forward.11} parent=0 // pred_check_branch
    %22 = sbr.rel (0) target = $region17
  $region16: #{vivit_forward.11} parent=0 // pred_region
    _
  $region17: #{vivit_forward.11} parent=0 // pred_fallthru
    _
  // Predicated region
  $region18: #{vivit_forward.11} parent=0 // pred_check
    _
  $region19: #{vivit_forward.11} parent=0 // pred_check_branch
    %24 = sbr.rel (0) target = $region21
  $region20: #{vivit_forward.11} parent=0 // pred_region
    _
  $region21: #{vivit_forward.11} parent=0 // pred_fallthru
    _
  // Predicated region
  $region22: #{vivit_forward.11} parent=0 // pred_check
    _
  $region23: #{vivit_forward.11} parent=0 // pred_check_branch
    %26 = sbr.rel (0) target = $region25
  $region24: #{vivit_forward.11} parent=0 // pred_region
    _
  $region25: #{vivit_forward.11} parent=0 // pred_fallthru
    _
  // Predicated region
  $region26: #{vivit_forward.11} parent=0 // pred_check
    _
  $region27: #{vivit_forward.11} parent=0 // pred_check_branch
    %28 = sbr.rel (0) target = $region29
  $region28: #{vivit_forward.11} parent=0 // pred_region
    _
  $region29: #{vivit_forward.11} parent=0 // pred_fallthru
    _
  // Predicated region
  $region30: #{vivit_forward.11} parent=0 // pred_check
    _
  $region31: #{vivit_forward.11} parent=0 // pred_check_branch
    %30 = sbr.rel (0) target = $region33
  $region32: #{vivit_forward.11} parent=0 // pred_region
    _
  $region33: #{vivit_forward.11} parent=0 // pred_fallthru
    _
  // Predicated region
  $region34: #{vivit_forward.11} parent=0 // pred_check
    _
  $region35: #{vivit_forward.11} parent=0 // pred_check_branch
    %32 = sbr.rel (0) target = $region37
  $region36: #{vivit_forward.11} parent=0 // pred_region
    _
  $region37: #{vivit_forward.11} parent=0 // pred_fallthru
    _
  // Predicated region
  $region38: #{vivit_forward.11} parent=0 // pred_check
    _
  $region39: #{vivit_forward.11} parent=0 // pred_check_branch
    %34 = sbr.rel (0) target = $region41
  $region40: #{vivit_forward.11} parent=0 // pred_region
    _
  $region41: #{vivit_forward.11} parent=0 // pred_fallthru
    _
  %v35 = vld [vmem:[%s0] sm:$0xff]
  %v36 = vld [vmem:[%s0 + $0x8] sm:$0xff]
  %v37 = vld [vmem:[%s0 + $0x10] sm:$0xf]
  %v38 = vld [vmem:[%s1] sm:$0xff]
  %v39 = vld [vmem:[%s1 + $0x8] sm:$0xff]
  %v40 = vld [vmem:[%s1 + $0x10] sm:$0xf]
  %v41 = vld [vmem:[%s2] sm:$0xff]
  %v42 = vld [vmem:[%s2 + $0x8] sm:$0xff]
  %v43 = vld [vmem:[%s2 + $0x10] sm:$0xff]
  %v44 = vld [vmem:[%s2 + $0x18] sm:$0xff]
  %vm45 = vcmask 261120
  %v47 = vsel %vm45, %v38, 0
  %v50 = vsel %vm45, %v39, 0
  %v53 = vsel %vm45, %v40, 0
  %55 = vmatpush.msra.mxu0 0.0
  %56 = vmatpush.msra.mxu0 0.0
  %57 = vmatpush.msra.mxu0 0.0
  %58 = vmatpush.msra.mxu0 0.0
  %59 = vmatpush.msra.mxu0 0.0
  %60 = vmatpush.msra.mxu0 0.0
  %61 = vmatpush.msra.mxu0 0.0
  %62 = vmatpush.msra.mxu0 0.0
  %63 = vmatpush.msra.mxu0 0.0
  %64 = vmatpush.msra.mxu0 0.0
  %65 = vmatpush.msra.mxu0 0.0
  %66 = vmatpush.msra.mxu0 0.0
  %67 = vmatpush.msra.mxu0 %v44
  %68 = vmatpush.msra.mxu0 %v43
  %69 = vmatpush.msra.mxu0 %v42
  %70 = vmatpush.msra.mxu0 %v41
  %71 = vmatmul.f32.gmra.mxu0 %v47
  %v72 = vpop.f32.mrf.mxu0
  %v73 = vadd.f32 0.0, %v72
  %74 = vmatmul.f32.gmra.mxu0 %v50
  %v75 = vpop.f32.mrf.mxu0
  %v76 = vadd.f32 0.0, %v75
  %77 = vmatmul.f32.gmra.mxu0 %v53
  %v78 = vpop.f32.mrf.mxu0
  %v79 = vadd.f32 0.0, %v78
  %80 = vdwg.mxu0
  %v81 = vadd.f32 %v35, %v73
  %v82 = vadd.f32 %v36, %v76
  %v83 = vadd.f32 %v37, %v79
  %v84 = vld [vmem:[%s3] sm:$0x1]
  %v86 = vperm.slane %v84, 0
  %v88 = vadd.f32 %v81, %v86
  %v89 = vadd.f32 %v82, %v86
  %v90 = vadd.f32 %v83, %v86
  %v91 = vld [vmem:[%s4] sm:$0x1]
  %v92 = vld [vmem:[%s5] sm:$0x1]
  %v93 = vsel %vm45, %v88, 0.0
  %94 = vadd.xlane.f32.xlu0 %v93
  %v95 = vpop.xlane.xlu0 %94
  %v96 = vsel %vm45, %v89, 0.0
  %97 = vadd.xlane.f32.xlu0 %v96
  %v98 = vpop.xlane.xlu0 %97
  %vm99 = vcmask 257024
  %v100 = vsel %vm99, %v90, 0.0
  %101 = vadd.xlane.f32.xlu0 %v100
  %v102 = vpop.xlane.xlu0 %101
  %v103 = vrcp.pop 32.0
  %v104 = vmul.f32 32.0, %v103
  %v105 = vsub.f32 1.0, %v104
  %v106 = vmul.f32 %v103, %v105
  %v107 = vadd.f32 %v103, %v106
  %vm108 = vweird.f32 %v103
  %v109 = vsel %vm108, %v103, %v107
  %v110 = vmul.f32 %v95, %v109
  %v111 = vmul.f32 %v98, %v109
  %v112 = vmul.f32 %v102, %v109
  %v113 = vsub.f32 %v88, %v110
  %v114 = vsub.f32 %v89, %v111
  %v115 = vsub.f32 %v90, %v112
  %v116 = vmul.f32 %v113, %v113
  %v117 = vmul.f32 %v114, %v114
  %v118 = vmul.f32 %v115, %v115
  %v119 = vsel %vm45, %v116, 0.0
  %120 = vadd.xlane.f32.xlu0 %v119
  %v121 = vpop.xlane.xlu0 %120
  %v122 = vsel %vm45, %v117, 0.0
  %123 = vadd.xlane.f32.xlu0 %v122
  %v124 = vpop.xlane.xlu0 %123
  %v125 = vsel %vm99, %v118, 0.0
  %126 = vadd.xlane.f32.xlu0 %v125
  %v127 = vpop.xlane.xlu0 %126
  %v128 = vmul.f32 %v121, %v109
  %v129 = vmul.f32 %v124, %v109
  %v130 = vmul.f32 %v127, %v109
  %v131 = vadd.f32 %v128, 1e-05
  %v132 = vadd.f32 %v129, 1e-05
  %v133 = vadd.f32 %v130, 1e-05
  %v134 = vrsqrt.pop %v131
  %v135 = vmul.f32 %v134, %v131
  %v136 = vmul.f32 %v135, %v134
  %v137 = vmul.f32 0.5, %v136
  %v138 = vsub.f32 1.5, %v137
  %v139 = vmul.f32 %v134, %v138
  %vm140 = vweird.f32 %v131
  %vm141 = vweird.f32 %v134
  %vm142 = vmor %vm140, %vm141
  %v143 = vsel %vm142, %v134, %v139
  %v144 = vrsqrt.pop %v132
  %v145 = vmul.f32 %v144, %v132
  %v146 = vmul.f32 %v145, %v144
  %v147 = vmul.f32 0.5, %v146
  %v148 = vsub.f32 1.5, %v147
  %v149 = vmul.f32 %v144, %v148
  %vm150 = vweird.f32 %v132
  %vm151 = vweird.f32 %v144
  %vm152 = vmor %vm150, %vm151
  %v153 = vsel %vm152, %v144, %v149
  %v154 = vrsqrt.pop %v133
  %v155 = vmul.f32 %v154, %v133
  %v156 = vmul.f32 %v155, %v154
  %v157 = vmul.f32 0.5, %v156
  %v158 = vsub.f32 1.5, %v157
  %v159 = vmul.f32 %v154, %v158
  %vm160 = vweird.f32 %v133
  %vm161 = vweird.f32 %v154
  %vm162 = vmor %vm160, %vm161
  %v163 = vsel %vm162, %v154, %v159
  %v164 = vmul.f32 %v113, %v143
  %v165 = vmul.f32 %v114, %v153
  %v166 = vmul.f32 %v115, %v163
  %v168 = vperm.slane %v91, 0
  %v170 = vmul.f32 %v164, %v168
  %v171 = vmul.f32 %v165, %v168
  %v172 = vmul.f32 %v166, %v168
  %v174 = vperm.slane %v92, 0
  %v176 = vadd.f32 %v170, %v174
  %v177 = vadd.f32 %v171, %v174
  %v178 = vadd.f32 %v172, %v174
  %v179 = vld [vmem:[%s6] sm:$0xff]
  %v180 = vld [vmem:[%s6 + $0x8] sm:$0xff]
  %v181 = vld [vmem:[%s6 + $0x10] sm:$0xff]
  %v182 = vld [vmem:[%s6 + $0x18] sm:$0xff]
  %v183 = vld [vmem:[%s7] sm:$0x1]
  %v185 = vperm.slane %v183, 0
  %v188 = vsel %vm45, %v176, 0
  %v191 = vsel %vm45, %v177, 0
  %v194 = vsel %vm45, %v178, 0
  %196 = vmatpush.msra.mxu0 0.0
  %197 = vmatpush.msra.mxu0 0.0
  %198 = vmatpush.msra.mxu0 0.0
  %199 = vmatpush.msra.mxu0 0.0
  %200 = vmatpush.msra.mxu0 0.0
  %201 = vmatpush.msra.mxu0 0.0
  %202 = vmatpush.msra.mxu0 0.0
  %203 = vmatpush.msra.mxu0 0.0
  %204 = vmatpush.msra.mxu0 0.0
  %205 = vmatpush.msra.mxu0 0.0
  %206 = vmatpush.msra.mxu0 0.0
  %207 = vmatpush.msra.mxu0 0.0
  %208 = vmatpush.msra.mxu0 %v182
  %209 = vmatpush.msra.mxu0 %v181
  %210 = vmatpush.msra.mxu0 %v180
  %211 = vmatpush.msra.mxu0 %v179
  %212 = vmatmul.f32.gmra.mxu0 %v188
  %v213 = vpop.f32.mrf.mxu0
  %v214 = vadd.f32 %v185, %v213
  %215 = vmatmul.f32.gmra.mxu0 %v191
  %v216 = vpop.f32.mrf.mxu0
  %v217 = vadd.f32 %v185, %v216
  %218 = vmatmul.f32.gmra.mxu0 %v194
  %v219 = vpop.f32.mrf.mxu0
  %v220 = vadd.f32 %v185, %v219
  %221 = vdwg.mxu0
  %v222 = vmul.f32 %v214, 0.5
  %v223 = vmul.f32 %v217, 0.5
  %v224 = vmul.f32 %v220, 0.5
  %v225 = vmul.f32 %v214, 0.044715
  %v226 = vmul.f32 %v217, 0.044715
  %v227 = vmul.f32 %v220, 0.044715
  %v228 = vmul.f32 %v225, %v214
  %v229 = vmul.f32 %v226, %v217
  %v230 = vmul.f32 %v227, %v220
  %v231 = vmul.f32 %v228, %v214
  %v232 = vmul.f32 %v229, %v217
  %v233 = vmul.f32 %v230, %v220
  %v234 = vadd.f32 %v214, %v231
  %v235 = vadd.f32 %v217, %v232
  %v236 = vadd.f32 %v220, %v233
  %v237 = vmul.f32 %v234, 0.7978846
  %v238 = vmul.f32 %v235, 0.7978846
  %v239 = vmul.f32 %v236, 0.7978846
  %v240 = vtanh.pop %v237
  %v241 = vtanh.pop %v238
  %v242 = vtanh.pop %v239
  %v243 = vadd.f32 %v240, 1.0
  %v244 = vadd.f32 %v241, 1.0
  %v245 = vadd.f32 %v242, 1.0
  %v246 = vmul.f32 %v222, %v243
  %v247 = vmul.f32 %v223, %v244
  %v248 = vmul.f32 %v224, %v245
  %v249 = vld [vmem:[%s8] sm:$0xff]
  %v250 = vld [vmem:[%s8 + $0x8] sm:$0xff]
  %v251 = vld [vmem:[%s8 + $0x10] sm:$0xff]
  %v252 = vld [vmem:[%s8 + $0x18] sm:$0xff]
  %v253 = vld [vmem:[%s8 + $0x20] sm:$0xff]
  %v254 = vld [vmem:[%s8 + $0x28] sm:$0xff]
  %v255 = vld [vmem:[%s8 + $0x30] sm:$0xff]
  %v256 = vld [vmem:[%s8 + $0x38] sm:$0xff]
  %v257 = vld [vmem:[%s9] sm:$0x1]
  %v259 = vperm.slane %v257, 0
  %vm261 = vcmask 523264
  %v263 = vsel %vm261, %v246, 0
  %v266 = vsel %vm261, %v247, 0
  %v269 = vsel %vm261, %v248, 0
  %271 = vmatpush.msra.mxu0 0.0
  %272 = vmatpush.msra.mxu0 0.0
  %273 = vmatpush.msra.mxu0 0.0
  %274 = vmatpush.msra.mxu0 0.0
  %275 = vmatpush.msra.mxu0 0.0
  %276 = vmatpush.msra.mxu0 0.0
  %277 = vmatpush.msra.mxu0 0.0
  %278 = vmatpush.msra.mxu0 0.0
  %279 = vmatpush.msra.mxu0 %v256
  %280 = vmatpush.msra.mxu0 %v255
  %281 = vmatpush.msra.mxu0 %v254
  %282 = vmatpush.msra.mxu0 %v253
  %283 = vmatpush.msra.mxu0 %v252
  %284 = vmatpush.msra.mxu0 %v251
  %285 = vmatpush.msra.mxu0 %v250
  %286 = vmatpush.msra.mxu0 %v249
  %287 = vmatmul.f32.gmra.mxu0 %v263
  %v288 = vpop.f32.mrf.mxu0
  %v289 = vadd.f32 %v259, %v288
  %290 = vmatmul.f32.gmra.mxu0 %v266
  %v291 = vpop.f32.mrf.mxu0
  %v292 = vadd.f32 %v259, %v291
  %293 = vmatmul.f32.gmra.mxu0 %v269
  %v294 = vpop.f32.mrf.mxu0
  %v295 = vadd.f32 %v259, %v294
  %296 = vdwg.mxu0
  %v297 = vadd.f32 %v88, %v289
  %v298 = vadd.f32 %v89, %v292
  %v299 = vadd.f32 %v90, %v295
  %300 = vst.msk [vmem:[%s10] sm:$0xff] %vm45, %v297
  %301 = vst.msk [vmem:[%s10 + $0x8] sm:$0xff] %vm45, %v298
  %302 = vst.msk [vmem:[%s10 + $0x10] sm:$0xf] %vm99, %v299
  // Predicated region
  $region42: #{vivit_forward.11} parent=0 // pred_check
    _
  $region43: #{vivit_forward.11} parent=0 // pred_check_branch
    %304 = sbr.rel (0) target = $region45
  $region44: #{vivit_forward.11} parent=0 // pred_region
    _
  $region45: #{vivit_forward.11} parent=0 // pred_fallthru
    _
  // Predicated region
  $region46: #{vivit_forward.11} parent=0 // pred_check
    _
  $region47: #{vivit_forward.11} parent=0 // pred_check_branch
    %306 = sbr.rel (0) target = $region49
  $region48: #{vivit_forward.11} parent=0 // pred_region
    _
  $region49: #{vivit_forward.11} parent=0 // pred_fallthru
    _

// kernel: vivit_forward.12
$region0: #{vivit_forward.12}
  #allocation0 [shape = 'u32[]', space=smem, size = 0x4, offset = 0x4, fixed_abs, tag = 'smem constant byte address 0x4 - core index']
  #allocation1 [shape = 'u32[72,128]{1,0:T(1,128)}', space=vmem, size = 0x9000, scoped, tag = 'internal scratch']
  %s0 = inlined_call_operand.vmem [shape: f32[6,32], index: 0, kind: input, shape index: {}]
  %s1 = inlined_call_operand.vmem [shape: f32[1,32], index: 1, kind: input, shape index: {}]
  %s2 = inlined_call_operand.vmem [shape: f32[1,32], index: 2, kind: input, shape index: {}]
  %s3 = inlined_call_operand.vmem [shape: f32[32,96], index: 3, kind: input, shape index: {}]
  %s4 = inlined_call_operand.vmem [shape: f32[6,96], index: 4, kind: output, shape index: {}]
  %s5 = sld [smem:[#allocation0]]
  $region26: #{vivit_forward.12} parent=0
    _
  %s7 = ssub.s32 1, %s5
  %s8 = scalar_select 0, %s7, %s5
  // Predicated region
  $region2: #{vivit_forward.12} parent=0 // pred_check
    _
  $region3: #{vivit_forward.12} parent=0 // pred_check_branch
    %10 = sbr.rel (0) target = $region5
  $region4: #{vivit_forward.12} parent=0 // pred_region
    _
  $region5: #{vivit_forward.12} parent=0 // pred_fallthru
    _
  // Predicated region
  $region6: #{vivit_forward.12} parent=0 // pred_check
    _
  $region7: #{vivit_forward.12} parent=0 // pred_check_branch
    %12 = sbr.rel (0) target = $region9
  $region8: #{vivit_forward.12} parent=0 // pred_region
    _
  $region9: #{vivit_forward.12} parent=0 // pred_fallthru
    _
  // Predicated region
  $region10: #{vivit_forward.12} parent=0 // pred_check
    _
  $region11: #{vivit_forward.12} parent=0 // pred_check_branch
    %14 = sbr.rel (0) target = $region13
  $region12: #{vivit_forward.12} parent=0 // pred_region
    _
  $region13: #{vivit_forward.12} parent=0 // pred_fallthru
    _
  // Predicated region
  $region14: #{vivit_forward.12} parent=0 // pred_check
    _
  $region15: #{vivit_forward.12} parent=0 // pred_check_branch
    %16 = sbr.rel (0) target = $region17
  $region16: #{vivit_forward.12} parent=0 // pred_region
    _
  $region17: #{vivit_forward.12} parent=0 // pred_fallthru
    _
  %v17 = vld [vmem:[%s0] sm:$0x3f]
  %v18 = vld [vmem:[%s1] sm:$0x1]
  %v19 = vld [vmem:[%s2] sm:$0x1]
  %vm20 = vcmask 259072
  %v21 = vsel %vm20, %v17, 0.0
  %22 = vadd.xlane.f32.xlu0 %v21
  %v23 = vpop.xlane.xlu0 %22
  %v24 = vrcp.pop 32.0
  %v25 = vmul.f32 32.0, %v24
  %v26 = vsub.f32 1.0, %v25
  %v27 = vmul.f32 %v24, %v26
  %v28 = vadd.f32 %v24, %v27
  %vm29 = vweird.f32 %v24
  %v30 = vsel %vm29, %v24, %v28
  %v31 = vmul.f32 %v23, %v30
  %v32 = vsub.f32 %v17, %v31
  %v33 = vmul.f32 %v32, %v32
  %v34 = vsel %vm20, %v33, 0.0
  %35 = vadd.xlane.f32.xlu0 %v34
  %v36 = vpop.xlane.xlu0 %35
  %v37 = vmul.f32 %v36, %v30
  %v38 = vadd.f32 %v37, 1e-05
  %v39 = vrsqrt.pop %v38
  %v40 = vmul.f32 %v39, %v38
  %v41 = vmul.f32 %v40, %v39
  %v42 = vmul.f32 0.5, %v41
  %v43 = vsub.f32 1.5, %v42
  %v44 = vmul.f32 %v39, %v43
  %vm45 = vweird.f32 %v38
  %vm46 = vweird.f32 %v39
  %vm47 = vmor %vm45, %vm46
  %v48 = vsel %vm47, %v39, %v44
  %v49 = vmul.f32 %v32, %v48
  %v51 = vperm.slane %v18, 0
  %v53 = vmul.f32 %v49, %v51
  %v55 = vperm.slane %v19, 0
  %v57 = vadd.f32 %v53, %v55
  %v58 = vld [vmem:[%s3] sm:$0xff]
  %v59 = vld [vmem:[%s3 + $0x8] sm:$0xff]
  %v60 = vld [vmem:[%s3 + $0x10] sm:$0xff]
  %v61 = vld [vmem:[%s3 + $0x18] sm:$0xff]
  %vm62 = vcmask 261120
  %v64 = vsel %vm62, %v57, 0
  %66 = vmatpush.msra.mxu0 0.0
  %67 = vmatpush.msra.mxu0 0.0
  %68 = vmatpush.msra.mxu0 0.0
  %69 = vmatpush.msra.mxu0 0.0
  %70 = vmatpush.msra.mxu0 0.0
  %71 = vmatpush.msra.mxu0 0.0
  %72 = vmatpush.msra.mxu0 0.0
  %73 = vmatpush.msra.mxu0 0.0
  %74 = vmatpush.msra.mxu0 0.0
  %75 = vmatpush.msra.mxu0 0.0
  %76 = vmatpush.msra.mxu0 0.0
  %77 = vmatpush.msra.mxu0 0.0
  %78 = vmatpush.msra.mxu0 %v61
  %79 = vmatpush.msra.mxu0 %v60
  %80 = vmatpush.msra.mxu0 %v59
  %81 = vmatpush.msra.mxu0 %v58
  %82 = vmatmul.f32.gmra.mxu0 %v64
  %v83 = vpop.f32.mrf.mxu0
  %v84 = vadd.f32 0.0, %v83
  %85 = vdwg.mxu0
  %vm86 = vcmask 783360
  %87 = vst.msk [vmem:[%s4] sm:$0x3f] %vm86, %v84
  // Predicated region
  $region18: #{vivit_forward.12} parent=0 // pred_check
    _
  $region19: #{vivit_forward.12} parent=0 // pred_check_branch
    %89 = sbr.rel (0) target = $region21
  $region20: #{vivit_forward.12} parent=0 // pred_region
    _
  $region21: #{vivit_forward.12} parent=0 // pred_fallthru
    _
  // Predicated region
  $region22: #{vivit_forward.12} parent=0 // pred_check
    _
  $region23: #{vivit_forward.12} parent=0 // pred_check_branch
    %91 = sbr.rel (0) target = $region25
  $region24: #{vivit_forward.12} parent=0 // pred_region
    _
  $region25: #{vivit_forward.12} parent=0 // pred_fallthru
    _

// kernel: vivit_forward.13
$region0: #{vivit_forward.13}
  #allocation0 [shape = 'u32[]', space=smem, size = 0x4, offset = 0x4, fixed_abs, tag = 'smem constant byte address 0x4 - core index']
  #allocation1 [shape = 'u32[72,128]{1,0:T(1,128)}', space=vmem, size = 0x9000, scoped, tag = 'internal scratch']
  %s0 = inlined_call_operand.vmem [shape: f32[8,3,8], index: 0, kind: input, shape index: {}]
  %s1 = inlined_call_operand.vmem [shape: f32[8,3,8], index: 1, kind: input, shape index: {}]
  %s2 = inlined_call_operand.vmem [shape: f32[8,3,8], index: 2, kind: input, shape index: {}]
  %s3 = inlined_call_operand.vmem [shape: f32[8,3,8], index: 3, kind: output, shape index: {}]
  %s4 = sld [smem:[#allocation0]]
  $region45: #{vivit_forward.13} parent=0
    _
  %s6 = ssub.s32 1, %s4
  %s7 = scalar_select 0, %s6, %s4
  loop: start=0, step=1, limit=4
  $region2: #{vivit_forward.13} parent=0 // loop_pre_header
    _
  $region3: #{vivit_forward.13} parent=0 // loop_header
    %s9 = sphi 0, %s13
    %p10 = scmp.ge.s32.totalorder %s9, 4
    %s19 = sphi 0, %s21
    %s22 = sphi 0, %s19
    %s23 = sphi 0, %s22
    %s39 = sphi 0, %s23
    %s45 = sphi 0, %s47
    %s48 = sphi 0, %s45
    %s49 = sphi 0, %s48
    %s65 = sphi 0, %s49
    %s71 = sphi 0, %s73
    %s74 = sphi 0, %s71
    %s75 = sphi 0, %s74
    %s91 = sphi 0, %s75
    %s97 = sphi 0, %s99
    %s100 = sphi 0, %s97
    %s101 = sphi 0, %s100
    %s117 = sphi 0, %s101
  $region4: #{vivit_forward.13} parent=0 // loop_header_branch
    %12 = sbr.rel (%p10) target = $region8
  $region5: #{vivit_forward.13} parent=0 // loop_body
    %s14 = ssub.s32 %s9, 1
    %s15 = ssub.s32 %s9, 2
    %s16 = sadd.s32 %s9, 1
    %s17 = ssub.s32 %s9, %s16
    %p18 = scmp.eq.s32.totalorder %s17, 0
    %s20 = sadd.s32 %s19, 1
    %s21 = scalar_select %p18, %s19, %s20
    %p24 = pneg %p18
    %p25 = scmp.eq.s32.totalorder %s9, 1
    %p26 = por %p24, %p25
    %p27 = scmp.ne.s32.totalorder %s19, %s22
    %p28 = scmp.eq.s32.totalorder %s9, 0
    %p29 = por %p27, %p28
    %p30 = scmp.ne.s32.totalorder %s19, %s22
    %p31 = scmp.eq.s32.totalorder %s14, 1
    %p32 = por %p30, %p31
    %p33 = scmp.ne.s32.totalorder %s22, %s23
    %p34 = scmp.eq.s32.totalorder %s14, 0
    %p35 = por %p33, %p34
    %p36 = scmp.ne.s32.totalorder %s22, %s23
    %p37 = scmp.eq.s32.totalorder %s15, 1
    %p38 = por %p36, %p37
    %p40 = scmp.ne.s32.totalorder %s23, %s39
    %p41 = scmp.eq.s32.totalorder %s15, 0
    %p42 = por %p40, %p41
    %s43 = ssub.s32 %s9, %s16
    %p44 = scmp.eq.s32.totalorder %s43, 0
    %s46 = sadd.s32 %s45, 1
    %s47 = scalar_select %p44, %s45, %s46
    %p50 = pneg %p44
    %p51 = scmp.eq.s32.totalorder %s9, 1
    %p52 = por %p50, %p51
    %p53 = scmp.ne.s32.totalorder %s45, %s48
    %p54 = scmp.eq.s32.totalorder %s9, 0
    %p55 = por %p53, %p54
    %p56 = scmp.ne.s32.totalorder %s45, %s48
    %p57 = scmp.eq.s32.totalorder %s14, 1
    %p58 = por %p56, %p57
    %p59 = scmp.ne.s32.totalorder %s48, %s49
    %p60 = scmp.eq.s32.totalorder %s14, 0
    %p61 = por %p59, %p60
    %p62 = scmp.ne.s32.totalorder %s48, %s49
    %p63 = scmp.eq.s32.totalorder %s15, 1
    %p64 = por %p62, %p63
    %p66 = scmp.ne.s32.totalorder %s49, %s65
    %p67 = scmp.eq.s32.totalorder %s15, 0
    %p68 = por %p66, %p67
    %s69 = ssub.s32 %s9, %s16
    %p70 = scmp.eq.s32.totalorder %s69, 0
    %s72 = sadd.s32 %s71, 1
    %s73 = scalar_select %p70, %s71, %s72
    %p76 = pneg %p70
    %p77 = scmp.eq.s32.totalorder %s9, 1
    %p78 = por %p76, %p77
    %p79 = scmp.ne.s32.totalorder %s71, %s74
    %p80 = scmp.eq.s32.totalorder %s9, 0
    %p81 = por %p79, %p80
    %p82 = scmp.ne.s32.totalorder %s71, %s74
    %p83 = scmp.eq.s32.totalorder %s14, 1
    %p84 = por %p82, %p83
    %p85 = scmp.ne.s32.totalorder %s74, %s75
    %p86 = scmp.eq.s32.totalorder %s14, 0
    %p87 = por %p85, %p86
    %p88 = scmp.ne.s32.totalorder %s74, %s75
    %p89 = scmp.eq.s32.totalorder %s15, 1
    %p90 = por %p88, %p89
    %p92 = scmp.ne.s32.totalorder %s75, %s91
    %p93 = scmp.eq.s32.totalorder %s15, 0
    %p94 = por %p92, %p93
    %s95 = ssub.s32 %s9, %s16
    %p96 = scmp.eq.s32.totalorder %s95, 0
    %s98 = sadd.s32 %s97, 1
    %s99 = scalar_select %p96, %s97, %s98
    %p102 = pneg %p96
    %p103 = scmp.eq.s32.totalorder %s9, 1
    %p104 = por %p102, %p103
    %p105 = scmp.ne.s32.totalorder %s97, %s100
    %p106 = scmp.eq.s32.totalorder %s9, 0
    %p107 = por %p105, %p106
    %p108 = scmp.ne.s32.totalorder %s97, %s100
    %p109 = scmp.eq.s32.totalorder %s14, 1
    %p110 = por %p108, %p109
    %p111 = scmp.ne.s32.totalorder %s100, %s101
    %p112 = scmp.eq.s32.totalorder %s14, 0
    %p113 = por %p111, %p112
    %p114 = scmp.ne.s32.totalorder %s100, %s101
    %p115 = scmp.eq.s32.totalorder %s15, 1
    %p116 = por %p114, %p115
    %p118 = scmp.ne.s32.totalorder %s101, %s117
    %p119 = scmp.eq.s32.totalorder %s15, 0
    %p120 = por %p118, %p119
    %p121 = scmp.le.s32.totalorder 1, %s9
    %p122 = scmp.lt.s32.totalorder %s9, 3
    %p123 = pnand %p121, %p122
    %p124 = pneg %p123
    // Predicated region
    $region9: #{vivit_forward.13} parent=5 // pred_check
      _
    $region10: #{vivit_forward.13} parent=5 // pred_check_branch
      %126 = sbr.rel (%p123) target = $region12
    $region11: #{vivit_forward.13} parent=5 // pred_region
      %s127 = ssub.s32 %s9, 1
    $region12: #{vivit_forward.13} parent=5 // pred_fallthru
      _
    %p128 = scmp.lt.s32.totalorder %s9, 2
    // Predicated region
    $region13: #{vivit_forward.13} parent=5 // pred_check
      %p129 = pneg %p128
    $region14: #{vivit_forward.13} parent=5 // pred_check_branch
      %131 = sbr.rel (%p129) target = $region16
    $region15: #{vivit_forward.13} parent=5 // pred_region
      // Predicated region
      $region17: #{vivit_forward.13} parent=15 // pred_check
        %p132 = pneg %p29
      $region18: #{vivit_forward.13} parent=15 // pred_check_branch
        %134 = sbr.rel (%p132) target = $region20
      $region19: #{vivit_forward.13} parent=15 // pred_region
        %s135 = smul.u32 4, %s9
        %p136 = scmp.lt.s32.totalorder %s135, 7
        %s137 = scalar_select %p136, %s135, 7
        %s138 = smul.addr %s137, 4
        %s139 = scalar_lea.vmem %s0, %s138
        %s140 = smul.u32 4, %s9
      $region20: #{vivit_forward.13} parent=15 // pred_fallthru
        _
      // Predicated region
      $region21: #{vivit_forward.13} parent=15 // pred_check
        %p141 = pneg %p55
      $region22: #{vivit_forward.13} parent=15 // pred_check_branch
        %143 = sbr.rel (%p141) target = $region24
      $region23: #{vivit_forward.13} parent=15 // pred_region
        %s144 = smul.u32 4, %s9
        %p145 = scmp.lt.s32.totalorder %s144, 7
        %s146 = scalar_select %p145, %s144, 7
        %s147 = smul.addr %s146, 4
        %s148 = scalar_lea.vmem %s1, %s147
        %s149 = smul.u32 4, %s9
      $region24: #{vivit_forward.13} parent=15 // pred_fallthru
        _
      // Predicated region
      $region25: #{vivit_forward.13} parent=15 // pred_check
        %p150 = pneg %p81
      $region26: #{vivit_forward.13} parent=15 // pred_check_branch
        %152 = sbr.rel (%p150) target = $region28
      $region27: #{vivit_forward.13} parent=15 // pred_region
        %s153 = smul.u32 4, %s9
        %p154 = scmp.lt.s32.totalorder %s153, 7
        %s155 = scalar_select %p154, %s153, 7
        %s156 = smul.addr %s155, 4
        %s157 = scalar_lea.vmem %s2, %s156
        %s158 = smul.u32 4, %s9
      $region28: #{vivit_forward.13} parent=15 // pred_fallthru
        _
    $region16: #{vivit_forward.13} parent=5 // pred_fallthru
      _
    %p159 = scmp.le.s32.totalorder 1, %s9
    %p160 = scmp.lt.s32.totalorder %s9, 3
    %p161 = pnand %p159, %p160
    %p162 = pneg %p161
    // Predicated region
    $region29: #{vivit_forward.13} parent=5 // pred_check
      _
    $region30: #{vivit_forward.13} parent=5 // pred_check_branch
      %164 = sbr.rel (%p161) target = $region32
    $region31: #{vivit_forward.13} parent=5 // pred_region
      %s165 = ssub.s32 %s9, 1
      %s166 = smul.u32 4, %s14
      %p167 = scmp.lt.s32.totalorder %s166, 7
      %s168 = scalar_select %p167, %s166, 7
      %s169 = smul.addr %s168, 4
      %s170 = scalar_lea.vmem %s0, %s169
      %p171 = pneg %p35
      %p172 = pneg %p32
      %s173 = smul.u32 4, %s14
      %p174 = scmp.lt.s32.totalorder %s173, 7
      %s175 = scalar_select %p174, %s173, 7
      %s176 = smul.addr %s175, 4
      %s177 = scalar_lea.vmem %s1, %s176
      %p178 = pneg %p61
      %p179 = pneg %p58
      %s180 = smul.u32 4, %s14
      %p181 = scmp.lt.s32.totalorder %s180, 7
      %s182 = scalar_select %p181, %s180, 7
      %s183 = smul.addr %s182, 4
      %s184 = scalar_lea.vmem %s2, %s183
      %p185 = pneg %p87
      %p186 = pneg %p84
      %p187 = pneg %p113
      %p188 = pneg %p110
      %s189 = smul.u32 4, %s14
      %p190 = scmp.lt.s32.totalorder %s189, 7
      %s191 = scalar_select %p190, %s189, 7
      %s192 = smul.addr %s191, 4
      %s193 = scalar_lea.vmem %s3, %s192
      %s194 = smul.u32 4, %s14
      %p195 = scmp.lt.s32.totalorder %s194, 7
      %s196 = scalar_select %p195, %s194, 7
      %s197 = smul.addr %s196, 4
      %s198 = scalar_lea.vmem %s0, %s197
      %s199 = smul.u32 4, %s14
      %s200 = smul.u32 4, %s14
      %p201 = scmp.lt.s32.totalorder %s200, 7
      %s202 = scalar_select %p201, %s200, 7
      %s203 = smul.addr %s202, 4
      %s204 = scalar_lea.vmem %s1, %s203
      %s205 = smul.u32 4, %s14
      %s206 = smul.u32 4, %s14
      %p207 = scmp.lt.s32.totalorder %s206, 7
      %s208 = scalar_select %p207, %s206, 7
      %s209 = smul.addr %s208, 4
      %s210 = scalar_lea.vmem %s2, %s209
      %s211 = smul.u32 4, %s14
      %s212 = smul.u32 4, %s14
      %p213 = scmp.lt.s32.totalorder %s212, 7
      %s214 = scalar_select %p213, %s212, 7
      %s215 = smul.addr %s214, 4
      %s216 = scalar_lea.vmem %s3, %s215
      %s217 = smul.u32 4, %s14
      %v218 = vld [vmem:[%s198] sm:$0x7]
      %v219 = vld [vmem:[%s198 + $0x4] sm:$0x7]
      %v220 = vld [vmem:[%s198 + $0x8] sm:$0x7]
      %v221 = vld [vmem:[%s198 + $0xc] sm:$0x7]
      %v222 = vld [vmem:[%s204] sm:$0x7]
      %v223 = vld [vmem:[%s204 + $0x4] sm:$0x7]
      %v224 = vld [vmem:[%s204 + $0x8] sm:$0x7]
      %v225 = vld [vmem:[%s204 + $0xc] sm:$0x7]
      %vm226 = vcmask 64512
      %v228 = vsel %vm226, %v218, 0
      %v231 = vsel %vm226, %v222, 0
      %233 = vmatpush.xpose.msra.mxu0 0.0
      %234 = vmatpush.xpose.msra.mxu0 0.0
      %235 = vmatpush.xpose.msra.mxu0 0.0
      %236 = vmatpush.xpose.msra.mxu0 0.0
      %237 = vmatpush.xpose.msra.mxu0 0.0
      %238 = vmatpush.xpose.msra.mxu0 0.0
      %239 = vmatpush.xpose.msra.mxu0 0.0
      %240 = vmatpush.xpose.msra.mxu0 0.0
      %241 = vmatpush.xpose.msra.mxu0 0.0
      %242 = vmatpush.xpose.msra.mxu0 0.0
      %243 = vmatpush.xpose.msra.mxu0 0.0
      %244 = vmatpush.xpose.msra.mxu0 0.0
      %245 = vmatpush.xpose.msra.mxu0 0.0
      %246 = vmatpush.xpose.msra.mxu0 0.0
      %247 = vmatpush.xpose.msra.mxu0 0.0
      %248 = vmatpush.xpose.msra.mxu0 %v231
      %249 = vmatmul.f32.gmra.mxu0 %v228
      %v250 = vpop.f32.mrf.mxu0
      %v251 = vadd.f32 0.0, %v250
      %252 = vdwg.mxu0
      %v254 = vsel %vm226, %v219, 0
      %v257 = vsel %vm226, %v223, 0
      %259 = vmatpush.xpose.msra.mxu0 0.0
      %260 = vmatpush.xpose.msra.mxu0 0.0
      %261 = vmatpush.xpose.msra.mxu0 0.0
      %262 = vmatpush.xpose.msra.mxu0 0.0
      %263 = vmatpush.xpose.msra.mxu0 0.0
      %264 = vmatpush.xpose.msra.mxu0 0.0
      %265 = vmatpush.xpose.msra.mxu0 0.0
      %266 = vmatpush.xpose.msra.mxu0 0.0
      %267 = vmatpush.xpose.msra.mxu0 0.0
      %268 = vmatpush.xpose.msra.mxu0 0.0
      %269 = vmatpush.xpose.msra.mxu0 0.0
      %270 = vmatpush.xpose.msra.mxu0 0.0
      %271 = vmatpush.xpose.msra.mxu0 0.0
      %272 = vmatpush.xpose.msra.mxu0 0.0
      %273 = vmatpush.xpose.msra.mxu0 0.0
      %274 = vmatpush.xpose.msra.mxu0 %v257
      %275 = vmatmul.f32.gmra.mxu0 %v254
      %v276 = vpop.f32.mrf.mxu0
      %v277 = vadd.f32 0.0, %v276
      %278 = vdwg.mxu0
      %v280 = vsel %vm226, %v220, 0
      %v283 = vsel %vm226, %v224, 0
      %285 = vmatpush.xpose.msra.mxu0 0.0
      %286 = vmatpush.xpose.msra.mxu0 0.0
      %287 = vmatpush.xpose.msra.mxu0 0.0
      %288 = vmatpush.xpose.msra.mxu0 0.0
      %289 = vmatpush.xpose.msra.mxu0 0.0
      %290 = vmatpush.xpose.msra.mxu0 0.0
      %291 = vmatpush.xpose.msra.mxu0 0.0
      %292 = vmatpush.xpose.msra.mxu0 0.0
      %293 = vmatpush.xpose.msra.mxu0 0.0
      %294 = vmatpush.xpose.msra.mxu0 0.0
      %295 = vmatpush.xpose.msra.mxu0 0.0
      %296 = vmatpush.xpose.msra.mxu0 0.0
      %297 = vmatpush.xpose.msra.mxu0 0.0
      %298 = vmatpush.xpose.msra.mxu0 0.0
      %299 = vmatpush.xpose.msra.mxu0 0.0
      %300 = vmatpush.xpose.msra.mxu0 %v283
      %301 = vmatmul.f32.gmra.mxu0 %v280
      %v302 = vpop.f32.mrf.mxu0
      %v303 = vadd.f32 0.0, %v302
      %304 = vdwg.mxu0
      %v306 = vsel %vm226, %v221, 0
      %v309 = vsel %vm226, %v225, 0
      %311 = vmatpush.xpose.msra.mxu0 0.0
      %312 = vmatpush.xpose.msra.mxu0 0.0
      %313 = vmatpush.xpose.msra.mxu0 0.0
      %314 = vmatpush.xpose.msra.mxu0 0.0
      %315 = vmatpush.xpose.msra.mxu0 0.0
      %316 = vmatpush.xpose.msra.mxu0 0.0
      %317 = vmatpush.xpose.msra.mxu0 0.0
      %318 = vmatpush.xpose.msra.mxu0 0.0
      %319 = vmatpush.xpose.msra.mxu0 0.0
      %320 = vmatpush.xpose.msra.mxu0 0.0
      %321 = vmatpush.xpose.msra.mxu0 0.0
      %322 = vmatpush.xpose.msra.mxu0 0.0
      %323 = vmatpush.xpose.msra.mxu0 0.0
      %324 = vmatpush.xpose.msra.mxu0 0.0
      %325 = vmatpush.xpose.msra.mxu0 0.0
      %326 = vmatpush.xpose.msra.mxu0 %v309
      %327 = vmatmul.f32.gmra.mxu0 %v306
      %v328 = vpop.f32.mrf.mxu0
      %v329 = vadd.f32 0.0, %v328
      %330 = vdwg.mxu0
      %v331 = vmul.f32 %v251, 0.35355338
      %v332 = vmul.f32 %v277, 0.35355338
      %v333 = vmul.f32 %v303, 0.35355338
      %v334 = vmul.f32 %v329, 0.35355338
      %vm335 = vcmask 18432
      %v336 = vsel %vm335, %v331, -inf
      %337 = vmax.xlane.f32.xlu0 %v336
      %v338 = vpop.xlane.xlu0 %337
      %v339 = vsel %vm335, %v332, -inf
      %340 = vmax.xlane.f32.xlu0 %v339
      %v341 = vpop.xlane.xlu0 %340
      %v342 = vsel %vm335, %v333, -inf
      %343 = vmax.xlane.f32.xlu0 %v342
      %v344 = vpop.xlane.xlu0 %343
      %v345 = vsel %vm335, %v334, -inf
      %346 = vmax.xlane.f32.xlu0 %v345
      %v347 = vpop.xlane.xlu0 %346
      %v348 = vsub.f32 %v331, %v338
      %v349 = vsub.f32 %v332, %v341
      %v350 = vsub.f32 %v333, %v344
      %v351 = vsub.f32 %v334, %v347
      %v352 = vmul.f32 %v348, 1.442695
      %v353 = vpow.pop %v352
      %v354 = vmul.f32 %v349, 1.442695
      %v355 = vpow.pop %v354
      %v356 = vmul.f32 %v350, 1.442695
      %v357 = vpow.pop %v356
      %v358 = vmul.f32 %v351, 1.442695
      %v359 = vpow.pop %v358
      %v360 = vsel %vm335, %v353, 0.0
      %361 = vadd.xlane.f32.xlu0 %v360
      %v362 = vpop.xlane.xlu0 %361
      %v363 = vsel %vm335, %v355, 0.0
      %364 = vadd.xlane.f32.xlu0 %v363
      %v365 = vpop.xlane.xlu0 %364
      %v366 = vsel %vm335, %v357, 0.0
      %367 = vadd.xlane.f32.xlu0 %v366
      %v368 = vpop.xlane.xlu0 %367
      %v369 = vsel %vm335, %v359, 0.0
      %370 = vadd.xlane.f32.xlu0 %v369
      %v371 = vpop.xlane.xlu0 %370
      %v372 = vrcp.pop %v362
      %v373 = vrcp.pop %v365
      %v374 = vrcp.pop %v368
      %v375 = vrcp.pop %v371
      %v376 = vmul.f32 %v353, %v372
      %v377 = vmul.f32 %v355, %v373
      %v378 = vmul.f32 %v357, %v374
      %v379 = vmul.f32 %v359, %v375
      %v380 = vld [vmem:[%s210] sm:$0x7]
      %v381 = vld [vmem:[%s210 + $0x4] sm:$0x7]
      %v382 = vld [vmem:[%s210 + $0x8] sm:$0x7]
      %v383 = vld [vmem:[%s210 + $0xc] sm:$0x7]
      %vm384 = vcmask 23552
      %v386 = vsel %vm384, %v376, 0
      %vm388 = vcmask 1042432
      %v390 = vsel %vm388, %v380, 0
      %392 = vmatpush.msra.mxu0 0.0
      %393 = vmatpush.msra.mxu0 0.0
      %394 = vmatpush.msra.mxu0 0.0
      %395 = vmatpush.msra.mxu0 0.0
      %396 = vmatpush.msra.mxu0 0.0
      %397 = vmatpush.msra.mxu0 0.0
      %398 = vmatpush.msra.mxu0 0.0
      %399 = vmatpush.msra.mxu0 0.0
      %400 = vmatpush.msra.mxu0 0.0
      %401 = vmatpush.msra.mxu0 0.0
      %402 = vmatpush.msra.mxu0 0.0
      %403 = vmatpush.msra.mxu0 0.0
      %404 = vmatpush.msra.mxu0 0.0
      %405 = vmatpush.msra.mxu0 0.0
      %406 = vmatpush.msra.mxu0 0.0
      %407 = vmatpush.msra.mxu0 %v390
      %408 = vmatmul.f32.gmra.mxu0 %v386
      %v409 = vpop.f32.mrf.mxu0
      %v410 = vadd.f32 0.0, %v409
      %411 = vdwg.mxu0
      %v413 = vsel %vm384, %v377, 0
      %v416 = vsel %vm388, %v381, 0
      %418 = vmatpush.msra.mxu0 0.0
      %419 = vmatpush.msra.mxu0 0.0
      %420 = vmatpush.msra.mxu0 0.0
      %421 = vmatpush.msra.mxu0 0.0
      %422 = vmatpush.msra.mxu0 0.0
      %423 = vmatpush.msra.mxu0 0.0
      %424 = vmatpush.msra.mxu0 0.0
      %425 = vmatpush.msra.mxu0 0.0
      %426 = vmatpush.msra.mxu0 0.0
      %427 = vmatpush.msra.mxu0 0.0
      %428 = vmatpush.msra.mxu0 0.0
      %429 = vmatpush.msra.mxu0 0.0
      %430 = vmatpush.msra.mxu0 0.0
      %431 = vmatpush.msra.mxu0 0.0
      %432 = vmatpush.msra.mxu0 0.0
      %433 = vmatpush.msra.mxu0 %v416
      %434 = vmatmul.f32.gmra.mxu0 %v413
      %v435 = vpop.f32.mrf.mxu0
      %v436 = vadd.f32 0.0, %v435
      %437 = vdwg.mxu0
      %v439 = vsel %vm384, %v378, 0
      %v442 = vsel %vm388, %v382, 0
      %444 = vmatpush.msra.mxu0 0.0
      %445 = vmatpush.msra.mxu0 0.0
      %446 = vmatpush.msra.mxu0 0.0
      %447 = vmatpush.msra.mxu0 0.0
      %448 = vmatpush.msra.mxu0 0.0
      %449 = vmatpush.msra.mxu0 0.0
      %450 = vmatpush.msra.mxu0 0.0
      %451 = vmatpush.msra.mxu0 0.0
      %452 = vmatpush.msra.mxu0 0.0
      %453 = vmatpush.msra.mxu0 0.0
      %454 = vmatpush.msra.mxu0 0.0
      %455 = vmatpush.msra.mxu0 0.0
      %456 = vmatpush.msra.mxu0 0.0
      %457 = vmatpush.msra.mxu0 0.0
      %458 = vmatpush.msra.mxu0 0.0
      %459 = vmatpush.msra.mxu0 %v442
      %460 = vmatmul.f32.gmra.mxu0 %v439
      %v461 = vpop.f32.mrf.mxu0
      %v462 = vadd.f32 0.0, %v461
      %463 = vdwg.mxu0
      %v465 = vsel %vm384, %v379, 0
      %v468 = vsel %vm388, %v383, 0
      %470 = vmatpush.msra.mxu0 0.0
      %471 = vmatpush.msra.mxu0 0.0
      %472 = vmatpush.msra.mxu0 0.0
      %473 = vmatpush.msra.mxu0 0.0
      %474 = vmatpush.msra.mxu0 0.0
      %475 = vmatpush.msra.mxu0 0.0
      %476 = vmatpush.msra.mxu0 0.0
      %477 = vmatpush.msra.mxu0 0.0
      %478 = vmatpush.msra.mxu0 0.0
      %479 = vmatpush.msra.mxu0 0.0
      %480 = vmatpush.msra.mxu0 0.0
      %481 = vmatpush.msra.mxu0 0.0
      %482 = vmatpush.msra.mxu0 0.0
      %483 = vmatpush.msra.mxu0 0.0
      %484 = vmatpush.msra.mxu0 0.0
      %485 = vmatpush.msra.mxu0 %v468
      %486 = vmatmul.f32.gmra.mxu0 %v465
      %v487 = vpop.f32.mrf.mxu0
      %v488 = vadd.f32 0.0, %v487
      %489 = vdwg.mxu0
      %vm490 = vcmask 59392
      %491 = vst.msk [vmem:[%s216] sm:$0x7] %vm490, %v410
      %492 = vst.msk [vmem:[%s216 + $0x4] sm:$0x7] %vm490, %v436
      %493 = vst.msk [vmem:[%s216 + $0x8] sm:$0x7] %vm490, %v462
      %494 = vst.msk [vmem:[%s216 + $0xc] sm:$0x7] %vm490, %v488
      %s495 = smul.u32 4, %s14
      %p496 = scmp.lt.s32.totalorder %s495, 7
      %s497 = scalar_select %p496, %s495, 7
      %s498 = smul.addr %s497, 4
      %s499 = scalar_lea.vmem %s3, %s498
      // Predicated region
      $region33: #{vivit_forward.13} parent=31 // pred_check
        %p500 = pneg %p110
      $region34: #{vivit_forward.13} parent=31 // pred_check_branch
        %502 = sbr.rel (%p500) target = $region36
      $region35: #{vivit_forward.13} parent=31 // pred_region
        %s503 = smul.u32 4, %s14
      $region36: #{vivit_forward.13} parent=31 // pred_fallthru
        _
    $region32: #{vivit_forward.13} parent=5 // pred_fallthru
      _
    %p504 = scmp.le.s32.totalorder 2, %s9
    // Predicated region
    $region37: #{vivit_forward.13} parent=5 // pred_check
      %p505 = pneg %p504
    $region38: #{vivit_forward.13} parent=5 // pred_check_branch
      %507 = sbr.rel (%p505) target = $region40
    $region39: #{vivit_forward.13} parent=5 // pred_region
      %s508 = ssub.s32 %s9, 2
      // Predicated region
      $region41: #{vivit_forward.13} parent=39 // pred_check
        %p509 = pneg %p116
      $region42: #{vivit_forward.13} parent=39 // pred_check_branch
        %511 = sbr.rel (%p509) target = $region44
      $region43: #{vivit_forward.13} parent=39 // pred_region
        %s512 = smul.u32 4, %s15
        %p513 = scmp.lt.s32.totalorder %s512, 7
        %s514 = scalar_select %p513, %s512, 7
        %s515 = smul.addr %s514, 4
        %s516 = scalar_lea.vmem %s3, %s515
      $region44: #{vivit_forward.13} parent=39 // pred_fallthru
        _
    $region40: #{vivit_forward.13} parent=5 // pred_fallthru
      _
  $region6: #{vivit_forward.13} parent=0 // loop_footer
    %s13 = sadd.s32 1, %s9
  $region7: #{vivit_forward.13} parent=0 // loop_footer_branch
    %8 = sbr.rel target = $region3
  $region8: #{vivit_forward.13} parent=0 // loop_exit
    _

// kernel: vivit_forward.14
$region0: #{vivit_forward.14}
  #allocation0 [shape = 'u32[]', space=smem, size = 0x4, offset = 0x4, fixed_abs, tag = 'smem constant byte address 0x4 - core index']
  #allocation1 [shape = 'u32[72,128]{1,0:T(1,128)}', space=vmem, size = 0x9000, scoped, tag = 'internal scratch']
  %s0 = inlined_call_operand.vmem [shape: f32[6,32], index: 0, kind: input, shape index: {}]
  %s1 = inlined_call_operand.vmem [shape: f32[6,32], index: 1, kind: input, shape index: {}]
  %s2 = inlined_call_operand.vmem [shape: f32[32,32], index: 2, kind: input, shape index: {}]
  %s3 = inlined_call_operand.vmem [shape: f32[1,32], index: 3, kind: input, shape index: {}]
  %s4 = inlined_call_operand.vmem [shape: f32[1,32], index: 4, kind: input, shape index: {}]
  %s5 = inlined_call_operand.vmem [shape: f32[1,32], index: 5, kind: input, shape index: {}]
  %s6 = inlined_call_operand.vmem [shape: f32[32,64], index: 6, kind: input, shape index: {}]
  %s7 = inlined_call_operand.vmem [shape: f32[1,64], index: 7, kind: input, shape index: {}]
  %s8 = inlined_call_operand.vmem [shape: f32[64,32], index: 8, kind: input, shape index: {}]
  %s9 = inlined_call_operand.vmem [shape: f32[1,32], index: 9, kind: input, shape index: {}]
  %s10 = inlined_call_operand.vmem [shape: f32[6,32], index: 10, kind: output, shape index: {}]
  %s11 = sld [smem:[#allocation0]]
  $region50: #{vivit_forward.14} parent=0
    _
  %s13 = ssub.s32 1, %s11
  %s14 = scalar_select 0, %s13, %s11
  // Predicated region
  $region2: #{vivit_forward.14} parent=0 // pred_check
    _
  $region3: #{vivit_forward.14} parent=0 // pred_check_branch
    %16 = sbr.rel (0) target = $region5
  $region4: #{vivit_forward.14} parent=0 // pred_region
    _
  $region5: #{vivit_forward.14} parent=0 // pred_fallthru
    _
  // Predicated region
  $region6: #{vivit_forward.14} parent=0 // pred_check
    _
  $region7: #{vivit_forward.14} parent=0 // pred_check_branch
    %18 = sbr.rel (0) target = $region9
  $region8: #{vivit_forward.14} parent=0 // pred_region
    _
  $region9: #{vivit_forward.14} parent=0 // pred_fallthru
    _
  // Predicated region
  $region10: #{vivit_forward.14} parent=0 // pred_check
    _
  $region11: #{vivit_forward.14} parent=0 // pred_check_branch
    %20 = sbr.rel (0) target = $region13
  $region12: #{vivit_forward.14} parent=0 // pred_region
    _
  $region13: #{vivit_forward.14} parent=0 // pred_fallthru
    _
  // Predicated region
  $region14: #{vivit_forward.14} parent=0 // pred_check
    _
  $region15: #{vivit_forward.14} parent=0 // pred_check_branch
    %22 = sbr.rel (0) target = $region17
  $region16: #{vivit_forward.14} parent=0 // pred_region
    _
  $region17: #{vivit_forward.14} parent=0 // pred_fallthru
    _
  // Predicated region
  $region18: #{vivit_forward.14} parent=0 // pred_check
    _
  $region19: #{vivit_forward.14} parent=0 // pred_check_branch
    %24 = sbr.rel (0) target = $region21
  $region20: #{vivit_forward.14} parent=0 // pred_region
    _
  $region21: #{vivit_forward.14} parent=0 // pred_fallthru
    _
  // Predicated region
  $region22: #{vivit_forward.14} parent=0 // pred_check
    _
  $region23: #{vivit_forward.14} parent=0 // pred_check_branch
    %26 = sbr.rel (0) target = $region25
  $region24: #{vivit_forward.14} parent=0 // pred_region
    _
  $region25: #{vivit_forward.14} parent=0 // pred_fallthru
    _
  // Predicated region
  $region26: #{vivit_forward.14} parent=0 // pred_check
    _
  $region27: #{vivit_forward.14} parent=0 // pred_check_branch
    %28 = sbr.rel (0) target = $region29
  $region28: #{vivit_forward.14} parent=0 // pred_region
    _
  $region29: #{vivit_forward.14} parent=0 // pred_fallthru
    _
  // Predicated region
  $region30: #{vivit_forward.14} parent=0 // pred_check
    _
  $region31: #{vivit_forward.14} parent=0 // pred_check_branch
    %30 = sbr.rel (0) target = $region33
  $region32: #{vivit_forward.14} parent=0 // pred_region
    _
  $region33: #{vivit_forward.14} parent=0 // pred_fallthru
    _
  // Predicated region
  $region34: #{vivit_forward.14} parent=0 // pred_check
    _
  $region35: #{vivit_forward.14} parent=0 // pred_check_branch
    %32 = sbr.rel (0) target = $region37
  $region36: #{vivit_forward.14} parent=0 // pred_region
    _
  $region37: #{vivit_forward.14} parent=0 // pred_fallthru
    _
  // Predicated region
  $region38: #{vivit_forward.14} parent=0 // pred_check
    _
  $region39: #{vivit_forward.14} parent=0 // pred_check_branch
    %34 = sbr.rel (0) target = $region41
  $region40: #{vivit_forward.14} parent=0 // pred_region
    _
  $region41: #{vivit_forward.14} parent=0 // pred_fallthru
    _
  %v35 = vld [vmem:[%s0] sm:$0x3f]
  %v36 = vld [vmem:[%s1] sm:$0x3f]
  %v37 = vld [vmem:[%s2] sm:$0xff]
  %v38 = vld [vmem:[%s2 + $0x8] sm:$0xff]
  %v39 = vld [vmem:[%s2 + $0x10] sm:$0xff]
  %v40 = vld [vmem:[%s2 + $0x18] sm:$0xff]
  %vm41 = vcmask 261120
  %v43 = vsel %vm41, %v36, 0
  %45 = vmatpush.msra.mxu0 0.0
  %46 = vmatpush.msra.mxu0 0.0
  %47 = vmatpush.msra.mxu0 0.0
  %48 = vmatpush.msra.mxu0 0.0
  %49 = vmatpush.msra.mxu0 0.0
  %50 = vmatpush.msra.mxu0 0.0
  %51 = vmatpush.msra.mxu0 0.0
  %52 = vmatpush.msra.mxu0 0.0
  %53 = vmatpush.msra.mxu0 0.0
  %54 = vmatpush.msra.mxu0 0.0
  %55 = vmatpush.msra.mxu0 0.0
  %56 = vmatpush.msra.mxu0 0.0
  %57 = vmatpush.msra.mxu0 %v40
  %58 = vmatpush.msra.mxu0 %v39
  %59 = vmatpush.msra.mxu0 %v38
  %60 = vmatpush.msra.mxu0 %v37
  %61 = vmatmul.f32.gmra.mxu0 %v43
  %v62 = vpop.f32.mrf.mxu0
  %v63 = vadd.f32 0.0, %v62
  %64 = vdwg.mxu0
  %v65 = vadd.f32 %v35, %v63
  %v66 = vld [vmem:[%s3] sm:$0x1]
  %v68 = vperm.slane %v66, 0
  %v70 = vadd.f32 %v65, %v68
  %v71 = vld [vmem:[%s4] sm:$0x1]
  %v72 = vld [vmem:[%s5] sm:$0x1]
  %vm73 = vcmask 259072
  %v74 = vsel %vm73, %v70, 0.0
  %75 = vadd.xlane.f32.xlu0 %v74
  %v76 = vpop.xlane.xlu0 %75
  %v77 = vrcp.pop 32.0
  %v78 = vmul.f32 32.0, %v77
  %v79 = vsub.f32 1.0, %v78
  %v80 = vmul.f32 %v77, %v79
  %v81 = vadd.f32 %v77, %v80
  %vm82 = vweird.f32 %v77
  %v83 = vsel %vm82, %v77, %v81
  %v84 = vmul.f32 %v76, %v83
  %v85 = vsub.f32 %v70, %v84
  %v86 = vmul.f32 %v85, %v85
  %v87 = vsel %vm73, %v86, 0.0
  %88 = vadd.xlane.f32.xlu0 %v87
  %v89 = vpop.xlane.xlu0 %88
  %v90 = vmul.f32 %v89, %v83
  %v91 = vadd.f32 %v90, 1e-05
  %v92 = vrsqrt.pop %v91
  %v93 = vmul.f32 %v92, %v91
  %v94 = vmul.f32 %v93, %v92
  %v95 = vmul.f32 0.5, %v94
  %v96 = vsub.f32 1.5, %v95
  %v97 = vmul.f32 %v92, %v96
  %vm98 = vweird.f32 %v91
  %vm99 = vweird.f32 %v92
  %vm100 = vmor %vm98, %vm99
  %v101 = vsel %vm100, %v92, %v97
  %v102 = vmul.f32 %v85, %v101
  %v104 = vperm.slane %v71, 0
  %v106 = vmul.f32 %v102, %v104
  %v108 = vperm.slane %v72, 0
  %v110 = vadd.f32 %v106, %v108
  %v111 = vld [vmem:[%s6] sm:$0xff]
  %v112 = vld [vmem:[%s6 + $0x8] sm:$0xff]
  %v113 = vld [vmem:[%s6 + $0x10] sm:$0xff]
  %v114 = vld [vmem:[%s6 + $0x18] sm:$0xff]
  %v115 = vld [vmem:[%s7] sm:$0x1]
  %v117 = vperm.slane %v115, 0
  %v120 = vsel %vm41, %v110, 0
  %122 = vmatpush.msra.mxu0 0.0
  %123 = vmatpush.msra.mxu0 0.0
  %124 = vmatpush.msra.mxu0 0.0
  %125 = vmatpush.msra.mxu0 0.0
  %126 = vmatpush.msra.mxu0 0.0
  %127 = vmatpush.msra.mxu0 0.0
  %128 = vmatpush.msra.mxu0 0.0
  %129 = vmatpush.msra.mxu0 0.0
  %130 = vmatpush.msra.mxu0 0.0
  %131 = vmatpush.msra.mxu0 0.0
  %132 = vmatpush.msra.mxu0 0.0
  %133 = vmatpush.msra.mxu0 0.0
  %134 = vmatpush.msra.mxu0 %v114
  %135 = vmatpush.msra.mxu0 %v113
  %136 = vmatpush.msra.mxu0 %v112
  %137 = vmatpush.msra.mxu0 %v111
  %138 = vmatmul.f32.gmra.mxu0 %v120
  %v139 = vpop.f32.mrf.mxu0
  %v140 = vadd.f32 %v117, %v139
  %141 = vdwg.mxu0
  %v142 = vmul.f32 %v140, 0.5
  %v143 = vmul.f32 %v140, 0.044715
  %v144 = vmul.f32 %v143, %v140
  %v145 = vmul.f32 %v144, %v140
  %v146 = vadd.f32 %v140, %v145
  %v147 = vmul.f32 %v146, 0.7978846
  %v148 = vtanh.pop %v147
  %v149 = vadd.f32 %v148, 1.0
  %v150 = vmul.f32 %v142, %v149
  %v151 = vld [vmem:[%s8] sm:$0xff]
  %v152 = vld [vmem:[%s8 + $0x8] sm:$0xff]
  %v153 = vld [vmem:[%s8 + $0x10] sm:$0xff]
  %v154 = vld [vmem:[%s8 + $0x18] sm:$0xff]
  %v155 = vld [vmem:[%s8 + $0x20] sm:$0xff]
  %v156 = vld [vmem:[%s8 + $0x28] sm:$0xff]
  %v157 = vld [vmem:[%s8 + $0x30] sm:$0xff]
  %v158 = vld [vmem:[%s8 + $0x38] sm:$0xff]
  %v159 = vld [vmem:[%s9] sm:$0x1]
  %v161 = vperm.slane %v159, 0
  %vm163 = vcmask 523264
  %v165 = vsel %vm163, %v150, 0
  %167 = vmatpush.msra.mxu0 0.0
  %168 = vmatpush.msra.mxu0 0.0
  %169 = vmatpush.msra.mxu0 0.0
  %170 = vmatpush.msra.mxu0 0.0
  %171 = vmatpush.msra.mxu0 0.0
  %172 = vmatpush.msra.mxu0 0.0
  %173 = vmatpush.msra.mxu0 0.0
  %174 = vmatpush.msra.mxu0 0.0
  %175 = vmatpush.msra.mxu0 %v158
  %176 = vmatpush.msra.mxu0 %v157
  %177 = vmatpush.msra.mxu0 %v156
  %178 = vmatpush.msra.mxu0 %v155
  %179 = vmatpush.msra.mxu0 %v154
  %180 = vmatpush.msra.mxu0 %v153
  %181 = vmatpush.msra.mxu0 %v152
  %182 = vmatpush.msra.mxu0 %v151
  %183 = vmatmul.f32.gmra.mxu0 %v165
  %v184 = vpop.f32.mrf.mxu0
  %v185 = vadd.f32 %v161, %v184
  %186 = vdwg.mxu0
  %v187 = vadd.f32 %v70, %v185
  %188 = vst.msk [vmem:[%s10] sm:$0x3f] %vm73, %v187
  // Predicated region
  $region42: #{vivit_forward.14} parent=0 // pred_check
    _
  $region43: #{vivit_forward.14} parent=0 // pred_check_branch
    %190 = sbr.rel (0) target = $region45
  $region44: #{vivit_forward.14} parent=0 // pred_region
    _
  $region45: #{vivit_forward.14} parent=0 // pred_fallthru
    _
  // Predicated region
  $region46: #{vivit_forward.14} parent=0 // pred_check
    _
  $region47: #{vivit_forward.14} parent=0 // pred_check_branch
    %192 = sbr.rel (0) target = $region49
  $region48: #{vivit_forward.14} parent=0 // pred_region
    _
  $region49: #{vivit_forward.14} parent=0 // pred_fallthru
    _

// kernel: vivit_forward.15
$region0: #{vivit_forward.15}
  #allocation0 [shape = 'u32[]', space=smem, size = 0x4, offset = 0x4, fixed_abs, tag = 'smem constant byte address 0x4 - core index']
  #allocation1 [shape = 'u32[72,128]{1,0:T(1,128)}', space=vmem, size = 0x9000, scoped, tag = 'internal scratch']
  %s0 = inlined_call_operand.vmem [shape: f32[2,32], index: 0, kind: input, shape index: {}]
  %s1 = inlined_call_operand.vmem [shape: f32[1,32], index: 1, kind: input, shape index: {}]
  %s2 = inlined_call_operand.vmem [shape: f32[1,32], index: 2, kind: input, shape index: {}]
  %s3 = inlined_call_operand.vmem [shape: f32[32,10], index: 3, kind: input, shape index: {}]
  %s4 = inlined_call_operand.vmem [shape: f32[1,10], index: 4, kind: input, shape index: {}]
  %s5 = inlined_call_operand.hbm [shape: f32[2,10], index: 5, kind: output, shape index: {}]
  %s6 = sld [smem:[#allocation0]]
  $region30: #{vivit_forward.15} parent=0
    _
  %s8 = ssub.s32 1, %s6
  %s9 = scalar_select 0, %s8, %s6
  $region1: #{vivit_forward.15} parent=0
    #allocation2 [shape = 'u8[1024]{0}', space=vmem, size = 0x400, scoped, tag = 'output window, operand 0, single buffered']
    #allocation3 [shape = 's32[1]{0}', space=sflag, size = 0x4, scoped, tag = 'scoped memory for vivit_forward.15']
    %10 = vsyncpa [#allocation3], 0
    // Predicated region
    $region2: #{vivit_forward.15} parent=1 // pred_check
      _
    $region3: #{vivit_forward.15} parent=1 // pred_check_branch
      %12 = sbr.rel (0) target = $region5
    $region4: #{vivit_forward.15} parent=1 // pred_region
      _
    $region5: #{vivit_forward.15} parent=1 // pred_fallthru
      _
    // Predicated region
    $region6: #{vivit_forward.15} parent=1 // pred_check
      _
    $region7: #{vivit_forward.15} parent=1 // pred_check_branch
      %14 = sbr.rel (0) target = $region9
    $region8: #{vivit_forward.15} parent=1 // pred_region
      _
    $region9: #{vivit_forward.15} parent=1 // pred_fallthru
      _
    // Predicated region
    $region10: #{vivit_forward.15} parent=1 // pred_check
      _
    $region11: #{vivit_forward.15} parent=1 // pred_check_branch
      %16 = sbr.rel (0) target = $region13
    $region12: #{vivit_forward.15} parent=1 // pred_region
      _
    $region13: #{vivit_forward.15} parent=1 // pred_fallthru
      _
    // Predicated region
    $region14: #{vivit_forward.15} parent=1 // pred_check
      _
    $region15: #{vivit_forward.15} parent=1 // pred_check_branch
      %18 = sbr.rel (0) target = $region17
    $region16: #{vivit_forward.15} parent=1 // pred_region
      _
    $region17: #{vivit_forward.15} parent=1 // pred_fallthru
      _
    // Predicated region
    $region18: #{vivit_forward.15} parent=1 // pred_check
      _
    $region19: #{vivit_forward.15} parent=1 // pred_check_branch
      %20 = sbr.rel (0) target = $region21
    $region20: #{vivit_forward.15} parent=1 // pred_region
      _
    $region21: #{vivit_forward.15} parent=1 // pred_fallthru
      _
    %v21 = vld [vmem:[%s0] sm:$0x3]
    %v22 = vld [vmem:[%s1] sm:$0x1]
    %v23 = vld [vmem:[%s2] sm:$0x1]
    %vm24 = vcmask 254976
    %v25 = vsel %vm24, %v21, 0.0
    %26 = vadd.xlane.f32.xlu0 %v25
    %v27 = vpop.xlane.xlu0 %26
    %v28 = vrcp.pop 32.0
    %v29 = vmul.f32 32.0, %v28
    %v30 = vsub.f32 1.0, %v29
    %v31 = vmul.f32 %v28, %v30
    %v32 = vadd.f32 %v28, %v31
    %vm33 = vweird.f32 %v28
    %v34 = vsel %vm33, %v28, %v32
    %v35 = vmul.f32 %v27, %v34
    %v36 = vsub.f32 %v21, %v35
    %v37 = vmul.f32 %v36, %v36
    %v38 = vsel %vm24, %v37, 0.0
    %39 = vadd.xlane.f32.xlu0 %v38
    %v40 = vpop.xlane.xlu0 %39
    %v41 = vmul.f32 %v40, %v34
    %v42 = vadd.f32 %v41, 1e-05
    %v43 = vrsqrt.pop %v42
    %v44 = vmul.f32 %v43, %v42
    %v45 = vmul.f32 %v44, %v43
    %v46 = vmul.f32 0.5, %v45
    %v47 = vsub.f32 1.5, %v46
    %v48 = vmul.f32 %v43, %v47
    %vm49 = vweird.f32 %v42
    %vm50 = vweird.f32 %v43
    %vm51 = vmor %vm49, %vm50
    %v52 = vsel %vm51, %v43, %v48
    %v53 = vmul.f32 %v36, %v52
    %v55 = vperm.slane %v22, 0
    %v57 = vmul.f32 %v53, %v55
    %v59 = vperm.slane %v23, 0
    %v61 = vadd.f32 %v57, %v59
    %v62 = vld [vmem:[%s3] sm:$0xff]
    %v63 = vld [vmem:[%s3 + $0x8] sm:$0xff]
    %v64 = vld [vmem:[%s3 + $0x10] sm:$0xff]
    %v65 = vld [vmem:[%s3 + $0x18] sm:$0xff]
    %v66 = vld [vmem:[%s4] sm:$0x1]
    %v68 = vperm.slane %v66, 0
    %vm70 = vcmask 261120
    %v72 = vsel %vm70, %v61, 0
    %74 = vmatpush.msra.mxu0 0.0
    %75 = vmatpush.msra.mxu0 0.0
    %76 = vmatpush.msra.mxu0 0.0
    %77 = vmatpush.msra.mxu0 0.0
    %78 = vmatpush.msra.mxu0 0.0
    %79 = vmatpush.msra.mxu0 0.0
    %80 = vmatpush.msra.mxu0 0.0
    %81 = vmatpush.msra.mxu0 0.0
    %82 = vmatpush.msra.mxu0 0.0
    %83 = vmatpush.msra.mxu0 0.0
    %84 = vmatpush.msra.mxu0 0.0
    %85 = vmatpush.msra.mxu0 0.0
    %86 = vmatpush.msra.mxu0 %v65
    %87 = vmatpush.msra.mxu0 %v64
    %88 = vmatpush.msra.mxu0 %v63
    %89 = vmatpush.msra.mxu0 %v62
    %90 = vmatmul.f32.gmra.mxu0 %v72
    %v91 = vpop.f32.mrf.mxu0
    %v92 = vadd.f32 %v68, %v91
    %93 = vdwg.mxu0
    %vm94 = vcmask 74752
    %95 = vst.msk [vmem:[#allocation2] sm:$0x3] %vm94, %v92
    // Predicated region
    $region22: #{vivit_forward.15} parent=1 // pred_check
      _
    $region23: #{vivit_forward.15} parent=1 // pred_check_branch
      %97 = sbr.rel (0) target = $region25
    $region24: #{vivit_forward.15} parent=1 // pred_region
      %99 = vsyncadd [#allocation3], 0
      %s101 = sshll.u32 [#allocation2], 4
      %s102 = int_to_ptr.vmem [resolvable:$true] %s101
      %s103 = sshll.u32 %s5, 4
      %s104 = int_to_ptr.hbm [resolvable:$true] %s103
      %106 = dma.vmem_to_hbm [thread:$0]  %s102, 32, %s104, [#allocation3]
    $region25: #{vivit_forward.15} parent=1 // pred_fallthru
      _
    // Predicated region
    $region26: #{vivit_forward.15} parent=1 // pred_check
      _
    $region27: #{vivit_forward.15} parent=1 // pred_check_branch
      %108 = sbr.rel (0) target = $region29
    $region28: #{vivit_forward.15} parent=1 // pred_region
      %110 = dma.done [#allocation3], 32
    $region29: #{vivit_forward.15} parent=1 // pred_fallthru
      _
    %111 = vsyncpa [#allocation3], 1

</llo_original>
